<compile_context>
chip_gen: v7x
topology: tpu7x:2x2x1
jax: 0.10.0
libtpu: 0.0.40
codegen_flags: <defaults>
</compile_context>

<pallas_src>
import functools

import jax
import jax.numpy as jnp
from jax.experimental import pallas as pl
from jax.experimental.pallas import tpu as pltpu


# ----------------------------------------------------------------------------
# Kernel 1: decoder cell -> z.  Grid over batch tiles only ("parallel").
# ----------------------------------------------------------------------------
def _cell_kernel(q_ref, ctx_emb_ref, ctx_mask_ref, x_emb_ref, x_mask_ref,
                 w_enc_ref, b_enc_ref, w_q_ref, w_s_ref, w_x_ref, b_cell_ref,
                 z_ref):
    TB, S, D = ctx_emb_ref.shape

    q = q_ref[...]                                   # (TB, D)  bf16
    ctx_mask = ctx_mask_ref[...]                     # (TB, S)  f32
    x_mask = x_mask_ref[...]                         # (TB, L)  f32

    # --- context encoder: tanh(ctx_emb @ W_enc + b_enc)  (bf16 MXU, f32 acc)
    ctx_flat = ctx_emb_ref[...].reshape(TB * S, D)   # bf16
    ctx_enc = jnp.tanh(
        jnp.dot(ctx_flat, w_enc_ref[...], preferred_element_type=jnp.float32)
        + b_enc_ref[...]).reshape(TB, S, D)          # f32
    ctx_enc_bf = ctx_enc.astype(jnp.bfloat16)

    # --- attention of the `whereat` query over the encoded context
    scores = jnp.einsum("bqd,bkd->bqk", q[:, None, :], ctx_enc_bf,
                        preferred_element_type=jnp.float32)       # (TB, 1, S)
    scores = jnp.where(ctx_mask[:, None, :] > 0.0, scores, -1e30)
    scores = scores - jnp.max(scores, axis=-1, keepdims=True)
    escores = jnp.exp(scores)
    # NOTE: fully-padded context rows get uniform attention over pad tokens
    # (exp(0)=1 on every lane) - this matches softmax of all -1e30 in the f32
    # reference, but it silently averages pad embeddings for those rows.
    denom = jnp.maximum(jnp.sum(escores, axis=-1, keepdims=True), 1e-9)
    attn = escores / denom            # exact divide (tight error budget here)

    summary = jnp.einsum("bqk,bkd->bqd", attn.astype(jnp.bfloat16),
                         ctx_enc_bf,
                         preferred_element_type=jnp.float32).reshape(TB, D)

    # --- masked mean of the partial-tree embeddings (MXU contraction)
    xsum = jnp.einsum("bqk,bkd->bqd",
                      x_mask.astype(jnp.bfloat16)[:, None, :],
                      x_emb_ref[...],
                      preferred_element_type=jnp.float32).reshape(TB, D)
    inv_cnt = pl.reciprocal(
        jnp.maximum(jnp.sum(x_mask, axis=-1, keepdims=True), 1.0),
        approx=True)
    xmean = xsum * inv_cnt                                          # (TB, D)

    # --- cell: three accumulating matmuls (no lane-axis concat / relayout)
    acc = jnp.dot(q, w_q_ref[...], preferred_element_type=jnp.float32)
    acc = acc + jnp.dot(summary.astype(jnp.bfloat16), w_s_ref[...],
                        preferred_element_type=jnp.float32)
    acc = acc + jnp.dot(xmean.astype(jnp.bfloat16), w_x_ref[...],
                        preferred_element_type=jnp.float32)
    z = jnp.tanh(acc + b_cell_ref[...])                             # (TB, D)
    z_ref[...] = z.astype(z_ref.dtype)


# ----------------------------------------------------------------------------
# Kernel 2: output projection + online softmax stats.
# Grid = (vocab outer "arbitrary", batch inner "parallel"): W_out's index_map
# is constant across the inner axis so each W_out tile is fetched exactly once.
# ----------------------------------------------------------------------------
def _outproj_softmax_kernel(z_ref, w_out_ref, b_out_ref,
                            logits_ref, lse_ref, m_scr, l_scr):
    j = pl.program_id(0)     # vocab tile (outer; softmax stats carried here)
    i = pl.program_id(1)     # batch tile (inner; W_out stays resident)

    scores = (jnp.dot(z_ref[...], w_out_ref[...],
                      preferred_element_type=jnp.float32)
              + b_out_ref[...])                                   # (TB, TV) f32
    logits_ref[...] = scores

    tile_max = jnp.max(scores, axis=-1, keepdims=True)            # (TB, 1)

    @pl.when(j == 0)
    def _init():
        m_scr[i] = jnp.full_like(tile_max, -jnp.inf)
        l_scr[i] = jnp.zeros_like(tile_max)

    m_old = m_scr[i]
    m_new = jnp.maximum(m_old, tile_max)
    corr = jnp.exp(m_old - m_new)                    # 0 on the first tile
    l_new = corr * l_scr[i] + jnp.sum(jnp.exp(scores - m_new), axis=-1,
                                      keepdims=True)
    m_scr[i] = m_new
    l_scr[i] = l_new
    # Running logsumexp; the value written on the last vocab tile is final
    # (earlier writebacks of this tiny block are simply overwritten).
    lse_ref[...] = m_new + jnp.log(l_new)


# ----------------------------------------------------------------------------
# Wrapper
# ----------------------------------------------------------------------------
def prepare_params(params):
    """One-time cast of parameters to kernel dtypes (hoisted out of the step)."""
    return {
        "E_ctx": params["E_ctx"].astype(jnp.bfloat16),
        "E_x": params["E_x"].astype(jnp.bfloat16),
        "W_enc": params["W_enc"].astype(jnp.bfloat16),
        "b_enc": params["b_enc"].astype(jnp.float32),
        "W_q": params["W_q"].astype(jnp.bfloat16),
        "W_s": params["W_s"].astype(jnp.bfloat16),
        "W_x": params["W_x"].astype(jnp.bfloat16),
        "b_cell": params["b_cell"].astype(jnp.float32),
        "W_out": params["W_out"].astype(jnp.bfloat16),
        "b_out": params["b_out"].astype(jnp.float32),
    }


def _round_up(x, m):
    return ((x + m - 1) // m) * m


def sketchy_decoder_train(ctx_ids, x_ids, whereat, prep, *, tb=128, tv=1024):
    """Forward pass of SketchyDecoderTrain.

    ctx_ids : (B, S) int32 context ids (0 == pad)
    x_ids   : (B, L) int32 partial-tree ids (0 == pad)
    whereat : (B,)   int32 insertion position
    prep    : output of prepare_params (bf16 weights / embeddings)
    returns (outprobs, outprobs_role), each (B, V) float32
    """
    # ---- glue kept in XLA: embedding gathers + masks + whereat gather ----
    ctx_emb = prep["E_ctx"][ctx_ids]                        # (B, S, D) bf16
    x_emb = prep["E_x"][x_ids]                              # (B, L, D) bf16
    ctx_mask = (ctx_ids != 0).astype(jnp.float32)           # (B, S)
    x_mask = (x_ids != 0).astype(jnp.float32)               # (B, L)
    q = jnp.take_along_axis(x_emb, whereat[:, None, None], axis=1)[:, 0, :]

    B, S, D = ctx_emb.shape
    L = x_emb.shape[1]
    V = prep["W_out"].shape[1]

    # tile sizing: large batch tiles fill MXU rows and cut grid steps; clamp
    # for small batches so the demo does no pointless padded work.
    tb = min(tb, _round_up(B, 8))
    Bp = _round_up(B, tb)
    if V % tv != 0:
        tv = V        # small / odd vocab: single full-width lane-dense tile

    if Bp != B:
        pad = Bp - B
        q = jnp.pad(q, ((0, pad), (0, 0)))
        ctx_emb = jnp.pad(ctx_emb, ((0, pad), (0, 0), (0, 0)))
        ctx_mask = jnp.pad(ctx_mask, ((0, pad), (0, 0)))
        x_emb = jnp.pad(x_emb, ((0, pad), (0, 0), (0, 0)))
        x_mask = jnp.pad(x_mask, ((0, pad), (0, 0)))

    ni = Bp // tb
    nj = V // tv

    # ---- kernel 1: decoder cell -> z (Bp, D) bf16 ----
    z = pl.pallas_call(
        _cell_kernel,
        out_shape=jax.ShapeDtypeStruct((Bp, D), jnp.bfloat16),
        grid_spec=pltpu.PrefetchScalarGridSpec(
            num_scalar_prefetch=0,
            grid=(ni,),
            in_specs=[
                pl.BlockSpec((tb, D), lambda i: (i, 0)),          # q
                pl.BlockSpec((tb, S, D), lambda i: (i, 0, 0)),    # ctx_emb
                pl.BlockSpec((tb, S), lambda i: (i, 0)),          # ctx_mask
                pl.BlockSpec((tb, L, D), lambda i: (i, 0, 0)),    # x_emb
                pl.BlockSpec((tb, L), lambda i: (i, 0)),          # x_mask
                pl.BlockSpec((D, D), lambda i: (0, 0)),           # W_enc
                pl.BlockSpec((1, D), lambda i: (0, 0)),           # b_enc
                pl.BlockSpec((D, D), lambda i: (0, 0)),           # W_q
                pl.BlockSpec((D, D), lambda i: (0, 0)),           # W_s
                pl.BlockSpec((D, D), lambda i: (0, 0)),           # W_x
                pl.BlockSpec((1, D), lambda i: (0, 0)),           # b_cell
            ],
            out_specs=pl.BlockSpec((tb, D), lambda i: (i, 0)),
        ),
        compiler_params=pltpu.CompilerParams(
            dimension_semantics=("parallel",),
            vmem_limit_bytes=32 * 1024 * 1024),   # sized for v7x scoped VMEM
    )(q, ctx_emb, ctx_mask, x_emb, x_mask,
      prep["W_enc"], prep["b_enc"], prep["W_q"], prep["W_s"], prep["W_x"],
      prep["b_cell"])

    # ---- kernel 2: logits = z @ W_out + b_out, plus per-row logsumexp ----
    # TODO(synk): if the W_out DMA is exposed on v5e with these tile sizes,
    # bump its BlockSpec to pipeline_mode=pl.Buffered(3).
    logits, lse = pl.pallas_call(
        _outproj_softmax_kernel,
        out_shape=(jax.ShapeDtypeStruct((Bp, V), jnp.float32),
                   jax.ShapeDtypeStruct((Bp, 1), jnp.float32)),
        grid_spec=pltpu.PrefetchScalarGridSpec(
            num_scalar_prefetch=0,
            grid=(nj, ni),
            in_specs=[
                pl.BlockSpec((tb, D), lambda j, i: (i, 0)),       # z (tiny)
                pl.BlockSpec((D, tv), lambda j, i: (0, j)),       # W_out tile
                pl.BlockSpec((1, tv), lambda j, i: (0, j)),       # b_out tile
            ],
            out_specs=[
                pl.BlockSpec((tb, tv), lambda j, i: (i, j)),      # logits
                pl.BlockSpec((tb, 1), lambda j, i: (i, 0)),       # logsumexp
            ],
            scratch_shapes=[
                pltpu.VMEM((ni, tb, 1), jnp.float32),             # running max
                pltpu.VMEM((ni, tb, 1), jnp.float32),             # running sum
            ],
        ),
        compiler_params=pltpu.CompilerParams(
            dimension_semantics=("arbitrary", "parallel"),
            vmem_limit_bytes=32 * 1024 * 1024),
    )(z, prep["W_out"], prep["b_out"])

    logits = logits[:B]
    lse = lse[:B]
    # single fused normalize pass (one read + one write of the (B, V) logits)
    probs = jnp.exp(logits - lse)
    # the reference applies the SAME outlin + softmax twice -> identical heads
    return probs, probs


def init_params(key, ctx_vocab, out_vocab, D, V):
    ks = jax.random.split(key, 10)
    s = 0.1
    return {
        "E_ctx": jax.random.normal(ks[0], (ctx_vocab, D), jnp.float32) * s,
        "E_x": jax.random.normal(ks[1], (out_vocab, D), jnp.float32) * s,
        "W_enc": jax.random.normal(ks[2], (D, D), jnp.float32) * s,
        "b_enc": jax.random.normal(ks[3], (1, D), jnp.float32) * s,
        "W_q": jax.random.normal(ks[4], (D, D), jnp.float32) * s,
        "W_s": jax.random.normal(ks[5], (D, D), jnp.float32) * s,
        "W_x": jax.random.normal(ks[6], (D, D), jnp.float32) * s,
        "b_cell": jax.random.normal(ks[7], (1, D), jnp.float32) * s,
        "W_out": jax.random.normal(ks[8], (D, V), jnp.float32) * s,
        "b_out": jax.random.normal(ks[9], (1, V), jnp.float32) * s,
    }


def _reference(ctx_ids, x_ids, whereat, params):
    """Pure-JAX f32 reference of the same forward pass."""
    ctx_emb = params["E_ctx"][ctx_ids]
    x_emb = params["E_x"][x_ids]
    ctx_mask = (ctx_ids != 0).astype(jnp.float32)
    x_mask = (x_ids != 0).astype(jnp.float32)
    q = jnp.take_along_axis(x_emb, whereat[:, None, None], axis=1)[:, 0, :]

    ctx_enc = jnp.tanh(ctx_emb @ params["W_enc"] + params["b_enc"])
    scores = jnp.einsum("bd,bsd->bs", q, ctx_enc)
    scores = jnp.where(ctx_mask > 0.0, scores, -1e30)
    attn = jax.nn.softmax(scores, axis=-1)
    summary = jnp.einsum("bs,bsd->bd", attn, ctx_enc)
    denom = jnp.maximum(jnp.sum(x_mask, axis=-1, keepdims=True), 1.0)
    xmean = jnp.sum(x_emb * x_mask[:, :, None], axis=1) / denom
    z = jnp.tanh(q @ params["W_q"] + summary @ params["W_s"]
                 + xmean @ params["W_x"] + params["b_cell"])
    logits = z @ params["W_out"] + params["b_out"]
    probs = jax.nn.softmax(logits, axis=-1)
    return probs, probs


if __name__ == "__main__":
    # small but hardware-friendly shapes: lane-dense D and V
    B, S, L, D = 16, 16, 8, 128       # batch, inp_len, partial-tree len, hidden
    CTX_VOCAB, OUT_VOCAB = 50, 256
    V = OUT_VOCAB

    key = jax.random.PRNGKey(0)
    kp, kc, kx, kw = jax.random.split(key, 4)
    params = init_params(kp, CTX_VOCAB, OUT_VOCAB, D, V)   # f32 master weights
    prep = prepare_params(params)                          # one-time bf16 cast

    ctx_ids = jax.random.randint(kc, (B, S), 1, CTX_VOCAB, dtype=jnp.int32)
    ctx_ids = ctx_ids.at[0, 12:].set(0)            # pad tail of example 0
    x_ids = jax.random.randint(kx, (B, L), 1, OUT_VOCAB, dtype=jnp.int32)
    x_ids = x_ids.at[1, 6:].set(0)                 # pad tail of example 1
    whereat = jax.random.randint(kw, (B,), 0, L, dtype=jnp.int32)

    # small tiles here so the demo exercises multiple batch AND vocab tiles
    # (multi-tile online softmax, W_out residency across the inner axis);
    # production defaults are tb=128, tv=1024.
    fwd = jax.jit(functools.partial(sketchy_decoder_train, tb=8, tv=128))
    outprobs, outprobs_role = fwd(ctx_ids, x_ids, whereat, prep)
    jax.block_until_ready((outprobs, outprobs_role))

    # sanity: shapes, probability rows, identical heads, matches f32 reference
    ref_probs, _ = _reference(ctx_ids, x_ids, whereat, params)
    assert outprobs.shape == (B, V) and outprobs_role.shape == (B, V)
    assert jnp.allclose(jnp.sum(outprobs, axis=-1), 1.0, atol=1e-5)
    assert jnp.allclose(outprobs, outprobs_role)
    max_err = jnp.max(jnp.abs(outprobs - ref_probs))
    assert max_err < 1e-3, f"max abs diff vs reference: {max_err}"

    print("KERNEL_OK")
</pallas_src>

<mosaic_0001>
module attributes {stable_mosaic.version = 11 : i64} {
  func.func @_outproj_softmax_kernel(%arg0: i32, %arg1: i32, %arg2: memref<8x128xbf16, #tpu.memory_space<vmem>>, %arg3: memref<128x128xbf16, #tpu.memory_space<vmem>>, %arg4: memref<1x128xf32, #tpu.memory_space<vmem>>, %arg5: memref<8x128xf32, #tpu.memory_space<vmem>>, %arg6: memref<8x1xf32, #tpu.memory_space<vmem>>, %arg7: memref<2x8x1xf32, #tpu.memory_space<vmem>>, %arg8: memref<2x8x1xf32, #tpu.memory_space<vmem>>) attributes {dimension_semantics = [#tpu.dimension_semantics<arbitrary>, #tpu.dimension_semantics<parallel>], iteration_bounds = array<i64: 2, 2>, scalar_prefetch = 0 : i64, scratch_operands = 2 : i64, tpu.core_type = #tpu.core_type<tc>, window_params = [{transform_indices = @transform_0, window_bounds = array<i64: 8, 128>}, {transform_indices = @transform_1, window_bounds = array<i64: 128, 128>}, {transform_indices = @transform_2, window_bounds = array<i64: 1, 128>}, {transform_indices = @transform_3, window_bounds = array<i64: 8, 128>}, {transform_indices = @transform_4, window_bounds = array<i64: 8, 1>}]} {
    %c0 = arith.constant 0 : index
    %c0_0 = arith.constant 0 : index
    %0 = vector.load %arg2[%c0, %c0_0] : memref<8x128xbf16, #tpu.memory_space<vmem>>, vector<8x128xbf16>
    %c0_1 = arith.constant 0 : index
    %c0_2 = arith.constant 0 : index
    %1 = vector.load %arg3[%c0_1, %c0_2] : memref<128x128xbf16, #tpu.memory_space<vmem>>, vector<128x128xbf16>
    %cst = arith.constant dense<0.000000e+00> : vector<8x128xf32>
    %2 = tpu.matmul %0, %1, %cst {dimension_numbers = #tpu.dot_dimension_numbers<[1], [0], [0], [1], [0, 0, 1, 1], [], []>} : vector<8x128xbf16>, vector<128x128xbf16>, vector<8x128xf32> -> vector<8x128xf32>
    %c0_3 = arith.constant 0 : index
    %c0_4 = arith.constant 0 : index
    %3 = vector.load %arg4[%c0_3, %c0_4] : memref<1x128xf32, #tpu.memory_space<vmem>>, vector<1x128xf32>
    %4 = vector.broadcast %3 : vector<1x128xf32> to vector<8x128xf32>
    %5 = arith.addf %2, %4 : vector<8x128xf32>
    %c0_5 = arith.constant 0 : index
    %c0_6 = arith.constant 0 : index
    %6 = vector.load %arg5[%c0_5, %c0_6] : memref<8x128xf32, #tpu.memory_space<vmem>>, vector<8x128xf32>
    tpu.vector_store %arg5[%c0_5, %c0_6], %5 {strides = array<i32>} : memref<8x128xf32, #tpu.memory_space<vmem>>, vector<8x128xf32>,
    %cst_7 = arith.constant dense<0xFF800000> : vector<8xf32>
    %7 = vector.multi_reduction <maximumf>, %5, %cst_7 [1] : vector<8x128xf32> to vector<8xf32>
    %8 = vector.shape_cast %7 : vector<8xf32> to vector<8x1xf32>
    %c0_i32 = arith.constant 0 : i32
    %9 = arith.cmpi eq, %arg0, %c0_i32 : i32
    %10 = arith.extui %9 : i1 to i32
    %c0_i32_8 = arith.constant 0 : i32
    %11 = arith.cmpi ne, %10, %c0_i32_8 : i32
    scf.if %11 {
      %cst_20 = arith.constant 0xFF800000 : f32
      %39 = vector.broadcast %cst_20 : f32 to vector<8x1xf32>
      %40 = arith.index_cast %arg1 : i32 to index
      %c0_21 = arith.constant 0 : index
      %c0_22 = arith.constant 0 : index
      %41 = vector.load %arg7[%40, %c0_21, %c0_22] : memref<2x8x1xf32, #tpu.memory_space<vmem>>, vector<1x8x1xf32>
      %42 = vector.shape_cast %41 : vector<1x8x1xf32> to vector<8x1xf32>
      %43 = vector.shape_cast %39 : vector<8x1xf32> to vector<1x8x1xf32>
      tpu.vector_store %arg7[%40, %c0_21, %c0_22], %43 {strides = array<i32>} : memref<2x8x1xf32, #tpu.memory_space<vmem>>, vector<1x8x1xf32>,
      %cst_23 = arith.constant 0.000000e+00 : f32
      %44 = vector.broadcast %cst_23 : f32 to vector<8x1xf32>
      %45 = arith.index_cast %arg1 : i32 to index
      %c0_24 = arith.constant 0 : index
      %c0_25 = arith.constant 0 : index
      %46 = vector.load %arg8[%45, %c0_24, %c0_25] : memref<2x8x1xf32, #tpu.memory_space<vmem>>, vector<1x8x1xf32>
      %47 = vector.shape_cast %46 : vector<1x8x1xf32> to vector<8x1xf32>
      %48 = vector.shape_cast %44 : vector<8x1xf32> to vector<1x8x1xf32>
      tpu.vector_store %arg8[%45, %c0_24, %c0_25], %48 {strides = array<i32>} : memref<2x8x1xf32, #tpu.memory_space<vmem>>, vector<1x8x1xf32>,
    } else {
    }
    %12 = arith.index_cast %arg1 : i32 to index
    %c0_9 = arith.constant 0 : index
    %c0_10 = arith.constant 0 : index
    %13 = vector.load %arg7[%12, %c0_9, %c0_10] : memref<2x8x1xf32, #tpu.memory_space<vmem>>, vector<1x8x1xf32>
    %14 = vector.shape_cast %13 : vector<1x8x1xf32> to vector<8x1xf32>
    %15 = arith.maximumf %14, %8 : vector<8x1xf32>
    %16 = arith.subf %14, %15 : vector<8x1xf32>
    %17 = math.exp %16 : vector<8x1xf32>
    %18 = arith.index_cast %arg1 : i32 to index
    %c0_11 = arith.constant 0 : index
    %c0_12 = arith.constant 0 : index
    %19 = vector.load %arg8[%18, %c0_11, %c0_12] : memref<2x8x1xf32, #tpu.memory_space<vmem>>, vector<1x8x1xf32>
    %20 = vector.shape_cast %19 : vector<1x8x1xf32> to vector<8x1xf32>
    %21 = arith.mulf %17, %20 : vector<8x1xf32>
    %22 = vector.broadcast %15 : vector<8x1xf32> to vector<8x128xf32>
    %23 = arith.subf %5, %22 : vector<8x128xf32>
    %24 = math.exp %23 : vector<8x128xf32>
    %cst_13 = arith.constant dense<0.000000e+00> : vector<8xf32>
    %25 = vector.multi_reduction <add>, %24, %cst_13 [1] : vector<8x128xf32> to vector<8xf32>
    %26 = vector.shape_cast %25 : vector<8xf32> to vector<8x1xf32>
    %27 = arith.addf %21, %26 : vector<8x1xf32>
    %28 = arith.index_cast %arg1 : i32 to index
    %c0_14 = arith.constant 0 : index
    %c0_15 = arith.constant 0 : index
    %29 = vector.load %arg7[%28, %c0_14, %c0_15] : memref<2x8x1xf32, #tpu.memory_space<vmem>>, vector<1x8x1xf32>
    %30 = vector.shape_cast %29 : vector<1x8x1xf32> to vector<8x1xf32>
    %31 = vector.shape_cast %15 : vector<8x1xf32> to vector<1x8x1xf32>
    tpu.vector_store %arg7[%28, %c0_14, %c0_15], %31 {strides = array<i32>} : memref<2x8x1xf32, #tpu.memory_space<vmem>>, vector<1x8x1xf32>,
    %32 = arith.index_cast %arg1 : i32 to index
    %c0_16 = arith.constant 0 : index
    %c0_17 = arith.constant 0 : index
    %33 = vector.load %arg8[%32, %c0_16, %c0_17] : memref<2x8x1xf32, #tpu.memory_space<vmem>>, vector<1x8x1xf32>
    %34 = vector.shape_cast %33 : vector<1x8x1xf32> to vector<8x1xf32>
    %35 = vector.shape_cast %27 : vector<8x1xf32> to vector<1x8x1xf32>
    tpu.vector_store %arg8[%32, %c0_16, %c0_17], %35 {strides = array<i32>} : memref<2x8x1xf32, #tpu.memory_space<vmem>>, vector<1x8x1xf32>,
    %36 = math.log %27 : vector<8x1xf32>
    %37 = arith.addf %15, %36 : vector<8x1xf32>
    %c0_18 = arith.constant 0 : index
    %c0_19 = arith.constant 0 : index
    %38 = vector.load %arg6[%c0_18, %c0_19] : memref<8x1xf32, #tpu.memory_space<vmem>>, vector<8x1xf32>
    tpu.vector_store %arg6[%c0_18, %c0_19], %37 {strides = array<i32>} : memref<8x1xf32, #tpu.memory_space<vmem>>, vector<8x1xf32>,
    return
  }
  func.func @transform_0(%arg0: i32, %arg1: i32) -> (i32, i32) {
    %c0_i32 = arith.constant 0 : i32
    %c0_i32_0 = arith.constant 0 : i32
    return %arg1, %c0_i32 : i32, i32
  }
  func.func @transform_1(%arg0: i32, %arg1: i32) -> (i32, i32) {
    %c0_i32 = arith.constant 0 : i32
    %c0_i32_0 = arith.constant 0 : i32
    return %c0_i32, %arg0 : i32, i32
  }
  func.func @transform_2(%arg0: i32, %arg1: i32) -> (i32, i32) {
    %c0_i32 = arith.constant 0 : i32
    %c0_i32_0 = arith.constant 0 : i32
    return %c0_i32, %arg0 : i32, i32
  }
  func.func @transform_3(%arg0: i32, %arg1: i32) -> (i32, i32) {
    %c0_i32 = arith.constant 0 : i32
    return %arg1, %arg0 : i32, i32
  }
  func.func @transform_4(%arg0: i32, %arg1: i32) -> (i32, i32) {
    %c0_i32 = arith.constant 0 : i32
    %c0_i32_0 = arith.constant 0 : i32
    return %arg1, %c0_i32 : i32, i32
  }
}

module attributes {stable_mosaic.version = 11 : i64} {
  func.func @_cell_kernel(%arg0: i32, %arg1: memref<8x128xbf16, #tpu.memory_space<vmem>>, %arg2: memref<8x16x128xbf16, #tpu.memory_space<vmem>>, %arg3: memref<8x16xf32, #tpu.memory_space<vmem>>, %arg4: memref<8x8x128xbf16, #tpu.memory_space<vmem>>, %arg5: memref<8x8xf32, #tpu.memory_space<vmem>>, %arg6: memref<128x128xbf16, #tpu.memory_space<vmem>>, %arg7: memref<1x128xf32, #tpu.memory_space<vmem>>, %arg8: memref<128x128xbf16, #tpu.memory_space<vmem>>, %arg9: memref<128x128xbf16, #tpu.memory_space<vmem>>, %arg10: memref<128x128xbf16, #tpu.memory_space<vmem>>, %arg11: memref<1x128xf32, #tpu.memory_space<vmem>>, %arg12: memref<8x128xbf16, #tpu.memory_space<vmem>>) attributes {dimension_semantics = [#tpu.dimension_semantics<parallel>], iteration_bounds = array<i64: 2>, scalar_prefetch = 0 : i64, scratch_operands = 0 : i64, tpu.core_type = #tpu.core_type<tc>, window_params = [{transform_indices = @transform_0, window_bounds = array<i64: 8, 128>}, {transform_indices = @transform_1, window_bounds = array<i64: 8, 16, 128>}, {transform_indices = @transform_2, window_bounds = array<i64: 8, 16>}, {transform_indices = @transform_3, window_bounds = array<i64: 8, 8, 128>}, {transform_indices = @transform_4, window_bounds = array<i64: 8, 8>}, {pipeline_mode = #tpu.pipeline_mode<synchronous>, transform_indices = @transform_5, window_bounds = array<i64: 128, 128>}, {pipeline_mode = #tpu.pipeline_mode<synchronous>, transform_indices = @transform_6, window_bounds = array<i64: 1, 128>}, {pipeline_mode = #tpu.pipeline_mode<synchronous>, transform_indices = @transform_7, window_bounds = array<i64: 128, 128>}, {pipeline_mode = #tpu.pipeline_mode<synchronous>, transform_indices = @transform_8, window_bounds = array<i64: 128, 128>}, {pipeline_mode = #tpu.pipeline_mode<synchronous>, transform_indices = @transform_9, window_bounds = array<i64: 128, 128>}, {pipeline_mode = #tpu.pipeline_mode<synchronous>, transform_indices = @transform_10, window_bounds = array<i64: 1, 128>}, {transform_indices = @transform_11, window_bounds = array<i64: 8, 128>}]} {
    %c0 = arith.constant 0 : index
    %c0_0 = arith.constant 0 : index
    %0 = vector.load %arg1[%c0, %c0_0] : memref<8x128xbf16, #tpu.memory_space<vmem>>, vector<8x128xbf16>
    %c0_1 = arith.constant 0 : index
    %c0_2 = arith.constant 0 : index
    %1 = vector.load %arg3[%c0_1, %c0_2] : memref<8x16xf32, #tpu.memory_space<vmem>>, vector<8x16xf32>
    %c0_3 = arith.constant 0 : index
    %c0_4 = arith.constant 0 : index
    %2 = vector.load %arg5[%c0_3, %c0_4] : memref<8x8xf32, #tpu.memory_space<vmem>>, vector<8x8xf32>
    %c0_5 = arith.constant 0 : index
    %c0_6 = arith.constant 0 : index
    %c0_7 = arith.constant 0 : index
    %3 = vector.load %arg2[%c0_5, %c0_6, %c0_7] : memref<8x16x128xbf16, #tpu.memory_space<vmem>>, vector<8x16x128xbf16>
    %4 = vector.shape_cast %3 : vector<8x16x128xbf16> to vector<128x128xbf16>
    %c0_8 = arith.constant 0 : index
    %c0_9 = arith.constant 0 : index
    %5 = vector.load %arg6[%c0_8, %c0_9] : memref<128x128xbf16, #tpu.memory_space<vmem>>, vector<128x128xbf16>
    %cst = arith.constant dense<0.000000e+00> : vector<128x128xf32>
    %6 = tpu.matmul %4, %5, %cst {dimension_numbers = #tpu.dot_dimension_numbers<[1], [0], [0], [1], [0, 0, 1, 1], [], []>} : vector<128x128xbf16>, vector<128x128xbf16>, vector<128x128xf32> -> vector<128x128xf32>
    %c0_10 = arith.constant 0 : index
    %c0_11 = arith.constant 0 : index
    %7 = vector.load %arg7[%c0_10, %c0_11] : memref<1x128xf32, #tpu.memory_space<vmem>>, vector<1x128xf32>
    %8 = vector.broadcast %7 : vector<1x128xf32> to vector<128x128xf32>
    %9 = arith.addf %6, %8 : vector<128x128xf32>
    %10 = math.tanh %9 : vector<128x128xf32>
    %11 = vector.shape_cast %10 : vector<128x128xf32> to vector<8x16x128xf32>
    %12 = arith.truncf %11 : vector<8x16x128xf32> to vector<8x16x128xbf16>
    %13 = vector.shape_cast %0 : vector<8x128xbf16> to vector<8x1x128xbf16>
    "tpu.trace_start"() <{level = 10 : i32, message = "bqd,bkd->bqk"}> : () -> ()
    %cst_12 = arith.constant dense<0.000000e+00> : vector<8x1x16xf32>
    %14 = tpu.matmul %13, %12, %cst_12 {dimension_numbers = #tpu.dot_dimension_numbers<[2], [2], [1], [1], [0, 0, 0, 1, 1, 1], [0], [0]>} : vector<8x1x128xbf16>, vector<8x16x128xbf16>, vector<8x1x16xf32> -> vector<8x1x16xf32>
    "tpu.trace_stop"() : () -> ()
    %15 = vector.shape_cast %1 : vector<8x16xf32> to vector<8x1x16xf32>
    %cst_13 = arith.constant 0.000000e+00 : f32
    %16 = vector.broadcast %cst_13 : f32 to vector<8x1x16xf32>
    %17 = arith.cmpf ogt, %15, %16 : vector<8x1x16xf32>
    %cst_14 = arith.constant -1.000000e+30 : f32
    %18 = vector.broadcast %cst_14 : f32 to vector<8x1x16xf32>
    %19 = arith.select %17, %14, %18 : vector<8x1x16xi1>, vector<8x1x16xf32>
    %cst_15 = arith.constant dense<0xFF800000> : vector<8x1xf32>
    %20 = vector.multi_reduction <maximumf>, %19, %cst_15 [2] : vector<8x1x16xf32> to vector<8x1xf32>
    %21 = vector.shape_cast %20 : vector<8x1xf32> to vector<8x1x1xf32>
    %22 = vector.broadcast %21 : vector<8x1x1xf32> to vector<8x1x16xf32>
    %23 = arith.subf %19, %22 : vector<8x1x16xf32>
    %24 = math.exp %23 : vector<8x1x16xf32>
    %cst_16 = arith.constant dense<0.000000e+00> : vector<8x1xf32>
    %25 = vector.multi_reduction <add>, %24, %cst_16 [2] : vector<8x1x16xf32> to vector<8x1xf32>
    %26 = vector.shape_cast %25 : vector<8x1xf32> to vector<8x1x1xf32>
    %cst_17 = arith.constant 9.99999971E-10 : f32
    %27 = vector.broadcast %cst_17 : f32 to vector<8x1x1xf32>
    %28 = arith.maximumf %26, %27 : vector<8x1x1xf32>
    %29 = vector.broadcast %28 : vector<8x1x1xf32> to vector<8x1x16xf32>
    %30 = arith.divf %24, %29 : vector<8x1x16xf32>
    %31 = arith.truncf %30 : vector<8x1x16xf32> to vector<8x1x16xbf16>
    "tpu.trace_start"() <{level = 10 : i32, message = "bqk,bkd->bqd"}> : () -> ()
    %cst_18 = arith.constant dense<0.000000e+00> : vector<8x1x128xf32>
    %32 = tpu.matmul %31, %12, %cst_18 {dimension_numbers = #tpu.dot_dimension_numbers<[2], [1], [1], [2], [0, 0, 0, 1, 1, 2], [0], [0]>} : vector<8x1x16xbf16>, vector<8x16x128xbf16>, vector<8x1x128xf32> -> vector<8x1x128xf32>
    "tpu.trace_stop"() : () -> ()
    %33 = vector.shape_cast %32 : vector<8x1x128xf32> to vector<8x128xf32>
    %34 = arith.truncf %2 : vector<8x8xf32> to vector<8x8xbf16>
    %35 = vector.shape_cast %34 : vector<8x8xbf16> to vector<8x1x8xbf16>
    %c0_19 = arith.constant 0 : index
    %c0_20 = arith.constant 0 : index
    %c0_21 = arith.constant 0 : index
    %36 = vector.load %arg4[%c0_19, %c0_20, %c0_21] : memref<8x8x128xbf16, #tpu.memory_space<vmem>>, vector<8x8x128xbf16>
    "tpu.trace_start"() <{level = 10 : i32, message = "bqk,bkd->bqd"}> : () -> ()
    %cst_22 = arith.constant dense<0.000000e+00> : vector<8x1x128xf32>
    %37 = tpu.matmul %35, %36, %cst_22 {dimension_numbers = #tpu.dot_dimension_numbers<[2], [1], [1], [2], [0, 0, 0, 1, 1, 2], [0], [0]>} : vector<8x1x8xbf16>, vector<8x8x128xbf16>, vector<8x1x128xf32> -> vector<8x1x128xf32>
    "tpu.trace_stop"() : () -> ()
    %38 = vector.shape_cast %37 : vector<8x1x128xf32> to vector<8x128xf32>
    %cst_23 = arith.constant dense<0.000000e+00> : vector<8xf32>
    %39 = vector.multi_reduction <add>, %2, %cst_23 [1] : vector<8x8xf32> to vector<8xf32>
    %40 = vector.shape_cast %39 : vector<8xf32> to vector<8x1xf32>
    %cst_24 = arith.constant 1.000000e+00 : f32
    %41 = vector.broadcast %cst_24 : f32 to vector<8x1xf32>
    %42 = arith.maximumf %40, %41 : vector<8x1xf32>
    %43 = tpu.reciprocal %42 {approx = true} : vector<8x1xf32> -> vector<8x1xf32>
    %44 = vector.broadcast %43 : vector<8x1xf32> to vector<8x128xf32>
    %45 = arith.mulf %38, %44 : vector<8x128xf32>
    %c0_25 = arith.constant 0 : index
    %c0_26 = arith.constant 0 : index
    %46 = vector.load %arg8[%c0_25, %c0_26] : memref<128x128xbf16, #tpu.memory_space<vmem>>, vector<128x128xbf16>
    %cst_27 = arith.constant dense<0.000000e+00> : vector<8x128xf32>
    %47 = tpu.matmul %0, %46, %cst_27 {dimension_numbers = #tpu.dot_dimension_numbers<[1], [0], [0], [1], [0, 0, 1, 1], [], []>} : vector<8x128xbf16>, vector<128x128xbf16>, vector<8x128xf32> -> vector<8x128xf32>
    %48 = arith.truncf %33 : vector<8x128xf32> to vector<8x128xbf16>
    %c0_28 = arith.constant 0 : index
    %c0_29 = arith.constant 0 : index
    %49 = vector.load %arg9[%c0_28, %c0_29] : memref<128x128xbf16, #tpu.memory_space<vmem>>, vector<128x128xbf16>
    %cst_30 = arith.constant dense<0.000000e+00> : vector<8x128xf32>
    %50 = tpu.matmul %48, %49, %cst_30 {dimension_numbers = #tpu.dot_dimension_numbers<[1], [0], [0], [1], [0, 0, 1, 1], [], []>} : vector<8x128xbf16>, vector<128x128xbf16>, vector<8x128xf32> -> vector<8x128xf32>
    %51 = arith.addf %47, %50 : vector<8x128xf32>
    %52 = arith.truncf %45 : vector<8x128xf32> to vector<8x128xbf16>
    %c0_31 = arith.constant 0 : index
    %c0_32 = arith.constant 0 : index
    %53 = vector.load %arg10[%c0_31, %c0_32] : memref<128x128xbf16, #tpu.memory_space<vmem>>, vector<128x128xbf16>
    %cst_33 = arith.constant dense<0.000000e+00> : vector<8x128xf32>
    %54 = tpu.matmul %52, %53, %cst_33 {dimension_numbers = #tpu.dot_dimension_numbers<[1], [0], [0], [1], [0, 0, 1, 1], [], []>} : vector<8x128xbf16>, vector<128x128xbf16>, vector<8x128xf32> -> vector<8x128xf32>
    %55 = arith.addf %51, %54 : vector<8x128xf32>
    %c0_34 = arith.constant 0 : index
    %c0_35 = arith.constant 0 : index
    %56 = vector.load %arg11[%c0_34, %c0_35] : memref<1x128xf32, #tpu.memory_space<vmem>>, vector<1x128xf32>
    %57 = vector.broadcast %56 : vector<1x128xf32> to vector<8x128xf32>
    %58 = arith.addf %55, %57 : vector<8x128xf32>
    %59 = math.tanh %58 : vector<8x128xf32>
    %60 = arith.truncf %59 : vector<8x128xf32> to vector<8x128xbf16>
    %c0_36 = arith.constant 0 : index
    %c0_37 = arith.constant 0 : index
    %61 = vector.load %arg12[%c0_36, %c0_37] : memref<8x128xbf16, #tpu.memory_space<vmem>>, vector<8x128xbf16>
    tpu.vector_store %arg12[%c0_36, %c0_37], %60 {strides = array<i32>} : memref<8x128xbf16, #tpu.memory_space<vmem>>, vector<8x128xbf16>,
    return
  }
  func.func @transform_0(%arg0: i32) -> (i32, i32) {
    %c0_i32 = arith.constant 0 : i32
    %c0_i32_0 = arith.constant 0 : i32
    return %arg0, %c0_i32 : i32, i32
  }
  func.func @transform_1(%arg0: i32) -> (i32, i32, i32) {
    %c0_i32 = arith.constant 0 : i32
    %c0_i32_0 = arith.constant 0 : i32
    %c0_i32_1 = arith.constant 0 : i32
    return %arg0, %c0_i32, %c0_i32_0 : i32, i32, i32
  }
  func.func @transform_2(%arg0: i32) -> (i32, i32) {
    %c0_i32 = arith.constant 0 : i32
    %c0_i32_0 = arith.constant 0 : i32
    return %arg0, %c0_i32 : i32, i32
  }
  func.func @transform_3(%arg0: i32) -> (i32, i32, i32) {
    %c0_i32 = arith.constant 0 : i32
    %c0_i32_0 = arith.constant 0 : i32
    %c0_i32_1 = arith.constant 0 : i32
    return %arg0, %c0_i32, %c0_i32_0 : i32, i32, i32
  }
  func.func @transform_4(%arg0: i32) -> (i32, i32) {
    %c0_i32 = arith.constant 0 : i32
    %c0_i32_0 = arith.constant 0 : i32
    return %arg0, %c0_i32 : i32, i32
  }
  func.func @transform_5(%arg0: i32) -> (i32, i32) {
    %c0_i32 = arith.constant 0 : i32
    %c0_i32_0 = arith.constant 0 : i32
    %c0_i32_1 = arith.constant 0 : i32
    return %c0_i32, %c0_i32_0 : i32, i32
  }
  func.func @transform_6(%arg0: i32) -> (i32, i32) {
    %c0_i32 = arith.constant 0 : i32
    %c0_i32_0 = arith.constant 0 : i32
    %c0_i32_1 = arith.constant 0 : i32
    return %c0_i32, %c0_i32_0 : i32, i32
  }
  func.func @transform_7(%arg0: i32) -> (i32, i32) {
    %c0_i32 = arith.constant 0 : i32
    %c0_i32_0 = arith.constant 0 : i32
    %c0_i32_1 = arith.constant 0 : i32
    return %c0_i32, %c0_i32_0 : i32, i32
  }
  func.func @transform_8(%arg0: i32) -> (i32, i32) {
    %c0_i32 = arith.constant 0 : i32
    %c0_i32_0 = arith.constant 0 : i32
    %c0_i32_1 = arith.constant 0 : i32
    return %c0_i32, %c0_i32_0 : i32, i32
  }
  func.func @transform_9(%arg0: i32) -> (i32, i32) {
    %c0_i32 = arith.constant 0 : i32
    %c0_i32_0 = arith.constant 0 : i32
    %c0_i32_1 = arith.constant 0 : i32
    return %c0_i32, %c0_i32_0 : i32, i32
  }
  func.func @transform_10(%arg0: i32) -> (i32, i32) {
    %c0_i32 = arith.constant 0 : i32
    %c0_i32_0 = arith.constant 0 : i32
    %c0_i32_1 = arith.constant 0 : i32
    return %c0_i32, %c0_i32_0 : i32, i32
  }
  func.func @transform_11(%arg0: i32) -> (i32, i32) {
    %c0_i32 = arith.constant 0 : i32
    %c0_i32_0 = arith.constant 0 : i32
    return %arg0, %c0_i32 : i32, i32
  }
}

</mosaic_0001>

<llo_original>
// kernel: sketchy_decoder_train.3
$region0: #{sketchy_decoder_train.3}
  #allocation0 [shape = 'u32[]', space=smem, size = 0x4, offset = 0x4, fixed_abs, tag = 'smem constant byte address 0x4 - core index']
  #allocation1 [shape = 'u32[144,128]{1,0:T(1,128)}', space=vmem, size = 0x12000, scoped, tag = 'internal scratch']
  #allocation2 [shape = 'f32[2,8,1]{2,1,0:T(8,128)}', space=vmem, size = 0x2000, scoped, tag = 'scratch operand']
  #allocation3 [shape = 'f32[2,8,1]{2,1,0:T(8,128)}', space=vmem, size = 0x2000, scoped, tag = 'scratch operand']
  %s0 = inlined_call_operand.vmem [shape: bf16[16,128], index: 0, kind: input, shape index: {}]
  %s1 = inlined_call_operand.vmem [shape: bf16[128,256], index: 1, kind: input, shape index: {}]
  %s2 = inlined_call_operand.vmem [shape: f32[1,256], index: 2, kind: input, shape index: {}]
  %s3 = inlined_call_operand.vmem [shape: f32[16,256], index: 3, kind: output, shape index: {0}]
  %s4 = inlined_call_operand.vmem [shape: f32[16,1], index: 4, kind: output, shape index: {1}]
  %5 = xla_tuple %s3, %s4
  %s6 = sld [smem:[#allocation0]]
  $region98: #{sketchy_decoder_train.3} parent=0
    _
  %s8 = ssub.s32 1, %s6
  %s9 = scalar_select 0, %s8, %s6
  $region1: #{sketchy_decoder_train.3} parent=0
    #allocation4 [shape = 'u8[65536]{0}', space=vmem, size = 0x10000, scoped, tag = 'input window, operand 1']
    loop: start=0, step=1, limit=6
    $region2: #{sketchy_decoder_train.3} parent=1 // loop_pre_header
      _
    $region3: #{sketchy_decoder_train.3} parent=1 // loop_header
      %s11 = sphi 0, %s15
      %p12 = scmp.ge.s32.totalorder %s11, 6
      %s18 = sphi 0, %s30
      %s19 = sphi 0, %s26
      %s20 = sphi 0, %s18
      %s21 = sphi 0, %s19
      %s22 = sphi 0, %s20
      %s23 = sphi 0, %s21
      %s33 = sphi 0, %s35
      %s36 = sphi 0, %s33
      %s37 = sphi 0, %s36
      %s53 = sphi 0, %s37
      %s59 = sphi 0, %s61
      %s62 = sphi 0, %s59
      %s63 = sphi 0, %s62
      %s79 = sphi 0, %s63
      %s85 = sphi 0, %s87
      %s88 = sphi 0, %s85
      %s89 = sphi 0, %s88
      %s105 = sphi 0, %s89
      %s113 = sphi 0, %s115
      %s116 = sphi 0, %s113
      %s117 = sphi 0, %s116
      %s133 = sphi 0, %s117
      %s139 = sphi 0, %s141
      %s142 = sphi 0, %s139
      %s143 = sphi 0, %s142
      %s159 = sphi 0, %s143
    $region4: #{sketchy_decoder_train.3} parent=1 // loop_header_branch
      %14 = sbr.rel (%p12) target = $region8
    $region5: #{sketchy_decoder_train.3} parent=1 // loop_body
      %s16 = ssub.s32 %s11, 1
      %s17 = ssub.s32 %s11, 2
      %s24 = sadd.s32 1, %s19
      %p25 = scmp.ge.s32.totalorder %s24, 2
      %s26 = scalar_select %p25, 0, %s24
      %s27 = sadd.s32 1, %s18
      %s28 = scalar_select %p25, %s27, %s18
      %p29 = scmp.ge.s32.totalorder %s28, 2
      %s30 = scalar_select %p29, 0, %s28
      %s31 = ssub.s32 %s19, %s26
      %p32 = scmp.eq.s32.totalorder %s31, 0
      %s34 = sadd.s32 %s33, 1
      %s35 = scalar_select %p32, %s33, %s34
      %p38 = pneg %p32
      %p39 = scmp.eq.s32.totalorder %s11, 3
      %p40 = por %p38, %p39
      %p41 = scmp.ne.s32.totalorder %s33, %s36
      %p42 = scmp.eq.s32.totalorder %s11, 0
      %p43 = por %p41, %p42
      %p44 = scmp.ne.s32.totalorder %s33, %s36
      %p45 = scmp.eq.s32.totalorder %s16, 3
      %p46 = por %p44, %p45
      %p47 = scmp.ne.s32.totalorder %s36, %s37
      %p48 = scmp.eq.s32.totalorder %s16, 0
      %p49 = por %p47, %p48
      %p50 = scmp.ne.s32.totalorder %s36, %s37
      %p51 = scmp.eq.s32.totalorder %s17, 3
      %p52 = por %p50, %p51
      %p54 = scmp.ne.s32.totalorder %s37, %s53
      %p55 = scmp.eq.s32.totalorder %s17, 0
      %p56 = por %p54, %p55
      %s57 = ssub.s32 %s18, %s30
      %p58 = scmp.eq.s32.totalorder %s57, 0
      %s60 = sadd.s32 %s59, 1
      %s61 = scalar_select %p58, %s59, %s60
      %p64 = pneg %p58
      %p65 = scmp.eq.s32.totalorder %s11, 3
      %p66 = por %p64, %p65
      %p67 = scmp.ne.s32.totalorder %s59, %s62
      %p68 = scmp.eq.s32.totalorder %s11, 0
      %p69 = por %p67, %p68
      %p70 = scmp.ne.s32.totalorder %s59, %s62
      %p71 = scmp.eq.s32.totalorder %s16, 3
      %p72 = por %p70, %p71
      %p73 = scmp.ne.s32.totalorder %s62, %s63
      %p74 = scmp.eq.s32.totalorder %s16, 0
      %p75 = por %p73, %p74
      %p76 = scmp.ne.s32.totalorder %s62, %s63
      %p77 = scmp.eq.s32.totalorder %s17, 3
      %p78 = por %p76, %p77
      %p80 = scmp.ne.s32.totalorder %s63, %s79
      %p81 = scmp.eq.s32.totalorder %s17, 0
      %p82 = por %p80, %p81
      %s83 = ssub.s32 %s18, %s30
      %p84 = scmp.eq.s32.totalorder %s83, 0
      %s86 = sadd.s32 %s85, 1
      %s87 = scalar_select %p84, %s85, %s86
      %p90 = pneg %p84
      %p91 = scmp.eq.s32.totalorder %s11, 3
      %p92 = por %p90, %p91
      %p93 = scmp.ne.s32.totalorder %s85, %s88
      %p94 = scmp.eq.s32.totalorder %s11, 0
      %p95 = por %p93, %p94
      %p96 = scmp.ne.s32.totalorder %s85, %s88
      %p97 = scmp.eq.s32.totalorder %s16, 3
      %p98 = por %p96, %p97
      %p99 = scmp.ne.s32.totalorder %s88, %s89
      %p100 = scmp.eq.s32.totalorder %s16, 0
      %p101 = por %p99, %p100
      %p102 = scmp.ne.s32.totalorder %s88, %s89
      %p103 = scmp.eq.s32.totalorder %s17, 3
      %p104 = por %p102, %p103
      %p106 = scmp.ne.s32.totalorder %s89, %s105
      %p107 = scmp.eq.s32.totalorder %s17, 0
      %p108 = por %p106, %p107
      %s109 = ssub.s32 %s19, %s26
      %s110 = ssub.s32 %s18, %s30
      %s111 = sor.u32 %s109, %s110
      %p112 = scmp.eq.s32.totalorder %s111, 0
      %s114 = sadd.s32 %s113, 1
      %s115 = scalar_select %p112, %s113, %s114
      %p118 = pneg %p112
      %p119 = scmp.eq.s32.totalorder %s11, 3
      %p120 = por %p118, %p119
      %p121 = scmp.ne.s32.totalorder %s113, %s116
      %p122 = scmp.eq.s32.totalorder %s11, 0
      %p123 = por %p121, %p122
      %p124 = scmp.ne.s32.totalorder %s113, %s116
      %p125 = scmp.eq.s32.totalorder %s16, 3
      %p126 = por %p124, %p125
      %p127 = scmp.ne.s32.totalorder %s116, %s117
      %p128 = scmp.eq.s32.totalorder %s16, 0
      %p129 = por %p127, %p128
      %p130 = scmp.ne.s32.totalorder %s116, %s117
      %p131 = scmp.eq.s32.totalorder %s17, 3
      %p132 = por %p130, %p131
      %p134 = scmp.ne.s32.totalorder %s117, %s133
      %p135 = scmp.eq.s32.totalorder %s17, 0
      %p136 = por %p134, %p135
      %s137 = ssub.s32 %s19, %s26
      %p138 = scmp.eq.s32.totalorder %s137, 0
      %s140 = sadd.s32 %s139, 1
      %s141 = scalar_select %p138, %s139, %s140
      %p144 = pneg %p138
      %p145 = scmp.eq.s32.totalorder %s11, 3
      %p146 = por %p144, %p145
      %p147 = scmp.ne.s32.totalorder %s139, %s142
      %p148 = scmp.eq.s32.totalorder %s11, 0
      %p149 = por %p147, %p148
      %p150 = scmp.ne.s32.totalorder %s139, %s142
      %p151 = scmp.eq.s32.totalorder %s16, 3
      %p152 = por %p150, %p151
      %p153 = scmp.ne.s32.totalorder %s142, %s143
      %p154 = scmp.eq.s32.totalorder %s16, 0
      %p155 = por %p153, %p154
      %p156 = scmp.ne.s32.totalorder %s142, %s143
      %p157 = scmp.eq.s32.totalorder %s17, 3
      %p158 = por %p156, %p157
      %p160 = scmp.ne.s32.totalorder %s143, %s159
      %p161 = scmp.eq.s32.totalorder %s17, 0
      %p162 = por %p160, %p161
      %p163 = scmp.le.s32.totalorder 1, %s11
      %p164 = scmp.lt.s32.totalorder %s11, 5
      %p165 = pnand %p163, %p164
      %p166 = pneg %p165
      // Predicated region
      $region9: #{sketchy_decoder_train.3} parent=5 // pred_check
        _
      $region10: #{sketchy_decoder_train.3} parent=5 // pred_check_branch
        %168 = sbr.rel (%p165) target = $region12
      $region11: #{sketchy_decoder_train.3} parent=5 // pred_region
        %s169 = ssub.s32 %s11, 1
      $region12: #{sketchy_decoder_train.3} parent=5 // pred_fallthru
        _
      %p170 = scmp.lt.s32.totalorder %s11, 4
      // Predicated region
      $region13: #{sketchy_decoder_train.3} parent=5 // pred_check
        %p171 = pneg %p170
      $region14: #{sketchy_decoder_train.3} parent=5 // pred_check_branch
        %173 = sbr.rel (%p171) target = $region16
      $region15: #{sketchy_decoder_train.3} parent=5 // pred_region
        // Predicated region
        $region17: #{sketchy_decoder_train.3} parent=15 // pred_check
          %p174 = pneg %p43
        $region18: #{sketchy_decoder_train.3} parent=15 // pred_check_branch
          %176 = sbr.rel (%p174) target = $region20
        $region19: #{sketchy_decoder_train.3} parent=15 // pred_region
          %p177 = scmp.lt.s32.totalorder %s19, 1
          %s178 = scalar_select %p177, %s19, 1
          %s179 = smul.addr %s178, 4
          %s180 = scalar_lea.vmem %s0, %s179
        $region20: #{sketchy_decoder_train.3} parent=15 // pred_fallthru
          _
        // Predicated region
        $region21: #{sketchy_decoder_train.3} parent=15 // pred_check
          %p181 = pneg %p69
        $region22: #{sketchy_decoder_train.3} parent=15 // pred_check_branch
          %183 = sbr.rel (%p181) target = $region24
        $region23: #{sketchy_decoder_train.3} parent=15 // pred_region
          %s184 = sand.u32 %s59, 1
          %s185 = sand.u32 %s59, 1
          %s186 = smul.addr %s185, 64
          %s187 = scalar_lea.vmem [#allocation4], %s186
          %s188 = smul.addr %s18, 4
          %s189 = scalar_lea.vmem %s1, %s188
          // Predicated region
          $region25: #{sketchy_decoder_train.3} parent=23 // pred_check
            _
          $region26: #{sketchy_decoder_train.3} parent=23 // pred_check_branch
            %191 = sbr.rel (0) target = $region28
          $region27: #{sketchy_decoder_train.3} parent=23 // pred_region
            // Predicated region
            $region29: #{sketchy_decoder_train.3} parent=27 // pred_check
              _
            $region30: #{sketchy_decoder_train.3} parent=27 // pred_check_branch
              %193 = sbr.rel target = $region32
            $region31: #{sketchy_decoder_train.3} parent=27 // pred_region
              // Predicated region
              $region44: #{sketchy_decoder_train.3} parent=31 // pred_check
                _
              $region45: #{sketchy_decoder_train.3} parent=31 // pred_check_branch
                %238 = sbr.rel (0) target = $region47
              $region46: #{sketchy_decoder_train.3} parent=31 // pred_region
                loop: start=0, step=1, limit=1
                $region48: #{sketchy_decoder_train.3} parent=46 // loop_pre_header
                  _
                $region49: #{sketchy_decoder_train.3} parent=46 // loop_header
                  %s240 = sphi 0, %s244
                  %p241 = scmp.ge.s32.totalorder %s240, 1
                  %s245 = sphi %s189, %s189
                  %s246 = sphi %s187, %s187
                $region50: #{sketchy_decoder_train.3} parent=46 // loop_header_branch
                  %243 = sbr.rel (%p241) target = $region54
                $region51: #{sketchy_decoder_train.3} parent=46 // loop_body
                  _
                $region52: #{sketchy_decoder_train.3} parent=46 // loop_footer
                  %s244 = sadd.s32 1, %s240
                $region53: #{sketchy_decoder_train.3} parent=46 // loop_footer_branch
                  %239 = sbr.rel target = $region49
                $region54: #{sketchy_decoder_train.3} parent=46 // loop_exit
                  _
                loop: start=0, step=1, limit=1
                $region55: #{sketchy_decoder_train.3} parent=46 // loop_pre_header
                  _
                $region56: #{sketchy_decoder_train.3} parent=46 // loop_header
                  %s249 = sphi 0, %s253
                  %p250 = scmp.ge.s32.totalorder %s249, 1
                  %s254 = sphi %s189, %s189
                  %s255 = sphi %s187, %s187
                $region57: #{sketchy_decoder_train.3} parent=46 // loop_header_branch
                  %252 = sbr.rel (%p250) target = $region61
                $region58: #{sketchy_decoder_train.3} parent=46 // loop_body
                  %v256 = vld [vmem:[%s254] sm:$0xf]
                  %257 = vst [vmem:[%s255] sm:$0xf] %v256
                  %v258 = vld [vmem:[%s254 + $0x8] sm:$0xf]
                  %259 = vst [vmem:[%s255 + $0x4] sm:$0xf] %v258
                  %v260 = vld [vmem:[%s254 + $0x10] sm:$0xf]
                  %261 = vst [vmem:[%s255 + $0x8] sm:$0xf] %v260
                  %v262 = vld [vmem:[%s254 + $0x18] sm:$0xf]
                  %263 = vst [vmem:[%s255 + $0xc] sm:$0xf] %v262
                  %v264 = vld [vmem:[%s254 + $0x20] sm:$0xf]
                  %265 = vst [vmem:[%s255 + $0x10] sm:$0xf] %v264
                  %v266 = vld [vmem:[%s254 + $0x28] sm:$0xf]
                  %267 = vst [vmem:[%s255 + $0x14] sm:$0xf] %v266
                  %v268 = vld [vmem:[%s254 + $0x30] sm:$0xf]
                  %269 = vst [vmem:[%s255 + $0x18] sm:$0xf] %v268
                  %v270 = vld [vmem:[%s254 + $0x38] sm:$0xf]
                  %271 = vst [vmem:[%s255 + $0x1c] sm:$0xf] %v270
                  %v272 = vld [vmem:[%s254 + $0x40] sm:$0xf]
                  %273 = vst [vmem:[%s255 + $0x20] sm:$0xf] %v272
                  %v274 = vld [vmem:[%s254 + $0x48] sm:$0xf]
                  %275 = vst [vmem:[%s255 + $0x24] sm:$0xf] %v274
                  %v276 = vld [vmem:[%s254 + $0x50] sm:$0xf]
                  %277 = vst [vmem:[%s255 + $0x28] sm:$0xf] %v276
                  %v278 = vld [vmem:[%s254 + $0x58] sm:$0xf]
                  %279 = vst [vmem:[%s255 + $0x2c] sm:$0xf] %v278
                  %v280 = vld [vmem:[%s254 + $0x60] sm:$0xf]
                  %281 = vst [vmem:[%s255 + $0x30] sm:$0xf] %v280
                  %v282 = vld [vmem:[%s254 + $0x68] sm:$0xf]
                  %283 = vst [vmem:[%s255 + $0x34] sm:$0xf] %v282
                  %v284 = vld [vmem:[%s254 + $0x70] sm:$0xf]
                  %285 = vst [vmem:[%s255 + $0x38] sm:$0xf] %v284
                  %v286 = vld [vmem:[%s254 + $0x78] sm:$0xf]
                  %287 = vst [vmem:[%s255 + $0x3c] sm:$0xf] %v286
                $region59: #{sketchy_decoder_train.3} parent=46 // loop_footer
                  %s253 = sadd.s32 1, %s249
                $region60: #{sketchy_decoder_train.3} parent=46 // loop_footer_branch
                  %248 = sbr.rel target = $region56
                $region61: #{sketchy_decoder_train.3} parent=46 // loop_exit
                  _
              $region47: #{sketchy_decoder_train.3} parent=31 // pred_fallthru
                _
            $region32: #{sketchy_decoder_train.3} parent=27 // pred_fallthru
              _
            // Predicated region
            $region33: #{sketchy_decoder_train.3} parent=27 // pred_check
              _
            $region34: #{sketchy_decoder_train.3} parent=27 // pred_check_branch
              %195 = sbr.rel (0) target = $region36
            $region35: #{sketchy_decoder_train.3} parent=27 // pred_region
              loop: start=0, step=1, limit=1
              $region37: #{sketchy_decoder_train.3} parent=35 // loop_pre_header
                _
              $region38: #{sketchy_decoder_train.3} parent=35 // loop_header
                %s198 = sphi 0, %s202
                %p199 = scmp.ge.s32.totalorder %s198, 1
                %s203 = sphi %s189, %s189
                %s204 = sphi %s187, %s187
              $region39: #{sketchy_decoder_train.3} parent=35 // loop_header_branch
                %201 = sbr.rel (%p199) target = $region43
              $region40: #{sketchy_decoder_train.3} parent=35 // loop_body
                %v205 = vld [vmem:[%s203] sm:$0xf]
                %206 = vst [vmem:[%s204] sm:$0xf] %v205
                %v207 = vld [vmem:[%s203 + $0x8] sm:$0xf]
                %208 = vst [vmem:[%s204 + $0x4] sm:$0xf] %v207
                %v209 = vld [vmem:[%s203 + $0x10] sm:$0xf]
                %210 = vst [vmem:[%s204 + $0x8] sm:$0xf] %v209
                %v211 = vld [vmem:[%s203 + $0x18] sm:$0xf]
                %212 = vst [vmem:[%s204 + $0xc] sm:$0xf] %v211
                %v213 = vld [vmem:[%s203 + $0x20] sm:$0xf]
                %214 = vst [vmem:[%s204 + $0x10] sm:$0xf] %v213
                %v215 = vld [vmem:[%s203 + $0x28] sm:$0xf]
                %216 = vst [vmem:[%s204 + $0x14] sm:$0xf] %v215
                %v217 = vld [vmem:[%s203 + $0x30] sm:$0xf]
                %218 = vst [vmem:[%s204 + $0x18] sm:$0xf] %v217
                %v219 = vld [vmem:[%s203 + $0x38] sm:$0xf]
                %220 = vst [vmem:[%s204 + $0x1c] sm:$0xf] %v219
                %v221 = vld [vmem:[%s203 + $0x40] sm:$0xf]
                %222 = vst [vmem:[%s204 + $0x20] sm:$0xf] %v221
                %v223 = vld [vmem:[%s203 + $0x48] sm:$0xf]
                %224 = vst [vmem:[%s204 + $0x24] sm:$0xf] %v223
                %v225 = vld [vmem:[%s203 + $0x50] sm:$0xf]
                %226 = vst [vmem:[%s204 + $0x28] sm:$0xf] %v225
                %v227 = vld [vmem:[%s203 + $0x58] sm:$0xf]
                %228 = vst [vmem:[%s204 + $0x2c] sm:$0xf] %v227
                %v229 = vld [vmem:[%s203 + $0x60] sm:$0xf]
                %230 = vst [vmem:[%s204 + $0x30] sm:$0xf] %v229
                %v231 = vld [vmem:[%s203 + $0x68] sm:$0xf]
                %232 = vst [vmem:[%s204 + $0x34] sm:$0xf] %v231
                %v233 = vld [vmem:[%s203 + $0x70] sm:$0xf]
                %234 = vst [vmem:[%s204 + $0x38] sm:$0xf] %v233
                %v235 = vld [vmem:[%s203 + $0x78] sm:$0xf]
                %236 = vst [vmem:[%s204 + $0x3c] sm:$0xf] %v235
              $region41: #{sketchy_decoder_train.3} parent=35 // loop_footer
                %s202 = sadd.s32 1, %s198
              $region42: #{sketchy_decoder_train.3} parent=35 // loop_footer_branch
                %197 = sbr.rel target = $region38
              $region43: #{sketchy_decoder_train.3} parent=35 // loop_exit
                _
            $region36: #{sketchy_decoder_train.3} parent=27 // pred_fallthru
              _
          $region28: #{sketchy_decoder_train.3} parent=23 // pred_fallthru
            _
          %288 = vnop
        $region24: #{sketchy_decoder_train.3} parent=15 // pred_fallthru
          _
        // Predicated region
        $region62: #{sketchy_decoder_train.3} parent=15 // pred_check
          %p289 = pneg %p95
        $region63: #{sketchy_decoder_train.3} parent=15 // pred_check_branch
          %291 = sbr.rel (%p289) target = $region65
        $region64: #{sketchy_decoder_train.3} parent=15 // pred_region
          %p292 = scmp.lt.s32.totalorder %s18, 1
          %s293 = scalar_select %p292, %s18, 1
          %s294 = scalar_lea.vmem %s2, %s293
        $region65: #{sketchy_decoder_train.3} parent=15 // pred_fallthru
          _
      $region16: #{sketchy_decoder_train.3} parent=5 // pred_fallthru
        _
      %p295 = scmp.le.s32.totalorder 1, %s11
      %p296 = scmp.lt.s32.totalorder %s11, 5
      %p297 = pnand %p295, %p296
      %p298 = pneg %p297
      // Predicated region
      $region66: #{sketchy_decoder_train.3} parent=5 // pred_check
        _
      $region67: #{sketchy_decoder_train.3} parent=5 // pred_check_branch
        %300 = sbr.rel (%p297) target = $region69
      $region68: #{sketchy_decoder_train.3} parent=5 // pred_region
        %s301 = ssub.s32 %s11, 1
        %s302 = sand.u32 %s62, 1
        %s303 = sand.u32 %s62, 1
        %s304 = smul.addr %s303, 64
        %s305 = scalar_lea.vmem [#allocation4], %s304
        // Predicated region
        $region70: #{sketchy_decoder_train.3} parent=68 // pred_check
          %p306 = pneg %p75
        $region71: #{sketchy_decoder_train.3} parent=68 // pred_check_branch
          %308 = sbr.rel (%p306) target = $region73
        $region72: #{sketchy_decoder_train.3} parent=68 // pred_region
          _
        $region73: #{sketchy_decoder_train.3} parent=68 // pred_fallthru
          _
        %p309 = scmp.lt.s32.totalorder %s21, 1
        %s310 = scalar_select %p309, %s21, 1
        %s311 = smul.addr %s310, 4
        %s312 = scalar_lea.vmem %s0, %s311
        %p313 = pneg %p49
        %p314 = pneg %p46
        %s315 = sand.u32 %s62, 1
        %s316 = sand.u32 %s62, 1
        %s317 = smul.addr %s316, 64
        %s318 = scalar_lea.vmem [#allocation4], %s317
        %p319 = pneg %p75
        %p320 = pneg %p72
        %p321 = scmp.lt.s32.totalorder %s20, 1
        %s322 = scalar_select %p321, %s20, 1
        %s323 = scalar_lea.vmem %s2, %s322
        %p324 = pneg %p101
        %p325 = pneg %p98
        %p326 = pneg %p129
        %p327 = pneg %p126
        %p328 = scmp.lt.s32.totalorder %s21, 1
        %s329 = scalar_select %p328, %s21, 1
        %p330 = scmp.lt.s32.totalorder %s20, 1
        %s331 = scalar_select %p330, %s20, 1
        %s332 = smul.addr %s329, 2
        %s333 = sadd.s32 %s331, %s332
        %s334 = smul.addr %s333, 8
        %s335 = scalar_lea.vmem %s3, %s334
        %p336 = pneg %p155
        %p337 = pneg %p152
        %p338 = scmp.lt.s32.totalorder %s21, 1
        %s339 = scalar_select %p338, %s21, 1
        %s340 = smul.addr %s339, 8
        %s341 = scalar_lea.vmem %s4, %s340
        %p342 = scmp.lt.s32.totalorder %s21, 1
        %s343 = scalar_select %p342, %s21, 1
        %s344 = smul.addr %s343, 4
        %s345 = scalar_lea.vmem %s0, %s344
        %p346 = scmp.lt.s32.totalorder %s20, 1
        %s347 = scalar_select %p346, %s20, 1
        %s348 = scalar_lea.vmem %s2, %s347
        %p349 = scmp.lt.s32.totalorder %s21, 1
        %s350 = scalar_select %p349, %s21, 1
        %p351 = scmp.lt.s32.totalorder %s20, 1
        %s352 = scalar_select %p351, %s20, 1
        %s353 = smul.addr %s350, 2
        %s354 = sadd.s32 %s352, %s353
        %s355 = smul.addr %s354, 8
        %s356 = scalar_lea.vmem %s3, %s355
        %p357 = scmp.lt.s32.totalorder %s21, 1
        %s358 = scalar_select %p357, %s21, 1
        %s359 = smul.addr %s358, 8
        %s360 = scalar_lea.vmem %s4, %s359
        %v362 = vld [vmem:[%s345] sm:$0xf]
        %v363 = vld [vmem:[%s305] sm:$0xf]
        %v364 = vld [vmem:[%s305 + $0x4] sm:$0xf]
        %v365 = vld [vmem:[%s305 + $0x8] sm:$0xf]
        %v366 = vld [vmem:[%s305 + $0xc] sm:$0xf]
        %v367 = vld [vmem:[%s305 + $0x10] sm:$0xf]
        %v368 = vld [vmem:[%s305 + $0x14] sm:$0xf]
        %v369 = vld [vmem:[%s305 + $0x18] sm:$0xf]
        %v370 = vld [vmem:[%s305 + $0x1c] sm:$0xf]
        %v371 = vld [vmem:[%s305 + $0x20] sm:$0xf]
        %v372 = vld [vmem:[%s305 + $0x24] sm:$0xf]
        %v373 = vld [vmem:[%s305 + $0x28] sm:$0xf]
        %v374 = vld [vmem:[%s305 + $0x2c] sm:$0xf]
        %v375 = vld [vmem:[%s305 + $0x30] sm:$0xf]
        %v376 = vld [vmem:[%s305 + $0x34] sm:$0xf]
        %v377 = vld [vmem:[%s305 + $0x38] sm:$0xf]
        %v378 = vld [vmem:[%s305 + $0x3c] sm:$0xf]
        %v379 = vld [vmem:[%s348] sm:$0x1]
        %v381 = vlaneseq
        %v382 = vshrl.u32 %v381, 7
        %v383 = vsub.s32 0, %v382
        %v384 = vrot.slane %v379, %v383
        %v402 = vunpack.c.l.b16 %v363
        %v403 = vunpack.c.l.b16 %v364
        %v404 = vunpack.c.l.b16 %v365
        %v405 = vunpack.c.l.b16 %v366
        %v406 = vunpack.c.l.b16 %v367
        %v407 = vunpack.c.l.b16 %v368
        %v408 = vunpack.c.l.b16 %v369
        %v409 = vunpack.c.l.b16 %v370
        %v410 = vunpack.c.l.b16 %v371
        %v411 = vunpack.c.l.b16 %v372
        %v412 = vunpack.c.l.b16 %v373
        %v413 = vunpack.c.l.b16 %v374
        %v414 = vunpack.c.l.b16 %v375
        %v415 = vunpack.c.l.b16 %v376
        %v416 = vunpack.c.l.b16 %v377
        %v417 = vunpack.c.l.b16 %v378
        %v418 = vpack.c.b16 %v403, %v402
        %v419 = vpack.c.b16 %v405, %v404
        %v420 = vpack.c.b16 %v407, %v406
        %v421 = vpack.c.b16 %v409, %v408
        %v422 = vpack.c.b16 %v411, %v410
        %v423 = vpack.c.b16 %v413, %v412
        %v424 = vpack.c.b16 %v415, %v414
        %v425 = vpack.c.b16 %v417, %v416
        %434 = vmatprep.subr.bf16.mxu0 0
        %435 = vmatpush1.bf16.msra.mxu0 %v418
        %436 = vmatprep.subr.bf16.mxu0 0
        %437 = vmatpush1.bf16.msra.mxu0 %v419
        %438 = vmatprep.subr.bf16.mxu0 0
        %439 = vmatpush1.bf16.msra.mxu0 %v420
        %440 = vmatprep.subr.bf16.mxu0 0
        %441 = vmatpush1.bf16.msra.mxu0 %v421
        %442 = vmatprep.subr.bf16.mxu0 0
        %443 = vmatpush1.bf16.msra.mxu0 %v422
        %444 = vmatprep.subr.bf16.mxu0 0
        %445 = vmatpush1.bf16.msra.mxu0 %v423
        %446 = vmatprep.subr.bf16.mxu0 0
        %447 = vmatpush1.bf16.msra.mxu0 %v424
        %448 = vmatprep.subr.bf16.mxu0 0
        %449 = vmatpush1.bf16.msra.mxu0 %v425
        %450 = vmatprep.subr.bf16.mxu0 0
        %451 = vmatpush1.bf16.msra.mxu0 0
        %452 = vmatprep.subr.bf16.mxu0 0
        %453 = vmatpush1.bf16.msra.mxu0 0
        %454 = vmatprep.subr.bf16.mxu0 0
        %455 = vmatpush1.bf16.msra.mxu0 0
        %456 = vmatprep.subr.bf16.mxu0 0
        %457 = vmatpush1.bf16.msra.mxu0 0
        %458 = vmatprep.subr.bf16.mxu0 0
        %459 = vmatpush1.bf16.msra.mxu0 0
        %460 = vmatprep.subr.bf16.mxu0 0
        %461 = vmatpush1.bf16.msra.mxu0 0
        %462 = vmatprep.subr.bf16.mxu0 0
        %463 = vmatpush1.bf16.msra.mxu0 0
        %464 = vmatprep.subr.bf16.mxu0 0
        %465 = vmatpush1.bf16.msra.mxu0 0
        %466 = vmatprep.mubr.bf16.mxu0 0
        %467 = vmatmul.mubr.bf16.gmra.mrb[0].mxu0 %v362
        %v468 = vpop.f32.mrb[0].mxu0
        %v469 = vadd.f32 %v384, %v468
        %v470 = vpop.f32.mrb[0].mxu0
        %v471 = vpop.f32.mrb[0].mxu0
        %v472 = vpop.f32.mrb[0].mxu0
        %473 = vdwg.mxu0
        %474 = vst [vmem:[%s356] sm:$0xff] %v469
        %475 = vmax.xlane.f32.xlu0 %v469
        %v476 = vpop.xlane.xlu0 %475
        %p477 = scmp.eq.s32.totalorder %s20, 0
        // Predicated region
        $region74: #{sketchy_decoder_train.3} parent=68 // pred_check
          %p478 = pneg %p477
        $region75: #{sketchy_decoder_train.3} parent=68 // pred_check_branch
          %480 = sbr.rel (%p478) target = $region77
        $region76: #{sketchy_decoder_train.3} parent=68 // pred_region
          %s481 = smul.u32 %s21, 8
          %s482 = scalar_lea.vmem [#allocation2], %s481
          %vm483 = vcmask 7168
          %484 = vst.msk [vmem:[%s482] sm:$0xff] %vm483, -inf
          %s485 = scalar_lea.vmem [#allocation3], %s481
          %486 = vst.msk [vmem:[%s485] sm:$0xff] %vm483, 0.0
        $region77: #{sketchy_decoder_train.3} parent=68 // pred_fallthru
          _
        %s487 = smul.u32 %s21, 8
        %s488 = scalar_lea.vmem [#allocation2], %s487
        %v489 = vld [vmem:[%s488] sm:$0xff]
        %v490 = vmax.f32 %v489, %v476
        %v491 = vsub.f32 %v489, %v490
        %v492 = vmul.f32 %v491, 1.442695
        %v493 = vpow.pop %v492
        %s494 = scalar_lea.vmem [#allocation3], %s487
        %v495 = vld [vmem:[%s494] sm:$0xff]
        %v496 = vmul.f32 %v493, %v495
        %498 = vset.pattern.permute.xlu0 0
        %499 = vperm.xlu0 %498, %v490
        %v500 = vpop.permute.xlu0 %499
        %v502 = vsub.f32 %v469, %v500
        %v503 = vmul.f32 %v502, 1.442695
        %v504 = vpow.pop %v503
        %505 = vadd.xlane.f32.xlu0 %v504
        %v506 = vpop.xlane.xlu0 %505
        %v507 = vadd.f32 %v496, %v506
        %vm508 = vcmask 7168
        %509 = vst.msk [vmem:[%s488] sm:$0xff] %vm508, %v490
        %510 = vst.msk [vmem:[%s494] sm:$0xff] %vm508, %v507
        %v511 = vlog2.pop %v507
        %v512 = vmul.f32 %v511, 0.6931472
        %v513 = vadd.f32 %v490, %v512
        %514 = vst.msk [vmem:[%s360] sm:$0xff] %vm508, %v513
        %p515 = scmp.lt.s32.totalorder %s21, 1
        %s516 = scalar_select %p515, %s21, 1
        %p517 = scmp.lt.s32.totalorder %s20, 1
        %s518 = scalar_select %p517, %s20, 1
        %s519 = smul.addr %s516, 2
        %s520 = sadd.s32 %s518, %s519
        %s521 = smul.addr %s520, 8
        %s522 = scalar_lea.vmem %s3, %s521
        %p523 = scmp.lt.s32.totalorder %s21, 1
        %s524 = scalar_select %p523, %s21, 1
        %s525 = smul.addr %s524, 8
        %s526 = scalar_lea.vmem %s4, %s525
        // Predicated region
        $region78: #{sketchy_decoder_train.3} parent=68 // pred_check
          %p527 = pneg %p126
        $region79: #{sketchy_decoder_train.3} parent=68 // pred_check_branch
          %529 = sbr.rel (%p527) target = $region81
        $region80: #{sketchy_decoder_train.3} parent=68 // pred_region
          _
        $region81: #{sketchy_decoder_train.3} parent=68 // pred_fallthru
          _
        // Predicated region
        $region82: #{sketchy_decoder_train.3} parent=68 // pred_check
          %p530 = pneg %p152
        $region83: #{sketchy_decoder_train.3} parent=68 // pred_check_branch
          %532 = sbr.rel (%p530) target = $region85
        $region84: #{sketchy_decoder_train.3} parent=68 // pred_region
          _
        $region85: #{sketchy_decoder_train.3} parent=68 // pred_fallthru
          _
      $region69: #{sketchy_decoder_train.3} parent=5 // pred_fallthru
        _
      %p533 = scmp.le.s32.totalorder 2, %s11
      // Predicated region
      $region86: #{sketchy_decoder_train.3} parent=5 // pred_check
        %p534 = pneg %p533
      $region87: #{sketchy_decoder_train.3} parent=5 // pred_check_branch
        %536 = sbr.rel (%p534) target = $region89
      $region88: #{sketchy_decoder_train.3} parent=5 // pred_region
        %s537 = ssub.s32 %s11, 2
        // Predicated region
        $region90: #{sketchy_decoder_train.3} parent=88 // pred_check
          %p538 = pneg %p132
        $region91: #{sketchy_decoder_train.3} parent=88 // pred_check_branch
          %540 = sbr.rel (%p538) target = $region93
        $region92: #{sketchy_decoder_train.3} parent=88 // pred_region
          %p541 = scmp.lt.s32.totalorder %s23, 1
          %s542 = scalar_select %p541, %s23, 1
          %p543 = scmp.lt.s32.totalorder %s22, 1
          %s544 = scalar_select %p543, %s22, 1
          %s545 = smul.addr %s542, 2
          %s546 = sadd.s32 %s544, %s545
          %s547 = smul.addr %s546, 8
          %s548 = scalar_lea.vmem %s3, %s547
        $region93: #{sketchy_decoder_train.3} parent=88 // pred_fallthru
          _
        // Predicated region
        $region94: #{sketchy_decoder_train.3} parent=88 // pred_check
          %p549 = pneg %p158
        $region95: #{sketchy_decoder_train.3} parent=88 // pred_check_branch
          %551 = sbr.rel (%p549) target = $region97
        $region96: #{sketchy_decoder_train.3} parent=88 // pred_region
          %p552 = scmp.lt.s32.totalorder %s23, 1
          %s553 = scalar_select %p552, %s23, 1
          %s554 = smul.addr %s553, 8
          %s555 = scalar_lea.vmem %s4, %s554
        $region97: #{sketchy_decoder_train.3} parent=88 // pred_fallthru
          _
      $region89: #{sketchy_decoder_train.3} parent=5 // pred_fallthru
        _
    $region6: #{sketchy_decoder_train.3} parent=1 // loop_footer
      %s15 = sadd.s32 1, %s11
    $region7: #{sketchy_decoder_train.3} parent=1 // loop_footer_branch
      %10 = sbr.rel target = $region3
    $region8: #{sketchy_decoder_train.3} parent=1 // loop_exit
      _

// kernel: sketchy_decoder_train.2
$region0: #{sketchy_decoder_train.2}
  #allocation0 [shape = 'u32[]', space=smem, size = 0x4, offset = 0x4, fixed_abs, tag = 'smem constant byte address 0x4 - core index']
  #allocation1 [shape = 'u32[144,128]{1,0:T(1,128)}', space=vmem, size = 0x12000, scoped, tag = 'internal scratch']
  %s0 = inlined_call_operand.vmem [shape: bf16[16,128], index: 0, kind: input, shape index: {}]
  %s1 = inlined_call_operand.vmem [shape: bf16[16,16,128], index: 1, kind: input, shape index: {}]
  %s2 = inlined_call_operand.vmem [shape: f32[16,16], index: 2, kind: input, shape index: {}]
  %s3 = inlined_call_operand.vmem [shape: bf16[16,8,128], index: 3, kind: input, shape index: {}]
  %s4 = inlined_call_operand.vmem [shape: f32[16,8], index: 4, kind: input, shape index: {}]
  %s5 = inlined_call_operand.vmem [shape: bf16[128,128], index: 5, kind: input, shape index: {}]
  %s6 = inlined_call_operand.vmem [shape: f32[1,128], index: 6, kind: input, shape index: {}]
  %s7 = inlined_call_operand.vmem [shape: bf16[128,128], index: 7, kind: input, shape index: {}]
  %s8 = inlined_call_operand.vmem [shape: bf16[128,128], index: 8, kind: input, shape index: {}]
  %s9 = inlined_call_operand.vmem [shape: bf16[128,128], index: 9, kind: input, shape index: {}]
  %s10 = inlined_call_operand.vmem [shape: f32[1,128], index: 10, kind: input, shape index: {}]
  %s11 = inlined_call_operand.vmem [shape: bf16[16,128], index: 11, kind: output, shape index: {}]
  %s12 = sld [smem:[#allocation0]]
  $region77: #{sketchy_decoder_train.2} parent=0
    _
  %s14 = ssub.s32 1, %s12
  %s15 = scalar_select 0, %s14, %s12
  loop: start=0, step=1, limit=4
  $region2: #{sketchy_decoder_train.2} parent=0 // loop_pre_header
    _
  $region3: #{sketchy_decoder_train.2} parent=0 // loop_header
    %s17 = sphi 0, %s21
    %p18 = scmp.ge.s32.totalorder %s17, 4
    %s27 = sphi 0, %s29
    %s30 = sphi 0, %s27
    %s31 = sphi 0, %s30
    %s47 = sphi 0, %s31
    %s53 = sphi 0, %s55
    %s56 = sphi 0, %s53
    %s57 = sphi 0, %s56
    %s73 = sphi 0, %s57
    %s79 = sphi 0, %s81
    %s82 = sphi 0, %s79
    %s83 = sphi 0, %s82
    %s99 = sphi 0, %s83
    %s105 = sphi 0, %s107
    %s108 = sphi 0, %s105
    %s109 = sphi 0, %s108
    %s125 = sphi 0, %s109
    %s131 = sphi 0, %s133
    %s134 = sphi 0, %s131
    %s135 = sphi 0, %s134
    %s151 = sphi 0, %s135
    %s155 = sphi 0, %s155
    %s157 = sphi 0, %s155
    %s158 = sphi 0, %s157
    %s172 = sphi 0, %s158
    %s176 = sphi 0, %s176
    %s178 = sphi 0, %s176
    %s179 = sphi 0, %s178
    %s193 = sphi 0, %s179
    %s197 = sphi 0, %s197
    %s199 = sphi 0, %s197
    %s200 = sphi 0, %s199
    %s214 = sphi 0, %s200
    %s218 = sphi 0, %s218
    %s220 = sphi 0, %s218
    %s221 = sphi 0, %s220
    %s235 = sphi 0, %s221
    %s239 = sphi 0, %s239
    %s241 = sphi 0, %s239
    %s242 = sphi 0, %s241
    %s256 = sphi 0, %s242
    %s260 = sphi 0, %s260
    %s262 = sphi 0, %s260
    %s263 = sphi 0, %s262
    %s277 = sphi 0, %s263
    %s283 = sphi 0, %s285
    %s286 = sphi 0, %s283
    %s287 = sphi 0, %s286
    %s303 = sphi 0, %s287
  $region4: #{sketchy_decoder_train.2} parent=0 // loop_header_branch
    %20 = sbr.rel (%p18) target = $region8
  $region5: #{sketchy_decoder_train.2} parent=0 // loop_body
    %s22 = ssub.s32 %s17, 1
    %s23 = ssub.s32 %s17, 2
    %s24 = sadd.s32 %s17, 1
    %s25 = ssub.s32 %s17, %s24
    %p26 = scmp.eq.s32.totalorder %s25, 0
    %s28 = sadd.s32 %s27, 1
    %s29 = scalar_select %p26, %s27, %s28
    %p32 = pneg %p26
    %p33 = scmp.eq.s32.totalorder %s17, 1
    %p34 = por %p32, %p33
    %p35 = scmp.ne.s32.totalorder %s27, %s30
    %p36 = scmp.eq.s32.totalorder %s17, 0
    %p37 = por %p35, %p36
    %p38 = scmp.ne.s32.totalorder %s27, %s30
    %p39 = scmp.eq.s32.totalorder %s22, 1
    %p40 = por %p38, %p39
    %p41 = scmp.ne.s32.totalorder %s30, %s31
    %p42 = scmp.eq.s32.totalorder %s22, 0
    %p43 = por %p41, %p42
    %p44 = scmp.ne.s32.totalorder %s30, %s31
    %p45 = scmp.eq.s32.totalorder %s23, 1
    %p46 = por %p44, %p45
    %p48 = scmp.ne.s32.totalorder %s31, %s47
    %p49 = scmp.eq.s32.totalorder %s23, 0
    %p50 = por %p48, %p49
    %s51 = ssub.s32 %s17, %s24
    %p52 = scmp.eq.s32.totalorder %s51, 0
    %s54 = sadd.s32 %s53, 1
    %s55 = scalar_select %p52, %s53, %s54
    %p58 = pneg %p52
    %p59 = scmp.eq.s32.totalorder %s17, 1
    %p60 = por %p58, %p59
    %p61 = scmp.ne.s32.totalorder %s53, %s56
    %p62 = scmp.eq.s32.totalorder %s17, 0
    %p63 = por %p61, %p62
    %p64 = scmp.ne.s32.totalorder %s53, %s56
    %p65 = scmp.eq.s32.totalorder %s22, 1
    %p66 = por %p64, %p65
    %p67 = scmp.ne.s32.totalorder %s56, %s57
    %p68 = scmp.eq.s32.totalorder %s22, 0
    %p69 = por %p67, %p68
    %p70 = scmp.ne.s32.totalorder %s56, %s57
    %p71 = scmp.eq.s32.totalorder %s23, 1
    %p72 = por %p70, %p71
    %p74 = scmp.ne.s32.totalorder %s57, %s73
    %p75 = scmp.eq.s32.totalorder %s23, 0
    %p76 = por %p74, %p75
    %s77 = ssub.s32 %s17, %s24
    %p78 = scmp.eq.s32.totalorder %s77, 0
    %s80 = sadd.s32 %s79, 1
    %s81 = scalar_select %p78, %s79, %s80
    %p84 = pneg %p78
    %p85 = scmp.eq.s32.totalorder %s17, 1
    %p86 = por %p84, %p85
    %p87 = scmp.ne.s32.totalorder %s79, %s82
    %p88 = scmp.eq.s32.totalorder %s17, 0
    %p89 = por %p87, %p88
    %p90 = scmp.ne.s32.totalorder %s79, %s82
    %p91 = scmp.eq.s32.totalorder %s22, 1
    %p92 = por %p90, %p91
    %p93 = scmp.ne.s32.totalorder %s82, %s83
    %p94 = scmp.eq.s32.totalorder %s22, 0
    %p95 = por %p93, %p94
    %p96 = scmp.ne.s32.totalorder %s82, %s83
    %p97 = scmp.eq.s32.totalorder %s23, 1
    %p98 = por %p96, %p97
    %p100 = scmp.ne.s32.totalorder %s83, %s99
    %p101 = scmp.eq.s32.totalorder %s23, 0
    %p102 = por %p100, %p101
    %s103 = ssub.s32 %s17, %s24
    %p104 = scmp.eq.s32.totalorder %s103, 0
    %s106 = sadd.s32 %s105, 1
    %s107 = scalar_select %p104, %s105, %s106
    %p110 = pneg %p104
    %p111 = scmp.eq.s32.totalorder %s17, 1
    %p112 = por %p110, %p111
    %p113 = scmp.ne.s32.totalorder %s105, %s108
    %p114 = scmp.eq.s32.totalorder %s17, 0
    %p115 = por %p113, %p114
    %p116 = scmp.ne.s32.totalorder %s105, %s108
    %p117 = scmp.eq.s32.totalorder %s22, 1
    %p118 = por %p116, %p117
    %p119 = scmp.ne.s32.totalorder %s108, %s109
    %p120 = scmp.eq.s32.totalorder %s22, 0
    %p121 = por %p119, %p120
    %p122 = scmp.ne.s32.totalorder %s108, %s109
    %p123 = scmp.eq.s32.totalorder %s23, 1
    %p124 = por %p122, %p123
    %p126 = scmp.ne.s32.totalorder %s109, %s125
    %p127 = scmp.eq.s32.totalorder %s23, 0
    %p128 = por %p126, %p127
    %s129 = ssub.s32 %s17, %s24
    %p130 = scmp.eq.s32.totalorder %s129, 0
    %s132 = sadd.s32 %s131, 1
    %s133 = scalar_select %p130, %s131, %s132
    %p136 = pneg %p130
    %p137 = scmp.eq.s32.totalorder %s17, 1
    %p138 = por %p136, %p137
    %p139 = scmp.ne.s32.totalorder %s131, %s134
    %p140 = scmp.eq.s32.totalorder %s17, 0
    %p141 = por %p139, %p140
    %p142 = scmp.ne.s32.totalorder %s131, %s134
    %p143 = scmp.eq.s32.totalorder %s22, 1
    %p144 = por %p142, %p143
    %p145 = scmp.ne.s32.totalorder %s134, %s135
    %p146 = scmp.eq.s32.totalorder %s22, 0
    %p147 = por %p145, %p146
    %p148 = scmp.ne.s32.totalorder %s134, %s135
    %p149 = scmp.eq.s32.totalorder %s23, 1
    %p150 = por %p148, %p149
    %p152 = scmp.ne.s32.totalorder %s135, %s151
    %p153 = scmp.eq.s32.totalorder %s23, 0
    %p154 = por %p152, %p153
    %s156 = sadd.s32 %s155, 1
    %p159 = scmp.eq.s32.totalorder %s17, 1
    %p160 = scmp.ne.s32.totalorder %s155, %s157
    %p161 = scmp.eq.s32.totalorder %s17, 0
    %p162 = por %p160, %p161
    %p163 = scmp.ne.s32.totalorder %s155, %s157
    %p164 = scmp.eq.s32.totalorder %s22, 1
    %p165 = por %p163, %p164
    %p166 = scmp.ne.s32.totalorder %s157, %s158
    %p167 = scmp.eq.s32.totalorder %s22, 0
    %p168 = por %p166, %p167
    %p169 = scmp.ne.s32.totalorder %s157, %s158
    %p170 = scmp.eq.s32.totalorder %s23, 1
    %p171 = por %p169, %p170
    %p173 = scmp.ne.s32.totalorder %s158, %s172
    %p174 = scmp.eq.s32.totalorder %s23, 0
    %p175 = por %p173, %p174
    %s177 = sadd.s32 %s176, 1
    %p180 = scmp.eq.s32.totalorder %s17, 1
    %p181 = scmp.ne.s32.totalorder %s176, %s178
    %p182 = scmp.eq.s32.totalorder %s17, 0
    %p183 = por %p181, %p182
    %p184 = scmp.ne.s32.totalorder %s176, %s178
    %p185 = scmp.eq.s32.totalorder %s22, 1
    %p186 = por %p184, %p185
    %p187 = scmp.ne.s32.totalorder %s178, %s179
    %p188 = scmp.eq.s32.totalorder %s22, 0
    %p189 = por %p187, %p188
    %p190 = scmp.ne.s32.totalorder %s178, %s179
    %p191 = scmp.eq.s32.totalorder %s23, 1
    %p192 = por %p190, %p191
    %p194 = scmp.ne.s32.totalorder %s179, %s193
    %p195 = scmp.eq.s32.totalorder %s23, 0
    %p196 = por %p194, %p195
    %s198 = sadd.s32 %s197, 1
    %p201 = scmp.eq.s32.totalorder %s17, 1
    %p202 = scmp.ne.s32.totalorder %s197, %s199
    %p203 = scmp.eq.s32.totalorder %s17, 0
    %p204 = por %p202, %p203
    %p205 = scmp.ne.s32.totalorder %s197, %s199
    %p206 = scmp.eq.s32.totalorder %s22, 1
    %p207 = por %p205, %p206
    %p208 = scmp.ne.s32.totalorder %s199, %s200
    %p209 = scmp.eq.s32.totalorder %s22, 0
    %p210 = por %p208, %p209
    %p211 = scmp.ne.s32.totalorder %s199, %s200
    %p212 = scmp.eq.s32.totalorder %s23, 1
    %p213 = por %p211, %p212
    %p215 = scmp.ne.s32.totalorder %s200, %s214
    %p216 = scmp.eq.s32.totalorder %s23, 0
    %p217 = por %p215, %p216
    %s219 = sadd.s32 %s218, 1
    %p222 = scmp.eq.s32.totalorder %s17, 1
    %p223 = scmp.ne.s32.totalorder %s218, %s220
    %p224 = scmp.eq.s32.totalorder %s17, 0
    %p225 = por %p223, %p224
    %p226 = scmp.ne.s32.totalorder %s218, %s220
    %p227 = scmp.eq.s32.totalorder %s22, 1
    %p228 = por %p226, %p227
    %p229 = scmp.ne.s32.totalorder %s220, %s221
    %p230 = scmp.eq.s32.totalorder %s22, 0
    %p231 = por %p229, %p230
    %p232 = scmp.ne.s32.totalorder %s220, %s221
    %p233 = scmp.eq.s32.totalorder %s23, 1
    %p234 = por %p232, %p233
    %p236 = scmp.ne.s32.totalorder %s221, %s235
    %p237 = scmp.eq.s32.totalorder %s23, 0
    %p238 = por %p236, %p237
    %s240 = sadd.s32 %s239, 1
    %p243 = scmp.eq.s32.totalorder %s17, 1
    %p244 = scmp.ne.s32.totalorder %s239, %s241
    %p245 = scmp.eq.s32.totalorder %s17, 0
    %p246 = por %p244, %p245
    %p247 = scmp.ne.s32.totalorder %s239, %s241
    %p248 = scmp.eq.s32.totalorder %s22, 1
    %p249 = por %p247, %p248
    %p250 = scmp.ne.s32.totalorder %s241, %s242
    %p251 = scmp.eq.s32.totalorder %s22, 0
    %p252 = por %p250, %p251
    %p253 = scmp.ne.s32.totalorder %s241, %s242
    %p254 = scmp.eq.s32.totalorder %s23, 1
    %p255 = por %p253, %p254
    %p257 = scmp.ne.s32.totalorder %s242, %s256
    %p258 = scmp.eq.s32.totalorder %s23, 0
    %p259 = por %p257, %p258
    %s261 = sadd.s32 %s260, 1
    %p264 = scmp.eq.s32.totalorder %s17, 1
    %p265 = scmp.ne.s32.totalorder %s260, %s262
    %p266 = scmp.eq.s32.totalorder %s17, 0
    %p267 = por %p265, %p266
    %p268 = scmp.ne.s32.totalorder %s260, %s262
    %p269 = scmp.eq.s32.totalorder %s22, 1
    %p270 = por %p268, %p269
    %p271 = scmp.ne.s32.totalorder %s262, %s263
    %p272 = scmp.eq.s32.totalorder %s22, 0
    %p273 = por %p271, %p272
    %p274 = scmp.ne.s32.totalorder %s262, %s263
    %p275 = scmp.eq.s32.totalorder %s23, 1
    %p276 = por %p274, %p275
    %p278 = scmp.ne.s32.totalorder %s263, %s277
    %p279 = scmp.eq.s32.totalorder %s23, 0
    %p280 = por %p278, %p279
    %s281 = ssub.s32 %s17, %s24
    %p282 = scmp.eq.s32.totalorder %s281, 0
    %s284 = sadd.s32 %s283, 1
    %s285 = scalar_select %p282, %s283, %s284
    %p288 = pneg %p282
    %p289 = scmp.eq.s32.totalorder %s17, 1
    %p290 = por %p288, %p289
    %p291 = scmp.ne.s32.totalorder %s283, %s286
    %p292 = scmp.eq.s32.totalorder %s17, 0
    %p293 = por %p291, %p292
    %p294 = scmp.ne.s32.totalorder %s283, %s286
    %p295 = scmp.eq.s32.totalorder %s22, 1
    %p296 = por %p294, %p295
    %p297 = scmp.ne.s32.totalorder %s286, %s287
    %p298 = scmp.eq.s32.totalorder %s22, 0
    %p299 = por %p297, %p298
    %p300 = scmp.ne.s32.totalorder %s286, %s287
    %p301 = scmp.eq.s32.totalorder %s23, 1
    %p302 = por %p300, %p301
    %p304 = scmp.ne.s32.totalorder %s287, %s303
    %p305 = scmp.eq.s32.totalorder %s23, 0
    %p306 = por %p304, %p305
    %p307 = scmp.le.s32.totalorder 1, %s17
    %p308 = scmp.lt.s32.totalorder %s17, 3
    %p309 = pnand %p307, %p308
    %p310 = pneg %p309
    // Predicated region
    $region9: #{sketchy_decoder_train.2} parent=5 // pred_check
      _
    $region10: #{sketchy_decoder_train.2} parent=5 // pred_check_branch
      %312 = sbr.rel (%p309) target = $region12
    $region11: #{sketchy_decoder_train.2} parent=5 // pred_region
      %s313 = ssub.s32 %s17, 1
      // Predicated region
      $region13: #{sketchy_decoder_train.2} parent=11 // pred_check
        %p314 = pneg %p168
      $region14: #{sketchy_decoder_train.2} parent=11 // pred_check_branch
        %316 = sbr.rel (%p314) target = $region16
      $region15: #{sketchy_decoder_train.2} parent=11 // pred_region
        _
      $region16: #{sketchy_decoder_train.2} parent=11 // pred_fallthru
        _
      // Predicated region
      $region17: #{sketchy_decoder_train.2} parent=11 // pred_check
        %p317 = pneg %p189
      $region18: #{sketchy_decoder_train.2} parent=11 // pred_check_branch
        %319 = sbr.rel (%p317) target = $region20
      $region19: #{sketchy_decoder_train.2} parent=11 // pred_region
        _
      $region20: #{sketchy_decoder_train.2} parent=11 // pred_fallthru
        _
      // Predicated region
      $region21: #{sketchy_decoder_train.2} parent=11 // pred_check
        %p320 = pneg %p210
      $region22: #{sketchy_decoder_train.2} parent=11 // pred_check_branch
        %322 = sbr.rel (%p320) target = $region24
      $region23: #{sketchy_decoder_train.2} parent=11 // pred_region
        _
      $region24: #{sketchy_decoder_train.2} parent=11 // pred_fallthru
        _
      // Predicated region
      $region25: #{sketchy_decoder_train.2} parent=11 // pred_check
        %p323 = pneg %p231
      $region26: #{sketchy_decoder_train.2} parent=11 // pred_check_branch
        %325 = sbr.rel (%p323) target = $region28
      $region27: #{sketchy_decoder_train.2} parent=11 // pred_region
        _
      $region28: #{sketchy_decoder_train.2} parent=11 // pred_fallthru
        _
      // Predicated region
      $region29: #{sketchy_decoder_train.2} parent=11 // pred_check
        %p326 = pneg %p252
      $region30: #{sketchy_decoder_train.2} parent=11 // pred_check_branch
        %328 = sbr.rel (%p326) target = $region32
      $region31: #{sketchy_decoder_train.2} parent=11 // pred_region
        _
      $region32: #{sketchy_decoder_train.2} parent=11 // pred_fallthru
        _
      // Predicated region
      $region33: #{sketchy_decoder_train.2} parent=11 // pred_check
        %p329 = pneg %p273
      $region34: #{sketchy_decoder_train.2} parent=11 // pred_check_branch
        %331 = sbr.rel (%p329) target = $region36
      $region35: #{sketchy_decoder_train.2} parent=11 // pred_region
        _
      $region36: #{sketchy_decoder_train.2} parent=11 // pred_fallthru
        _
    $region12: #{sketchy_decoder_train.2} parent=5 // pred_fallthru
      _
    %p332 = scmp.lt.s32.totalorder %s17, 2
    // Predicated region
    $region37: #{sketchy_decoder_train.2} parent=5 // pred_check
      %p333 = pneg %p332
    $region38: #{sketchy_decoder_train.2} parent=5 // pred_check_branch
      %335 = sbr.rel (%p333) target = $region40
    $region39: #{sketchy_decoder_train.2} parent=5 // pred_region
      // Predicated region
      $region41: #{sketchy_decoder_train.2} parent=39 // pred_check
        %p336 = pneg %p37
      $region42: #{sketchy_decoder_train.2} parent=39 // pred_check_branch
        %338 = sbr.rel (%p336) target = $region44
      $region43: #{sketchy_decoder_train.2} parent=39 // pred_region
        %p339 = scmp.lt.s32.totalorder %s17, 1
        %s340 = scalar_select %p339, %s17, 1
        %s341 = smul.addr %s340, 4
        %s342 = scalar_lea.vmem %s0, %s341
      $region44: #{sketchy_decoder_train.2} parent=39 // pred_fallthru
        _
      // Predicated region
      $region45: #{sketchy_decoder_train.2} parent=39 // pred_check
        %p343 = pneg %p63
      $region46: #{sketchy_decoder_train.2} parent=39 // pred_check_branch
        %345 = sbr.rel (%p343) target = $region48
      $region47: #{sketchy_decoder_train.2} parent=39 // pred_region
        %s346 = smul.u32 8, %s17
        %p347 = scmp.lt.s32.totalorder %s346, 15
        %s348 = scalar_select %p347, %s346, 15
        %s349 = smul.addr %s348, 2
        %s350 = smul.addr %s349, 4
        %s351 = scalar_lea.vmem %s1, %s350
        %s352 = smul.u32 8, %s17
      $region48: #{sketchy_decoder_train.2} parent=39 // pred_fallthru
        _
      // Predicated region
      $region49: #{sketchy_decoder_train.2} parent=39 // pred_check
        %p353 = pneg %p89
      $region50: #{sketchy_decoder_train.2} parent=39 // pred_check_branch
        %355 = sbr.rel (%p353) target = $region52
      $region51: #{sketchy_decoder_train.2} parent=39 // pred_region
        %p356 = scmp.lt.s32.totalorder %s17, 1
        %s357 = scalar_select %p356, %s17, 1
        %s358 = smul.addr %s357, 8
        %s359 = scalar_lea.vmem %s2, %s358
      $region52: #{sketchy_decoder_train.2} parent=39 // pred_fallthru
        _
      // Predicated region
      $region53: #{sketchy_decoder_train.2} parent=39 // pred_check
        %p360 = pneg %p115
      $region54: #{sketchy_decoder_train.2} parent=39 // pred_check_branch
        %362 = sbr.rel (%p360) target = $region56
      $region55: #{sketchy_decoder_train.2} parent=39 // pred_region
        %s363 = smul.u32 8, %s17
        %p364 = scmp.lt.s32.totalorder %s363, 15
        %s365 = scalar_select %p364, %s363, 15
        %s366 = smul.addr %s365, 4
        %s367 = scalar_lea.vmem %s3, %s366
        %s368 = smul.u32 8, %s17
      $region56: #{sketchy_decoder_train.2} parent=39 // pred_fallthru
        _
      // Predicated region
      $region57: #{sketchy_decoder_train.2} parent=39 // pred_check
        %p369 = pneg %p141
      $region58: #{sketchy_decoder_train.2} parent=39 // pred_check_branch
        %371 = sbr.rel (%p369) target = $region60
      $region59: #{sketchy_decoder_train.2} parent=39 // pred_region
        %p372 = scmp.lt.s32.totalorder %s17, 1
        %s373 = scalar_select %p372, %s17, 1
        %s374 = smul.addr %s373, 8
        %s375 = scalar_lea.vmem %s4, %s374
      $region60: #{sketchy_decoder_train.2} parent=39 // pred_fallthru
        _
    $region40: #{sketchy_decoder_train.2} parent=5 // pred_fallthru
      _
    %p376 = scmp.le.s32.totalorder 1, %s17
    %p377 = scmp.lt.s32.totalorder %s17, 3
    %p378 = pnand %p376, %p377
    %p379 = pneg %p378
    // Predicated region
    $region61: #{sketchy_decoder_train.2} parent=5 // pred_check
      _
    $region62: #{sketchy_decoder_train.2} parent=5 // pred_check_branch
      %381 = sbr.rel (%p378) target = $region64
    $region63: #{sketchy_decoder_train.2} parent=5 // pred_region
      %s382 = ssub.s32 %s17, 1
      %p383 = scmp.lt.s32.totalorder %s22, 1
      %s384 = scalar_select %p383, %s22, 1
      %s385 = smul.addr %s384, 4
      %s386 = scalar_lea.vmem %s0, %s385
      %p387 = pneg %p43
      %p388 = pneg %p40
      %s389 = smul.u32 8, %s22
      %p390 = scmp.lt.s32.totalorder %s389, 15
      %s391 = scalar_select %p390, %s389, 15
      %s392 = smul.addr %s391, 2
      %s393 = smul.addr %s392, 4
      %s394 = scalar_lea.vmem %s1, %s393
      %p395 = pneg %p69
      %p396 = pneg %p66
      %p397 = scmp.lt.s32.totalorder %s22, 1
      %s398 = scalar_select %p397, %s22, 1
      %s399 = smul.addr %s398, 8
      %s400 = scalar_lea.vmem %s2, %s399
      %p401 = pneg %p95
      %p402 = pneg %p92
      %s403 = smul.u32 8, %s22
      %p404 = scmp.lt.s32.totalorder %s403, 15
      %s405 = scalar_select %p404, %s403, 15
      %s406 = smul.addr %s405, 4
      %s407 = scalar_lea.vmem %s3, %s406
      %p408 = pneg %p121
      %p409 = pneg %p118
      %p410 = scmp.lt.s32.totalorder %s22, 1
      %s411 = scalar_select %p410, %s22, 1
      %s412 = smul.addr %s411, 8
      %s413 = scalar_lea.vmem %s4, %s412
      %p414 = pneg %p147
      %p415 = pneg %p144
      %p416 = pneg %p168
      %p417 = pneg %p165
      %p418 = pneg %p189
      %p419 = pneg %p186
      %p420 = pneg %p210
      %p421 = pneg %p207
      %p422 = pneg %p231
      %p423 = pneg %p228
      %p424 = pneg %p252
      %p425 = pneg %p249
      %p426 = pneg %p273
      %p427 = pneg %p270
      %p428 = pneg %p299
      %p429 = pneg %p296
      %p430 = scmp.lt.s32.totalorder %s22, 1
      %s431 = scalar_select %p430, %s22, 1
      %s432 = smul.addr %s431, 4
      %s433 = scalar_lea.vmem %s11, %s432
      %p434 = scmp.lt.s32.totalorder %s22, 1
      %s435 = scalar_select %p434, %s22, 1
      %s436 = smul.addr %s435, 4
      %s437 = scalar_lea.vmem %s0, %s436
      %s438 = smul.u32 8, %s22
      %p439 = scmp.lt.s32.totalorder %s438, 15
      %s440 = scalar_select %p439, %s438, 15
      %s441 = smul.addr %s440, 2
      %s442 = smul.addr %s441, 4
      %s443 = scalar_lea.vmem %s1, %s442
      %s444 = smul.u32 8, %s22
      %p445 = scmp.lt.s32.totalorder %s22, 1
      %s446 = scalar_select %p445, %s22, 1
      %s447 = smul.addr %s446, 8
      %s448 = scalar_lea.vmem %s2, %s447
      %s449 = smul.u32 8, %s22
      %p450 = scmp.lt.s32.totalorder %s449, 15
      %s451 = scalar_select %p450, %s449, 15
      %s452 = smul.addr %s451, 4
      %s453 = scalar_lea.vmem %s3, %s452
      %s454 = smul.u32 8, %s22
      %p455 = scmp.lt.s32.totalorder %s22, 1
      %s456 = scalar_select %p455, %s22, 1
      %s457 = smul.addr %s456, 8
      %s458 = scalar_lea.vmem %s4, %s457
      %p459 = scmp.lt.s32.totalorder %s22, 1
      %s460 = scalar_select %p459, %s22, 1
      %s461 = smul.addr %s460, 4
      %s462 = scalar_lea.vmem %s11, %s461
      %v464 = vld [vmem:[%s437] sm:$0xf]
      %v465 = vld [vmem:[%s448] sm:$0xff]
      %v466 = vld [vmem:[%s458] sm:$0xff]
      %v467 = vld [vmem:[%s443] sm:$0xf]
      %v468 = vld [vmem:[%s443 + $0x4] sm:$0xf]
      %v469 = vld [vmem:[%s443 + $0x8] sm:$0xf]
      %v470 = vld [vmem:[%s443 + $0xc] sm:$0xf]
      %v471 = vld [vmem:[%s443 + $0x10] sm:$0xf]
      %v472 = vld [vmem:[%s443 + $0x14] sm:$0xf]
      %v473 = vld [vmem:[%s443 + $0x18] sm:$0xf]
      %v474 = vld [vmem:[%s443 + $0x1c] sm:$0xf]
      %v475 = vld [vmem:[%s443 + $0x20] sm:$0xf]
      %v476 = vld [vmem:[%s443 + $0x24] sm:$0xf]
      %v477 = vld [vmem:[%s443 + $0x28] sm:$0xf]
      %v478 = vld [vmem:[%s443 + $0x2c] sm:$0xf]
      %v479 = vld [vmem:[%s443 + $0x30] sm:$0xf]
      %v480 = vld [vmem:[%s443 + $0x34] sm:$0xf]
      %v481 = vld [vmem:[%s443 + $0x38] sm:$0xf]
      %v482 = vld [vmem:[%s443 + $0x3c] sm:$0xf]
      %v483 = vld [vmem:[%s5] sm:$0xf]
      %v484 = vld [vmem:[%s5 + $0x4] sm:$0xf]
      %v485 = vld [vmem:[%s5 + $0x8] sm:$0xf]
      %v486 = vld [vmem:[%s5 + $0xc] sm:$0xf]
      %v487 = vld [vmem:[%s5 + $0x10] sm:$0xf]
      %v488 = vld [vmem:[%s5 + $0x14] sm:$0xf]
      %v489 = vld [vmem:[%s5 + $0x18] sm:$0xf]
      %v490 = vld [vmem:[%s5 + $0x1c] sm:$0xf]
      %v491 = vld [vmem:[%s5 + $0x20] sm:$0xf]
      %v492 = vld [vmem:[%s5 + $0x24] sm:$0xf]
      %v493 = vld [vmem:[%s5 + $0x28] sm:$0xf]
      %v494 = vld [vmem:[%s5 + $0x2c] sm:$0xf]
      %v495 = vld [vmem:[%s5 + $0x30] sm:$0xf]
      %v496 = vld [vmem:[%s5 + $0x34] sm:$0xf]
      %v497 = vld [vmem:[%s5 + $0x38] sm:$0xf]
      %v498 = vld [vmem:[%s5 + $0x3c] sm:$0xf]
      %v499 = vld [vmem:[%s6] sm:$0x1]
      %v501 = vlaneseq
      %v502 = vshrl.u32 %v501, 7
      %v503 = vsub.s32 0, %v502
      %v504 = vrot.slane %v499, %v503
      %v522 = vunpack.c.l.b16 %v467
      %v523 = vunpack.c.l.b16 %v468
      %v524 = vunpack.c.l.b16 %v469
      %v525 = vunpack.c.l.b16 %v470
      %v526 = vunpack.c.l.b16 %v471
      %v527 = vunpack.c.l.b16 %v472
      %v528 = vunpack.c.l.b16 %v473
      %v529 = vunpack.c.l.b16 %v474
      %v530 = vunpack.c.l.b16 %v475
      %v531 = vunpack.c.l.b16 %v476
      %v532 = vunpack.c.l.b16 %v477
      %v533 = vunpack.c.l.b16 %v478
      %v534 = vunpack.c.l.b16 %v479
      %v535 = vunpack.c.l.b16 %v480
      %v536 = vunpack.c.l.b16 %v481
      %v537 = vunpack.c.l.b16 %v482
      %v538 = vpack.c.b16 %v523, %v522
      %v539 = vpack.c.b16 %v525, %v524
      %v540 = vpack.c.b16 %v527, %v526
      %v541 = vpack.c.b16 %v529, %v528
      %v542 = vpack.c.b16 %v531, %v530
      %v543 = vpack.c.b16 %v533, %v532
      %v544 = vpack.c.b16 %v535, %v534
      %v545 = vpack.c.b16 %v537, %v536
      %v570 = vunpack.c.l.b16 %v483
      %v571 = vunpack.c.l.b16 %v484
      %v572 = vunpack.c.l.b16 %v485
      %v573 = vunpack.c.l.b16 %v486
      %v574 = vunpack.c.l.b16 %v487
      %v575 = vunpack.c.l.b16 %v488
      %v576 = vunpack.c.l.b16 %v489
      %v577 = vunpack.c.l.b16 %v490
      %v578 = vunpack.c.l.b16 %v491
      %v579 = vunpack.c.l.b16 %v492
      %v580 = vunpack.c.l.b16 %v493
      %v581 = vunpack.c.l.b16 %v494
      %v582 = vunpack.c.l.b16 %v495
      %v583 = vunpack.c.l.b16 %v496
      %v584 = vunpack.c.l.b16 %v497
      %v585 = vunpack.c.l.b16 %v498
      %v586 = vpack.c.b16 %v571, %v570
      %v587 = vpack.c.b16 %v573, %v572
      %v588 = vpack.c.b16 %v575, %v574
      %v589 = vpack.c.b16 %v577, %v576
      %v590 = vpack.c.b16 %v579, %v578
      %v591 = vpack.c.b16 %v581, %v580
      %v592 = vpack.c.b16 %v583, %v582
      %v593 = vpack.c.b16 %v585, %v584
      %602 = vmatprep.subr.bf16.mxu0 0
      %603 = vmatpush1.bf16.msra.mxu0 %v586
      %604 = vmatprep.subr.bf16.mxu0 0
      %605 = vmatpush1.bf16.msra.mxu0 %v587
      %606 = vmatprep.subr.bf16.mxu0 0
      %607 = vmatpush1.bf16.msra.mxu0 %v588
      %608 = vmatprep.subr.bf16.mxu0 0
      %609 = vmatpush1.bf16.msra.mxu0 %v589
      %610 = vmatprep.subr.bf16.mxu0 0
      %611 = vmatpush1.bf16.msra.mxu0 %v590
      %612 = vmatprep.subr.bf16.mxu0 0
      %613 = vmatpush1.bf16.msra.mxu0 %v591
      %614 = vmatprep.subr.bf16.mxu0 0
      %615 = vmatpush1.bf16.msra.mxu0 %v592
      %616 = vmatprep.subr.bf16.mxu0 0
      %617 = vmatpush1.bf16.msra.mxu0 %v593
      %618 = vmatprep.subr.bf16.mxu0 0
      %619 = vmatpush1.bf16.msra.mxu0 0
      %620 = vmatprep.subr.bf16.mxu0 0
      %621 = vmatpush1.bf16.msra.mxu0 0
      %622 = vmatprep.subr.bf16.mxu0 0
      %623 = vmatpush1.bf16.msra.mxu0 0
      %624 = vmatprep.subr.bf16.mxu0 0
      %625 = vmatpush1.bf16.msra.mxu0 0
      %626 = vmatprep.subr.bf16.mxu0 0
      %627 = vmatpush1.bf16.msra.mxu0 0
      %628 = vmatprep.subr.bf16.mxu0 0
      %629 = vmatpush1.bf16.msra.mxu0 0
      %630 = vmatprep.subr.bf16.mxu0 0
      %631 = vmatpush1.bf16.msra.mxu0 0
      %632 = vmatprep.subr.bf16.mxu0 0
      %633 = vmatpush1.bf16.msra.mxu0 0
      %634 = vmatprep.mubr.bf16.mxu0 0
      %635 = vmatmul.mubr.bf16.gmra.mrb[0].mxu0 %v538
      %v636 = vpop.f32.mrb[0].mxu0
      %v637 = vadd.f32 %v504, %v636
      %v638 = vpop.f32.mrb[0].mxu0
      %v639 = vpop.f32.mrb[0].mxu0
      %v640 = vadd.f32 %v504, %v639
      %v641 = vpop.f32.mrb[0].mxu0
      %642 = vmatprep.mubr.bf16.mxu0 0
      %643 = vmatmul.mubr.bf16.gmra.mrb[0].mxu0 %v539
      %v644 = vpop.f32.mrb[0].mxu0
      %v645 = vadd.f32 %v504, %v644
      %v646 = vpop.f32.mrb[0].mxu0
      %v647 = vpop.f32.mrb[0].mxu0
      %v648 = vadd.f32 %v504, %v647
      %v649 = vpop.f32.mrb[0].mxu0
      %650 = vmatprep.mubr.bf16.mxu0 0
      %651 = vmatmul.mubr.bf16.gmra.mrb[0].mxu0 %v540
      %v652 = vpop.f32.mrb[0].mxu0
      %v653 = vadd.f32 %v504, %v652
      %v654 = vpop.f32.mrb[0].mxu0
      %v655 = vpop.f32.mrb[0].mxu0
      %v656 = vadd.f32 %v504, %v655
      %v657 = vpop.f32.mrb[0].mxu0
      %658 = vmatprep.mubr.bf16.mxu0 0
      %659 = vmatmul.mubr.bf16.gmra.mrb[0].mxu0 %v541
      %v660 = vpop.f32.mrb[0].mxu0
      %v661 = vadd.f32 %v504, %v660
      %v662 = vpop.f32.mrb[0].mxu0
      %v663 = vpop.f32.mrb[0].mxu0
      %v664 = vadd.f32 %v504, %v663
      %v665 = vpop.f32.mrb[0].mxu0
      %666 = vmatprep.mubr.bf16.mxu0 0
      %667 = vmatmul.mubr.bf16.gmra.mrb[0].mxu0 %v542
      %v668 = vpop.f32.mrb[0].mxu0
      %v669 = vadd.f32 %v504, %v668
      %v670 = vpop.f32.mrb[0].mxu0
      %v671 = vpop.f32.mrb[0].mxu0
      %v672 = vadd.f32 %v504, %v671
      %v673 = vpop.f32.mrb[0].mxu0
      %674 = vmatprep.mubr.bf16.mxu0 0
      %675 = vmatmul.mubr.bf16.gmra.mrb[0].mxu0 %v543
      %v676 = vpop.f32.mrb[0].mxu0
      %v677 = vadd.f32 %v504, %v676
      %v678 = vpop.f32.mrb[0].mxu0
      %v679 = vpop.f32.mrb[0].mxu0
      %v680 = vadd.f32 %v504, %v679
      %v681 = vpop.f32.mrb[0].mxu0
      %682 = vmatprep.mubr.bf16.mxu0 0
      %683 = vmatmul.mubr.bf16.gmra.mrb[0].mxu0 %v544
      %v684 = vpop.f32.mrb[0].mxu0
      %v685 = vadd.f32 %v504, %v684
      %v686 = vpop.f32.mrb[0].mxu0
      %v687 = vpop.f32.mrb[0].mxu0
      %v688 = vadd.f32 %v504, %v687
      %v689 = vpop.f32.mrb[0].mxu0
      %690 = vmatprep.mubr.bf16.mxu0 0
      %691 = vmatmul.mubr.bf16.gmra.mrb[0].mxu0 %v545
      %v692 = vpop.f32.mrb[0].mxu0
      %v693 = vadd.f32 %v504, %v692
      %v694 = vpop.f32.mrb[0].mxu0
      %v695 = vpop.f32.mrb[0].mxu0
      %v696 = vadd.f32 %v504, %v695
      %v697 = vpop.f32.mrb[0].mxu0
      %698 = vdwg.mxu0
      %v699 = vtanh.pop %v637
      %v700 = vtanh.pop %v640
      %v701 = vtanh.pop %v645
      %v702 = vtanh.pop %v648
      %v703 = vtanh.pop %v653
      %v704 = vtanh.pop %v656
      %v705 = vtanh.pop %v661
      %v706 = vtanh.pop %v664
      %v707 = vtanh.pop %v669
      %v708 = vtanh.pop %v672
      %v709 = vtanh.pop %v677
      %v710 = vtanh.pop %v680
      %v711 = vtanh.pop %v685
      %v712 = vtanh.pop %v688
      %v713 = vtanh.pop %v693
      %v714 = vtanh.pop %v696
      %v715 = vpack.c.bf16 %v700, %v699
      %v716 = vpack.c.bf16 %v702, %v701
      %v717 = vpack.c.bf16 %v704, %v703
      %v718 = vpack.c.bf16 %v706, %v705
      %v719 = vpack.c.bf16 %v708, %v707
      %v720 = vpack.c.bf16 %v710, %v709
      %v721 = vpack.c.bf16 %v712, %v711
      %v722 = vpack.c.bf16 %v714, %v713
      %v725 = vunpack.c.l.s4 1966171168
      %v726 = vunpack.c.0.s8 %v725
      %v727 = vlaneseq
      %v728 = vshrl.u32 %v727, 7
      %v729 = vsub.s32 %v726, %v728
      %v730 = vrot.slane %v464, %v729
      %v731 = vcombine.high %v730, %v730
      %v733 = vunpack.c.l.s4 1966171168
      %v734 = vunpack.c.0.s8 %v733
      %v735 = vlaneseq
      %v736 = vshrl.u32 %v735, 7
      %v737 = vsub.s32 %v734, %v736
      %v738 = vrot.slane %v730, %v737
      %v740 = vunpack.c.l.s4 1966171168
      %v741 = vunpack.c.0.s8 %v740
      %v742 = vlaneseq
      %v743 = vshrl.u32 %v742, 7
      %v744 = vsub.s32 %v741, %v743
      %v745 = vrot.slane %v731, %v744
      %v746 = vcombine.high %v738, %v738
      %v747 = vcombine.high %v745, %v745
      %v748 = vunpack.i.l.s16 %v738
      %v749 = vunpack.i.h.s16 %v738
      %v750 = vunpack.i.l.s16 %v745
      %v751 = vunpack.i.h.s16 %v745
      %v752 = vunpack.i.l.s16 %v746
      %v753 = vunpack.i.h.s16 %v746
      %v754 = vunpack.i.l.s16 %v747
      %v755 = vunpack.i.h.s16 %v747
      %v756 = vpack.i.b16 %v748, %v748
      %v757 = vlaneseq
      %v758 = vshrl.u32 %v757, 7
      %v759 = vsub.s32 0, %v758
      %v760 = vrot.slane %v756, %v759
      %762 = vmatprep.subr.bf16.mxu0 0
      %763 = vmatpush1.bf16.xpose.msra.mxu0 %v715
      %764 = vmatprep.subr.bf16.mxu0 0
      %765 = vmatpush1.bf16.xpose.msra.mxu0 0
      %766 = vmatprep.subr.bf16.mxu0 0
      %767 = vmatpush1.bf16.xpose.msra.mxu0 0
      %768 = vmatprep.subr.bf16.mxu0 0
      %769 = vmatpush1.bf16.xpose.msra.mxu0 0
      %770 = vmatprep.subr.bf16.mxu0 0
      %771 = vmatpush1.bf16.xpose.msra.mxu0 0
      %772 = vmatprep.subr.bf16.mxu0 0
      %773 = vmatpush1.bf16.xpose.msra.mxu0 0
      %774 = vmatprep.subr.bf16.mxu0 0
      %775 = vmatpush1.bf16.xpose.msra.mxu0 0
      %776 = vmatprep.subr.bf16.mxu0 0
      %777 = vmatpush1.bf16.xpose.msra.mxu0 0
      %778 = vmatprep.subr.bf16.mxu0 0
      %779 = vmatpush1.bf16.xpose.msra.mxu0 0
      %780 = vmatprep.subr.bf16.mxu0 0
      %781 = vmatpush1.bf16.xpose.msra.mxu0 0
      %782 = vmatprep.subr.bf16.mxu0 0
      %783 = vmatpush1.bf16.xpose.msra.mxu0 0
      %784 = vmatprep.subr.bf16.mxu0 0
      %785 = vmatpush1.bf16.xpose.msra.mxu0 0
      %786 = vmatprep.subr.bf16.mxu0 0
      %787 = vmatpush1.bf16.xpose.msra.mxu0 0
      %788 = vmatprep.subr.bf16.mxu0 0
      %789 = vmatpush1.bf16.xpose.msra.mxu0 0
      %790 = vmatprep.subr.bf16.mxu0 0
      %791 = vmatpush1.bf16.xpose.msra.mxu0 0
      %792 = vmatprep.subr.bf16.mxu0 0
      %793 = vmatpush1.bf16.xpose.msra.mxu0 0
      %794 = vmatprep.mubr.bf16.mxu0 0
      %795 = vmatmul.mubr.bf16.gmra.mrb[0].mxu0 %v760
      %v796 = vpop.f32.mrb[0].mxu0
      %v797 = vadd.f32 0.0, %v796
      %v798 = vpop.f32.mrb[0].mxu0
      %v799 = vpop.f32.mrb[0].mxu0
      %v800 = vpop.f32.mrb[0].mxu0
      %801 = vdwg.mxu0
      %v802 = vpack.i.b16 %v749, %v749
      %v803 = vlaneseq
      %v804 = vshrl.u32 %v803, 7
      %v805 = vsub.s32 0, %v804
      %v806 = vrot.slane %v802, %v805
      %808 = vmatprep.subr.bf16.mxu0 0
      %809 = vmatpush1.bf16.xpose.msra.mxu0 %v716
      %810 = vmatprep.subr.bf16.mxu0 0
      %811 = vmatpush1.bf16.xpose.msra.mxu0 0
      %812 = vmatprep.subr.bf16.mxu0 0
      %813 = vmatpush1.bf16.xpose.msra.mxu0 0
      %814 = vmatprep.subr.bf16.mxu0 0
      %815 = vmatpush1.bf16.xpose.msra.mxu0 0
      %816 = vmatprep.subr.bf16.mxu0 0
      %817 = vmatpush1.bf16.xpose.msra.mxu0 0
      %818 = vmatprep.subr.bf16.mxu0 0
      %819 = vmatpush1.bf16.xpose.msra.mxu0 0
      %820 = vmatprep.subr.bf16.mxu0 0
      %821 = vmatpush1.bf16.xpose.msra.mxu0 0
      %822 = vmatprep.subr.bf16.mxu0 0
      %823 = vmatpush1.bf16.xpose.msra.mxu0 0
      %824 = vmatprep.subr.bf16.mxu0 0
      %825 = vmatpush1.bf16.xpose.msra.mxu0 0
      %826 = vmatprep.subr.bf16.mxu0 0
      %827 = vmatpush1.bf16.xpose.msra.mxu0 0
      %828 = vmatprep.subr.bf16.mxu0 0
      %829 = vmatpush1.bf16.xpose.msra.mxu0 0
      %830 = vmatprep.subr.bf16.mxu0 0
      %831 = vmatpush1.bf16.xpose.msra.mxu0 0
      %832 = vmatprep.subr.bf16.mxu0 0
      %833 = vmatpush1.bf16.xpose.msra.mxu0 0
      %834 = vmatprep.subr.bf16.mxu0 0
      %835 = vmatpush1.bf16.xpose.msra.mxu0 0
      %836 = vmatprep.subr.bf16.mxu0 0
      %837 = vmatpush1.bf16.xpose.msra.mxu0 0
      %838 = vmatprep.subr.bf16.mxu0 0
      %839 = vmatpush1.bf16.xpose.msra.mxu0 0
      %840 = vmatprep.mubr.bf16.mxu0 0
      %841 = vmatmul.mubr.bf16.gmra.mrb[0].mxu0 %v806
      %v842 = vpop.f32.mrb[0].mxu0
      %v843 = vadd.f32 0.0, %v842
      %v844 = vpop.f32.mrb[0].mxu0
      %v845 = vpop.f32.mrb[0].mxu0
      %v846 = vpop.f32.mrb[0].mxu0
      %847 = vdwg.mxu0
      %v848 = vpack.i.b16 %v750, %v750
      %v849 = vlaneseq
      %v850 = vshrl.u32 %v849, 7
      %v851 = vsub.s32 0, %v850
      %v852 = vrot.slane %v848, %v851
      %854 = vmatprep.subr.bf16.mxu0 0
      %855 = vmatpush1.bf16.xpose.msra.mxu0 %v717
      %856 = vmatprep.subr.bf16.mxu0 0
      %857 = vmatpush1.bf16.xpose.msra.mxu0 0
      %858 = vmatprep.subr.bf16.mxu0 0
      %859 = vmatpush1.bf16.xpose.msra.mxu0 0
      %860 = vmatprep.subr.bf16.mxu0 0
      %861 = vmatpush1.bf16.xpose.msra.mxu0 0
      %862 = vmatprep.subr.bf16.mxu0 0
      %863 = vmatpush1.bf16.xpose.msra.mxu0 0
      %864 = vmatprep.subr.bf16.mxu0 0
      %865 = vmatpush1.bf16.xpose.msra.mxu0 0
      %866 = vmatprep.subr.bf16.mxu0 0
      %867 = vmatpush1.bf16.xpose.msra.mxu0 0
      %868 = vmatprep.subr.bf16.mxu0 0
      %869 = vmatpush1.bf16.xpose.msra.mxu0 0
      %870 = vmatprep.subr.bf16.mxu0 0
      %871 = vmatpush1.bf16.xpose.msra.mxu0 0
      %872 = vmatprep.subr.bf16.mxu0 0
      %873 = vmatpush1.bf16.xpose.msra.mxu0 0
      %874 = vmatprep.subr.bf16.mxu0 0
      %875 = vmatpush1.bf16.xpose.msra.mxu0 0
      %876 = vmatprep.subr.bf16.mxu0 0
      %877 = vmatpush1.bf16.xpose.msra.mxu0 0
      %878 = vmatprep.subr.bf16.mxu0 0
      %879 = vmatpush1.bf16.xpose.msra.mxu0 0
      %880 = vmatprep.subr.bf16.mxu0 0
      %881 = vmatpush1.bf16.xpose.msra.mxu0 0
      %882 = vmatprep.subr.bf16.mxu0 0
      %883 = vmatpush1.bf16.xpose.msra.mxu0 0
      %884 = vmatprep.subr.bf16.mxu0 0
      %885 = vmatpush1.bf16.xpose.msra.mxu0 0
      %886 = vmatprep.mubr.bf16.mxu0 0
      %887 = vmatmul.mubr.bf16.gmra.mrb[0].mxu0 %v852
      %v888 = vpop.f32.mrb[0].mxu0
      %v889 = vadd.f32 0.0, %v888
      %v890 = vpop.f32.mrb[0].mxu0
      %v891 = vpop.f32.mrb[0].mxu0
      %v892 = vpop.f32.mrb[0].mxu0
      %893 = vdwg.mxu0
      %v894 = vpack.i.b16 %v751, %v751
      %v895 = vlaneseq
      %v896 = vshrl.u32 %v895, 7
      %v897 = vsub.s32 0, %v896
      %v898 = vrot.slane %v894, %v897
      %900 = vmatprep.subr.bf16.mxu0 0
      %901 = vmatpush1.bf16.xpose.msra.mxu0 %v718
      %902 = vmatprep.subr.bf16.mxu0 0
      %903 = vmatpush1.bf16.xpose.msra.mxu0 0
      %904 = vmatprep.subr.bf16.mxu0 0
      %905 = vmatpush1.bf16.xpose.msra.mxu0 0
      %906 = vmatprep.subr.bf16.mxu0 0
      %907 = vmatpush1.bf16.xpose.msra.mxu0 0
      %908 = vmatprep.subr.bf16.mxu0 0
      %909 = vmatpush1.bf16.xpose.msra.mxu0 0
      %910 = vmatprep.subr.bf16.mxu0 0
      %911 = vmatpush1.bf16.xpose.msra.mxu0 0
      %912 = vmatprep.subr.bf16.mxu0 0
      %913 = vmatpush1.bf16.xpose.msra.mxu0 0
      %914 = vmatprep.subr.bf16.mxu0 0
      %915 = vmatpush1.bf16.xpose.msra.mxu0 0
      %916 = vmatprep.subr.bf16.mxu0 0
      %917 = vmatpush1.bf16.xpose.msra.mxu0 0
      %918 = vmatprep.subr.bf16.mxu0 0
      %919 = vmatpush1.bf16.xpose.msra.mxu0 0
      %920 = vmatprep.subr.bf16.mxu0 0
      %921 = vmatpush1.bf16.xpose.msra.mxu0 0
      %922 = vmatprep.subr.bf16.mxu0 0
      %923 = vmatpush1.bf16.xpose.msra.mxu0 0
      %924 = vmatprep.subr.bf16.mxu0 0
      %925 = vmatpush1.bf16.xpose.msra.mxu0 0
      %926 = vmatprep.subr.bf16.mxu0 0
      %927 = vmatpush1.bf16.xpose.msra.mxu0 0
      %928 = vmatprep.subr.bf16.mxu0 0
      %929 = vmatpush1.bf16.xpose.msra.mxu0 0
      %930 = vmatprep.subr.bf16.mxu0 0
      %931 = vmatpush1.bf16.xpose.msra.mxu0 0
      %932 = vmatprep.mubr.bf16.mxu0 0
      %933 = vmatmul.mubr.bf16.gmra.mrb[0].mxu0 %v898
      %v934 = vpop.f32.mrb[0].mxu0
      %v935 = vadd.f32 0.0, %v934
      %v936 = vpop.f32.mrb[0].mxu0
      %v937 = vpop.f32.mrb[0].mxu0
      %v938 = vpop.f32.mrb[0].mxu0
      %939 = vdwg.mxu0
      %v940 = vpack.i.b16 %v752, %v752
      %v941 = vlaneseq
      %v942 = vshrl.u32 %v941, 7
      %v943 = vsub.s32 0, %v942
      %v944 = vrot.slane %v940, %v943
      %946 = vmatprep.subr.bf16.mxu0 0
      %947 = vmatpush1.bf16.xpose.msra.mxu0 %v719
      %948 = vmatprep.subr.bf16.mxu0 0
      %949 = vmatpush1.bf16.xpose.msra.mxu0 0
      %950 = vmatprep.subr.bf16.mxu0 0
      %951 = vmatpush1.bf16.xpose.msra.mxu0 0
      %952 = vmatprep.subr.bf16.mxu0 0
      %953 = vmatpush1.bf16.xpose.msra.mxu0 0
      %954 = vmatprep.subr.bf16.mxu0 0
      %955 = vmatpush1.bf16.xpose.msra.mxu0 0
      %956 = vmatprep.subr.bf16.mxu0 0
      %957 = vmatpush1.bf16.xpose.msra.mxu0 0
      %958 = vmatprep.subr.bf16.mxu0 0
      %959 = vmatpush1.bf16.xpose.msra.mxu0 0
      %960 = vmatprep.subr.bf16.mxu0 0
      %961 = vmatpush1.bf16.xpose.msra.mxu0 0
      %962 = vmatprep.subr.bf16.mxu0 0
      %963 = vmatpush1.bf16.xpose.msra.mxu0 0
      %964 = vmatprep.subr.bf16.mxu0 0
      %965 = vmatpush1.bf16.xpose.msra.mxu0 0
      %966 = vmatprep.subr.bf16.mxu0 0
      %967 = vmatpush1.bf16.xpose.msra.mxu0 0
      %968 = vmatprep.subr.bf16.mxu0 0
      %969 = vmatpush1.bf16.xpose.msra.mxu0 0
      %970 = vmatprep.subr.bf16.mxu0 0
      %971 = vmatpush1.bf16.xpose.msra.mxu0 0
      %972 = vmatprep.subr.bf16.mxu0 0
      %973 = vmatpush1.bf16.xpose.msra.mxu0 0
      %974 = vmatprep.subr.bf16.mxu0 0
      %975 = vmatpush1.bf16.xpose.msra.mxu0 0
      %976 = vmatprep.subr.bf16.mxu0 0
      %977 = vmatpush1.bf16.xpose.msra.mxu0 0
      %978 = vmatprep.mubr.bf16.mxu0 0
      %979 = vmatmul.mubr.bf16.gmra.mrb[0].mxu0 %v944
      %v980 = vpop.f32.mrb[0].mxu0
      %v981 = vadd.f32 0.0, %v980
      %v982 = vpop.f32.mrb[0].mxu0
      %v983 = vpop.f32.mrb[0].mxu0
      %v984 = vpop.f32.mrb[0].mxu0
      %985 = vdwg.mxu0
      %v986 = vpack.i.b16 %v753, %v753
      %v987 = vlaneseq
      %v988 = vshrl.u32 %v987, 7
      %v989 = vsub.s32 0, %v988
      %v990 = vrot.slane %v986, %v989
      %992 = vmatprep.subr.bf16.mxu0 0
      %993 = vmatpush1.bf16.xpose.msra.mxu0 %v720
      %994 = vmatprep.subr.bf16.mxu0 0
      %995 = vmatpush1.bf16.xpose.msra.mxu0 0
      %996 = vmatprep.subr.bf16.mxu0 0
      %997 = vmatpush1.bf16.xpose.msra.mxu0 0
      %998 = vmatprep.subr.bf16.mxu0 0
      %999 = vmatpush1.bf16.xpose.msra.mxu0 0
      %1000 = vmatprep.subr.bf16.mxu0 0
      %1001 = vmatpush1.bf16.xpose.msra.mxu0 0
      %1002 = vmatprep.subr.bf16.mxu0 0
      %1003 = vmatpush1.bf16.xpose.msra.mxu0 0
      %1004 = vmatprep.subr.bf16.mxu0 0
      %1005 = vmatpush1.bf16.xpose.msra.mxu0 0
      %1006 = vmatprep.subr.bf16.mxu0 0
      %1007 = vmatpush1.bf16.xpose.msra.mxu0 0
      %1008 = vmatprep.subr.bf16.mxu0 0
      %1009 = vmatpush1.bf16.xpose.msra.mxu0 0
      %1010 = vmatprep.subr.bf16.mxu0 0
      %1011 = vmatpush1.bf16.xpose.msra.mxu0 0
      %1012 = vmatprep.subr.bf16.mxu0 0
      %1013 = vmatpush1.bf16.xpose.msra.mxu0 0
      %1014 = vmatprep.subr.bf16.mxu0 0
      %1015 = vmatpush1.bf16.xpose.msra.mxu0 0
      %1016 = vmatprep.subr.bf16.mxu0 0
      %1017 = vmatpush1.bf16.xpose.msra.mxu0 0
      %1018 = vmatprep.subr.bf16.mxu0 0
      %1019 = vmatpush1.bf16.xpose.msra.mxu0 0
      %1020 = vmatprep.subr.bf16.mxu0 0
      %1021 = vmatpush1.bf16.xpose.msra.mxu0 0
      %1022 = vmatprep.subr.bf16.mxu0 0
      %1023 = vmatpush1.bf16.xpose.msra.mxu0 0
      %1024 = vmatprep.mubr.bf16.mxu0 0
      %1025 = vmatmul.mubr.bf16.gmra.mrb[0].mxu0 %v990
      %v1026 = vpop.f32.mrb[0].mxu0
      %v1027 = vadd.f32 0.0, %v1026
      %v1028 = vpop.f32.mrb[0].mxu0
      %v1029 = vpop.f32.mrb[0].mxu0
      %v1030 = vpop.f32.mrb[0].mxu0
      %1031 = vdwg.mxu0
      %v1032 = vpack.i.b16 %v754, %v754
      %v1033 = vlaneseq
      %v1034 = vshrl.u32 %v1033, 7
      %v1035 = vsub.s32 0, %v1034
      %v1036 = vrot.slane %v1032, %v1035
      %1038 = vmatprep.subr.bf16.mxu0 0
      %1039 = vmatpush1.bf16.xpose.msra.mxu0 %v721
      %1040 = vmatprep.subr.bf16.mxu0 0
      %1041 = vmatpush1.bf16.xpose.msra.mxu0 0
      %1042 = vmatprep.subr.bf16.mxu0 0
      %1043 = vmatpush1.bf16.xpose.msra.mxu0 0
      %1044 = vmatprep.subr.bf16.mxu0 0
      %1045 = vmatpush1.bf16.xpose.msra.mxu0 0
      %1046 = vmatprep.subr.bf16.mxu0 0
      %1047 = vmatpush1.bf16.xpose.msra.mxu0 0
      %1048 = vmatprep.subr.bf16.mxu0 0
      %1049 = vmatpush1.bf16.xpose.msra.mxu0 0
      %1050 = vmatprep.subr.bf16.mxu0 0
      %1051 = vmatpush1.bf16.xpose.msra.mxu0 0
      %1052 = vmatprep.subr.bf16.mxu0 0
      %1053 = vmatpush1.bf16.xpose.msra.mxu0 0
      %1054 = vmatprep.subr.bf16.mxu0 0
      %1055 = vmatpush1.bf16.xpose.msra.mxu0 0
      %1056 = vmatprep.subr.bf16.mxu0 0
      %1057 = vmatpush1.bf16.xpose.msra.mxu0 0
      %1058 = vmatprep.subr.bf16.mxu0 0
      %1059 = vmatpush1.bf16.xpose.msra.mxu0 0
      %1060 = vmatprep.subr.bf16.mxu0 0
      %1061 = vmatpush1.bf16.xpose.msra.mxu0 0
      %1062 = vmatprep.subr.bf16.mxu0 0
      %1063 = vmatpush1.bf16.xpose.msra.mxu0 0
      %1064 = vmatprep.subr.bf16.mxu0 0
      %1065 = vmatpush1.bf16.xpose.msra.mxu0 0
      %1066 = vmatprep.subr.bf16.mxu0 0
      %1067 = vmatpush1.bf16.xpose.msra.mxu0 0
      %1068 = vmatprep.subr.bf16.mxu0 0
      %1069 = vmatpush1.bf16.xpose.msra.mxu0 0
      %1070 = vmatprep.mubr.bf16.mxu0 0
      %1071 = vmatmul.mubr.bf16.gmra.mrb[0].mxu0 %v1036
      %v1072 = vpop.f32.mrb[0].mxu0
      %v1073 = vadd.f32 0.0, %v1072
      %v1074 = vpop.f32.mrb[0].mxu0
      %v1075 = vpop.f32.mrb[0].mxu0
      %v1076 = vpop.f32.mrb[0].mxu0
      %1077 = vdwg.mxu0
      %v1078 = vpack.i.b16 %v755, %v755
      %v1079 = vlaneseq
      %v1080 = vshrl.u32 %v1079, 7
      %v1081 = vsub.s32 0, %v1080
      %v1082 = vrot.slane %v1078, %v1081
      %1084 = vmatprep.subr.bf16.mxu0 0
      %1085 = vmatpush1.bf16.xpose.msra.mxu0 %v722
      %1086 = vmatprep.subr.bf16.mxu0 0
      %1087 = vmatpush1.bf16.xpose.msra.mxu0 0
      %1088 = vmatprep.subr.bf16.mxu0 0
      %1089 = vmatpush1.bf16.xpose.msra.mxu0 0
      %1090 = vmatprep.subr.bf16.mxu0 0
      %1091 = vmatpush1.bf16.xpose.msra.mxu0 0
      %1092 = vmatprep.subr.bf16.mxu0 0
      %1093 = vmatpush1.bf16.xpose.msra.mxu0 0
      %1094 = vmatprep.subr.bf16.mxu0 0
      %1095 = vmatpush1.bf16.xpose.msra.mxu0 0
      %1096 = vmatprep.subr.bf16.mxu0 0
      %1097 = vmatpush1.bf16.xpose.msra.mxu0 0
      %1098 = vmatprep.subr.bf16.mxu0 0
      %1099 = vmatpush1.bf16.xpose.msra.mxu0 0
      %1100 = vmatprep.subr.bf16.mxu0 0
      %1101 = vmatpush1.bf16.xpose.msra.mxu0 0
      %1102 = vmatprep.subr.bf16.mxu0 0
      %1103 = vmatpush1.bf16.xpose.msra.mxu0 0
      %1104 = vmatprep.subr.bf16.mxu0 0
      %1105 = vmatpush1.bf16.xpose.msra.mxu0 0
      %1106 = vmatprep.subr.bf16.mxu0 0
      %1107 = vmatpush1.bf16.xpose.msra.mxu0 0
      %1108 = vmatprep.subr.bf16.mxu0 0
      %1109 = vmatpush1.bf16.xpose.msra.mxu0 0
      %1110 = vmatprep.subr.bf16.mxu0 0
      %1111 = vmatpush1.bf16.xpose.msra.mxu0 0
      %1112 = vmatprep.subr.bf16.mxu0 0
      %1113 = vmatpush1.bf16.xpose.msra.mxu0 0
      %1114 = vmatprep.subr.bf16.mxu0 0
      %1115 = vmatpush1.bf16.xpose.msra.mxu0 0
      %1116 = vmatprep.mubr.bf16.mxu0 0
      %1117 = vmatmul.mubr.bf16.gmra.mrb[0].mxu0 %v1082
      %v1118 = vpop.f32.mrb[0].mxu0
      %v1119 = vadd.f32 0.0, %v1118
      %v1120 = vpop.f32.mrb[0].mxu0
      %v1121 = vpop.f32.mrb[0].mxu0
      %v1122 = vpop.f32.mrb[0].mxu0
      %1123 = vdwg.mxu0
      %v1125 = vcombine.high %v465, %v465
      %v1127 = vunpack.c.l.s4 1966171168
      %v1128 = vunpack.c.0.s8 %v1127
      %v1129 = vlaneseq
      %v1130 = vshrl.u32 %v1129, 7
      %v1131 = vsub.s32 %v1128, %v1130
      %v1132 = vrot.slane %v465, %v1131
      %v1134 = vunpack.c.l.s4 1966171168
      %v1135 = vunpack.c.0.s8 %v1134
      %v1136 = vlaneseq
      %v1137 = vshrl.u32 %v1136, 7
      %v1138 = vsub.s32 %v1135, %v1137
      %v1139 = vrot.slane %v1125, %v1138
      %v1140 = vcombine.high %v1132, %v1132
      %v1141 = vcombine.high %v1139, %v1139
      %v1143 = vunpack.c.l.s4 1966171168
      %v1144 = vunpack.c.0.s8 %v1143
      %v1145 = vlaneseq
      %v1146 = vshrl.u32 %v1145, 7
      %v1147 = vsub.s32 %v1144, %v1146
      %v1148 = vrot.slane %v1132, %v1147
      %v1150 = vunpack.c.l.s4 1966171168
      %v1151 = vunpack.c.0.s8 %v1150
      %v1152 = vlaneseq
      %v1153 = vshrl.u32 %v1152, 7
      %v1154 = vsub.s32 %v1151, %v1153
      %v1155 = vrot.slane %v1139, %v1154
      %v1157 = vunpack.c.l.s4 1966171168
      %v1158 = vunpack.c.0.s8 %v1157
      %v1159 = vlaneseq
      %v1160 = vshrl.u32 %v1159, 7
      %v1161 = vsub.s32 %v1158, %v1160
      %v1162 = vrot.slane %v1140, %v1161
      %v1164 = vunpack.c.l.s4 1966171168
      %v1165 = vunpack.c.0.s8 %v1164
      %v1166 = vlaneseq
      %v1167 = vshrl.u32 %v1166, 7
      %v1168 = vsub.s32 %v1165, %v1167
      %v1169 = vrot.slane %v1141, %v1168
      %v1170 = vcombine.high %v1148, %v1148
      %v1171 = vcombine.high %v1155, %v1155
      %v1172 = vcombine.high %v1162, %v1162
      %v1173 = vcombine.high %v1169, %v1169
      %vm1182 = vcmp.gt.f32.partialorder %v1148, 0.0
      %vm1183 = vcmp.gt.f32.partialorder %v1162, 0.0
      %vm1184 = vcmp.gt.f32.partialorder %v1170, 0.0
      %vm1185 = vcmp.gt.f32.partialorder %v1172, 0.0
      %vm1186 = vcmp.gt.f32.partialorder %v1155, 0.0
      %vm1187 = vcmp.gt.f32.partialorder %v1169, 0.0
      %vm1188 = vcmp.gt.f32.partialorder %v1171, 0.0
      %vm1189 = vcmp.gt.f32.partialorder %v1173, 0.0
      %v1190 = vsel %vm1182, %v797, -1e+30
      %v1191 = vsel %vm1183, %v843, -1e+30
      %v1192 = vsel %vm1184, %v889, -1e+30
      %v1193 = vsel %vm1185, %v935, -1e+30
      %v1194 = vsel %vm1186, %v981, -1e+30
      %v1195 = vsel %vm1187, %v1027, -1e+30
      %v1196 = vsel %vm1188, %v1073, -1e+30
      %v1197 = vsel %vm1189, %v1119, -1e+30
      %vm1198 = vcmask 122880
      %v1199 = vsel %vm1198, %v1190, -inf
      %1200 = vmax.xlane.f32.xlu0 %v1199
      %v1201 = vpop.xlane.xlu0 %1200
      %v1202 = vsel %vm1198, %v1191, -inf
      %1203 = vmax.xlane.f32.xlu0 %v1202
      %v1204 = vpop.xlane.xlu0 %1203
      %v1205 = vsel %vm1198, %v1192, -inf
      %1206 = vmax.xlane.f32.xlu0 %v1205
      %v1207 = vpop.xlane.xlu0 %1206
      %v1208 = vsel %vm1198, %v1193, -inf
      %1209 = vmax.xlane.f32.xlu0 %v1208
      %v1210 = vpop.xlane.xlu0 %1209
      %v1211 = vsel %vm1198, %v1194, -inf
      %1212 = vmax.xlane.f32.xlu0 %v1211
      %v1213 = vpop.xlane.xlu0 %1212
      %v1214 = vsel %vm1198, %v1195, -inf
      %1215 = vmax.xlane.f32.xlu0 %v1214
      %v1216 = vpop.xlane.xlu0 %1215
      %v1217 = vsel %vm1198, %v1196, -inf
      %1218 = vmax.xlane.f32.xlu0 %v1217
      %v1219 = vpop.xlane.xlu0 %1218
      %v1220 = vsel %vm1198, %v1197, -inf
      %1221 = vmax.xlane.f32.xlu0 %v1220
      %v1222 = vpop.xlane.xlu0 %1221
      %v1223 = vsub.f32 %v1190, %v1201
      %v1224 = vsub.f32 %v1191, %v1204
      %v1225 = vsub.f32 %v1192, %v1207
      %v1226 = vsub.f32 %v1193, %v1210
      %v1227 = vsub.f32 %v1194, %v1213
      %v1228 = vsub.f32 %v1195, %v1216
      %v1229 = vsub.f32 %v1196, %v1219
      %v1230 = vsub.f32 %v1197, %v1222
      %v1231 = vmul.f32 %v1223, 1.442695
      %v1232 = vpow.pop %v1231
      %v1233 = vmul.f32 %v1224, 1.442695
      %v1234 = vpow.pop %v1233
      %v1235 = vmul.f32 %v1225, 1.442695
      %v1236 = vpow.pop %v1235
      %v1237 = vmul.f32 %v1226, 1.442695
      %v1238 = vpow.pop %v1237
      %v1239 = vmul.f32 %v1227, 1.442695
      %v1240 = vpow.pop %v1239
      %v1241 = vmul.f32 %v1228, 1.442695
      %v1242 = vpow.pop %v1241
      %v1243 = vmul.f32 %v1229, 1.442695
      %v1244 = vpow.pop %v1243
      %v1245 = vmul.f32 %v1230, 1.442695
      %v1246 = vpow.pop %v1245
      %v1247 = vsel %vm1198, %v1232, 0.0
      %1248 = vadd.xlane.f32.xlu0 %v1247
      %v1249 = vpop.xlane.xlu0 %1248
      %v1250 = vsel %vm1198, %v1234, 0.0
      %1251 = vadd.xlane.f32.xlu0 %v1250
      %v1252 = vpop.xlane.xlu0 %1251
      %v1253 = vsel %vm1198, %v1236, 0.0
      %1254 = vadd.xlane.f32.xlu0 %v1253
      %v1255 = vpop.xlane.xlu0 %1254
      %v1256 = vsel %vm1198, %v1238, 0.0
      %1257 = vadd.xlane.f32.xlu0 %v1256
      %v1258 = vpop.xlane.xlu0 %1257
      %v1259 = vsel %vm1198, %v1240, 0.0
      %1260 = vadd.xlane.f32.xlu0 %v1259
      %v1261 = vpop.xlane.xlu0 %1260
      %v1262 = vsel %vm1198, %v1242, 0.0
      %1263 = vadd.xlane.f32.xlu0 %v1262
      %v1264 = vpop.xlane.xlu0 %1263
      %v1265 = vsel %vm1198, %v1244, 0.0
      %1266 = vadd.xlane.f32.xlu0 %v1265
      %v1267 = vpop.xlane.xlu0 %1266
      %v1268 = vsel %vm1198, %v1246, 0.0
      %1269 = vadd.xlane.f32.xlu0 %v1268
      %v1270 = vpop.xlane.xlu0 %1269
      %v1271 = vmax.f32 %v1249, 1e-09
      %v1272 = vmax.f32 %v1252, 1e-09
      %v1273 = vmax.f32 %v1255, 1e-09
      %v1274 = vmax.f32 %v1258, 1e-09
      %v1275 = vmax.f32 %v1261, 1e-09
      %v1276 = vmax.f32 %v1264, 1e-09
      %v1277 = vmax.f32 %v1267, 1e-09
      %v1278 = vmax.f32 %v1270, 1e-09
      %v1279 = vrcp.pop %v1271
      %v1280 = vmul.f32 %v1232, %v1279
      %v1281 = vrcp.pop %v1272
      %v1282 = vmul.f32 %v1234, %v1281
      %v1283 = vrcp.pop %v1273
      %v1284 = vmul.f32 %v1236, %v1283
      %v1285 = vrcp.pop %v1274
      %v1286 = vmul.f32 %v1238, %v1285
      %v1287 = vrcp.pop %v1275
      %v1288 = vmul.f32 %v1240, %v1287
      %v1289 = vrcp.pop %v1276
      %v1290 = vmul.f32 %v1242, %v1289
      %v1291 = vrcp.pop %v1277
      %v1292 = vmul.f32 %v1244, %v1291
      %v1293 = vrcp.pop %v1278
      %v1294 = vmul.f32 %v1246, %v1293
      %v1295 = vpack.c.bf16 %v1280, %v1280
      %v1296 = vpack.c.bf16 %v1282, %v1282
      %v1297 = vpack.c.bf16 %v1284, %v1284
      %v1298 = vpack.c.bf16 %v1286, %v1286
      %v1299 = vpack.c.bf16 %v1288, %v1288
      %v1300 = vpack.c.bf16 %v1290, %v1290
      %v1301 = vpack.c.bf16 %v1292, %v1292
      %v1302 = vpack.c.bf16 %v1294, %v1294
      %vm1303 = vcmask 130048
      %v1305 = vsel %vm1303, %v1295, 0
      %1307 = vmatprep.subr.bf16.mxu0 0
      %1308 = vmatpush1.bf16.msra.mxu0 %v715
      %1309 = vmatprep.subr.bf16.mxu0 0
      %1310 = vmatpush1.bf16.msra.mxu0 0
      %1311 = vmatprep.subr.bf16.mxu0 0
      %1312 = vmatpush1.bf16.msra.mxu0 0
      %1313 = vmatprep.subr.bf16.mxu0 0
      %1314 = vmatpush1.bf16.msra.mxu0 0
      %1315 = vmatprep.subr.bf16.mxu0 0
      %1316 = vmatpush1.bf16.msra.mxu0 0
      %1317 = vmatprep.subr.bf16.mxu0 0
      %1318 = vmatpush1.bf16.msra.mxu0 0
      %1319 = vmatprep.subr.bf16.mxu0 0
      %1320 = vmatpush1.bf16.msra.mxu0 0
      %1321 = vmatprep.subr.bf16.mxu0 0
      %1322 = vmatpush1.bf16.msra.mxu0 0
      %1323 = vmatprep.subr.bf16.mxu0 0
      %1324 = vmatpush1.bf16.msra.mxu0 0
      %1325 = vmatprep.subr.bf16.mxu0 0
      %1326 = vmatpush1.bf16.msra.mxu0 0
      %1327 = vmatprep.subr.bf16.mxu0 0
      %1328 = vmatpush1.bf16.msra.mxu0 0
      %1329 = vmatprep.subr.bf16.mxu0 0
      %1330 = vmatpush1.bf16.msra.mxu0 0
      %1331 = vmatprep.subr.bf16.mxu0 0
      %1332 = vmatpush1.bf16.msra.mxu0 0
      %1333 = vmatprep.subr.bf16.mxu0 0
      %1334 = vmatpush1.bf16.msra.mxu0 0
      %1335 = vmatprep.subr.bf16.mxu0 0
      %1336 = vmatpush1.bf16.msra.mxu0 0
      %1337 = vmatprep.subr.bf16.mxu0 0
      %1338 = vmatpush1.bf16.msra.mxu0 0
      %1339 = vmatprep.mubr.bf16.mxu0 0
      %1340 = vmatmul.mubr.bf16.gmra.mrb[0].mxu0 %v1305
      %v1341 = vpop.f32.mrb[0].mxu0
      %v1342 = vadd.f32 0.0, %v1341
      %v1343 = vpop.f32.mrb[0].mxu0
      %v1344 = vpop.f32.mrb[0].mxu0
      %v1345 = vpop.f32.mrb[0].mxu0
      %1346 = vdwg.mxu0
      %v1348 = vsel %vm1303, %v1296, 0
      %1350 = vmatprep.subr.bf16.mxu0 0
      %1351 = vmatpush1.bf16.msra.mxu0 %v716
      %1352 = vmatprep.subr.bf16.mxu0 0
      %1353 = vmatpush1.bf16.msra.mxu0 0
      %1354 = vmatprep.subr.bf16.mxu0 0
      %1355 = vmatpush1.bf16.msra.mxu0 0
      %1356 = vmatprep.subr.bf16.mxu0 0
      %1357 = vmatpush1.bf16.msra.mxu0 0
      %1358 = vmatprep.subr.bf16.mxu0 0
      %1359 = vmatpush1.bf16.msra.mxu0 0
      %1360 = vmatprep.subr.bf16.mxu0 0
      %1361 = vmatpush1.bf16.msra.mxu0 0
      %1362 = vmatprep.subr.bf16.mxu0 0
      %1363 = vmatpush1.bf16.msra.mxu0 0
      %1364 = vmatprep.subr.bf16.mxu0 0
      %1365 = vmatpush1.bf16.msra.mxu0 0
      %1366 = vmatprep.subr.bf16.mxu0 0
      %1367 = vmatpush1.bf16.msra.mxu0 0
      %1368 = vmatprep.subr.bf16.mxu0 0
      %1369 = vmatpush1.bf16.msra.mxu0 0
      %1370 = vmatprep.subr.bf16.mxu0 0
      %1371 = vmatpush1.bf16.msra.mxu0 0
      %1372 = vmatprep.subr.bf16.mxu0 0
      %1373 = vmatpush1.bf16.msra.mxu0 0
      %1374 = vmatprep.subr.bf16.mxu0 0
      %1375 = vmatpush1.bf16.msra.mxu0 0
      %1376 = vmatprep.subr.bf16.mxu0 0
      %1377 = vmatpush1.bf16.msra.mxu0 0
      %1378 = vmatprep.subr.bf16.mxu0 0
      %1379 = vmatpush1.bf16.msra.mxu0 0
      %1380 = vmatprep.subr.bf16.mxu0 0
      %1381 = vmatpush1.bf16.msra.mxu0 0
      %1382 = vmatprep.mubr.bf16.mxu0 0
      %1383 = vmatmul.mubr.bf16.gmra.mrb[0].mxu0 %v1348
      %v1384 = vpop.f32.mrb[0].mxu0
      %v1385 = vadd.f32 0.0, %v1384
      %v1386 = vpop.f32.mrb[0].mxu0
      %v1387 = vpop.f32.mrb[0].mxu0
      %v1388 = vpop.f32.mrb[0].mxu0
      %1389 = vdwg.mxu0
      %v1391 = vsel %vm1303, %v1297, 0
      %1393 = vmatprep.subr.bf16.mxu0 0
      %1394 = vmatpush1.bf16.msra.mxu0 %v717
      %1395 = vmatprep.subr.bf16.mxu0 0
      %1396 = vmatpush1.bf16.msra.mxu0 0
      %1397 = vmatprep.subr.bf16.mxu0 0
      %1398 = vmatpush1.bf16.msra.mxu0 0
      %1399 = vmatprep.subr.bf16.mxu0 0
      %1400 = vmatpush1.bf16.msra.mxu0 0
      %1401 = vmatprep.subr.bf16.mxu0 0
      %1402 = vmatpush1.bf16.msra.mxu0 0
      %1403 = vmatprep.subr.bf16.mxu0 0
      %1404 = vmatpush1.bf16.msra.mxu0 0
      %1405 = vmatprep.subr.bf16.mxu0 0
      %1406 = vmatpush1.bf16.msra.mxu0 0
      %1407 = vmatprep.subr.bf16.mxu0 0
      %1408 = vmatpush1.bf16.msra.mxu0 0
      %1409 = vmatprep.subr.bf16.mxu0 0
      %1410 = vmatpush1.bf16.msra.mxu0 0
      %1411 = vmatprep.subr.bf16.mxu0 0
      %1412 = vmatpush1.bf16.msra.mxu0 0
      %1413 = vmatprep.subr.bf16.mxu0 0
      %1414 = vmatpush1.bf16.msra.mxu0 0
      %1415 = vmatprep.subr.bf16.mxu0 0
      %1416 = vmatpush1.bf16.msra.mxu0 0
      %1417 = vmatprep.subr.bf16.mxu0 0
      %1418 = vmatpush1.bf16.msra.mxu0 0
      %1419 = vmatprep.subr.bf16.mxu0 0
      %1420 = vmatpush1.bf16.msra.mxu0 0
      %1421 = vmatprep.subr.bf16.mxu0 0
      %1422 = vmatpush1.bf16.msra.mxu0 0
      %1423 = vmatprep.subr.bf16.mxu0 0
      %1424 = vmatpush1.bf16.msra.mxu0 0
      %1425 = vmatprep.mubr.bf16.mxu0 0
      %1426 = vmatmul.mubr.bf16.gmra.mrb[0].mxu0 %v1391
      %v1427 = vpop.f32.mrb[0].mxu0
      %v1428 = vadd.f32 0.0, %v1427
      %v1429 = vpop.f32.mrb[0].mxu0
      %v1430 = vpop.f32.mrb[0].mxu0
      %v1431 = vpop.f32.mrb[0].mxu0
      %1432 = vdwg.mxu0
      %v1434 = vsel %vm1303, %v1298, 0
      %1436 = vmatprep.subr.bf16.mxu0 0
      %1437 = vmatpush1.bf16.msra.mxu0 %v718
      %1438 = vmatprep.subr.bf16.mxu0 0
      %1439 = vmatpush1.bf16.msra.mxu0 0
      %1440 = vmatprep.subr.bf16.mxu0 0
      %1441 = vmatpush1.bf16.msra.mxu0 0
      %1442 = vmatprep.subr.bf16.mxu0 0
      %1443 = vmatpush1.bf16.msra.mxu0 0
      %1444 = vmatprep.subr.bf16.mxu0 0
      %1445 = vmatpush1.bf16.msra.mxu0 0
      %1446 = vmatprep.subr.bf16.mxu0 0
      %1447 = vmatpush1.bf16.msra.mxu0 0
      %1448 = vmatprep.subr.bf16.mxu0 0
      %1449 = vmatpush1.bf16.msra.mxu0 0
      %1450 = vmatprep.subr.bf16.mxu0 0
      %1451 = vmatpush1.bf16.msra.mxu0 0
      %1452 = vmatprep.subr.bf16.mxu0 0
      %1453 = vmatpush1.bf16.msra.mxu0 0
      %1454 = vmatprep.subr.bf16.mxu0 0
      %1455 = vmatpush1.bf16.msra.mxu0 0
      %1456 = vmatprep.subr.bf16.mxu0 0
      %1457 = vmatpush1.bf16.msra.mxu0 0
      %1458 = vmatprep.subr.bf16.mxu0 0
      %1459 = vmatpush1.bf16.msra.mxu0 0
      %1460 = vmatprep.subr.bf16.mxu0 0
      %1461 = vmatpush1.bf16.msra.mxu0 0
      %1462 = vmatprep.subr.bf16.mxu0 0
      %1463 = vmatpush1.bf16.msra.mxu0 0
      %1464 = vmatprep.subr.bf16.mxu0 0
      %1465 = vmatpush1.bf16.msra.mxu0 0
      %1466 = vmatprep.subr.bf16.mxu0 0
      %1467 = vmatpush1.bf16.msra.mxu0 0
      %1468 = vmatprep.mubr.bf16.mxu0 0
      %1469 = vmatmul.mubr.bf16.gmra.mrb[0].mxu0 %v1434
      %v1470 = vpop.f32.mrb[0].mxu0
      %v1471 = vadd.f32 0.0, %v1470
      %v1472 = vpop.f32.mrb[0].mxu0
      %v1473 = vpop.f32.mrb[0].mxu0
      %v1474 = vpop.f32.mrb[0].mxu0
      %1475 = vdwg.mxu0
      %v1477 = vsel %vm1303, %v1299, 0
      %1479 = vmatprep.subr.bf16.mxu0 0
      %1480 = vmatpush1.bf16.msra.mxu0 %v719
      %1481 = vmatprep.subr.bf16.mxu0 0
      %1482 = vmatpush1.bf16.msra.mxu0 0
      %1483 = vmatprep.subr.bf16.mxu0 0
      %1484 = vmatpush1.bf16.msra.mxu0 0
      %1485 = vmatprep.subr.bf16.mxu0 0
      %1486 = vmatpush1.bf16.msra.mxu0 0
      %1487 = vmatprep.subr.bf16.mxu0 0
      %1488 = vmatpush1.bf16.msra.mxu0 0
      %1489 = vmatprep.subr.bf16.mxu0 0
      %1490 = vmatpush1.bf16.msra.mxu0 0
      %1491 = vmatprep.subr.bf16.mxu0 0
      %1492 = vmatpush1.bf16.msra.mxu0 0
      %1493 = vmatprep.subr.bf16.mxu0 0
      %1494 = vmatpush1.bf16.msra.mxu0 0
      %1495 = vmatprep.subr.bf16.mxu0 0
      %1496 = vmatpush1.bf16.msra.mxu0 0
      %1497 = vmatprep.subr.bf16.mxu0 0
      %1498 = vmatpush1.bf16.msra.mxu0 0
      %1499 = vmatprep.subr.bf16.mxu0 0
      %1500 = vmatpush1.bf16.msra.mxu0 0
      %1501 = vmatprep.subr.bf16.mxu0 0
      %1502 = vmatpush1.bf16.msra.mxu0 0
      %1503 = vmatprep.subr.bf16.mxu0 0
      %1504 = vmatpush1.bf16.msra.mxu0 0
      %1505 = vmatprep.subr.bf16.mxu0 0
      %1506 = vmatpush1.bf16.msra.mxu0 0
      %1507 = vmatprep.subr.bf16.mxu0 0
      %1508 = vmatpush1.bf16.msra.mxu0 0
      %1509 = vmatprep.subr.bf16.mxu0 0
      %1510 = vmatpush1.bf16.msra.mxu0 0
      %1511 = vmatprep.mubr.bf16.mxu0 0
      %1512 = vmatmul.mubr.bf16.gmra.mrb[0].mxu0 %v1477
      %v1513 = vpop.f32.mrb[0].mxu0
      %v1514 = vadd.f32 0.0, %v1513
      %v1515 = vpop.f32.mrb[0].mxu0
      %v1516 = vpop.f32.mrb[0].mxu0
      %v1517 = vpop.f32.mrb[0].mxu0
      %1518 = vdwg.mxu0
      %v1520 = vsel %vm1303, %v1300, 0
      %1522 = vmatprep.subr.bf16.mxu0 0
      %1523 = vmatpush1.bf16.msra.mxu0 %v720
      %1524 = vmatprep.subr.bf16.mxu0 0
      %1525 = vmatpush1.bf16.msra.mxu0 0
      %1526 = vmatprep.subr.bf16.mxu0 0
      %1527 = vmatpush1.bf16.msra.mxu0 0
      %1528 = vmatprep.subr.bf16.mxu0 0
      %1529 = vmatpush1.bf16.msra.mxu0 0
      %1530 = vmatprep.subr.bf16.mxu0 0
      %1531 = vmatpush1.bf16.msra.mxu0 0
      %1532 = vmatprep.subr.bf16.mxu0 0
      %1533 = vmatpush1.bf16.msra.mxu0 0
      %1534 = vmatprep.subr.bf16.mxu0 0
      %1535 = vmatpush1.bf16.msra.mxu0 0
      %1536 = vmatprep.subr.bf16.mxu0 0
      %1537 = vmatpush1.bf16.msra.mxu0 0
      %1538 = vmatprep.subr.bf16.mxu0 0
      %1539 = vmatpush1.bf16.msra.mxu0 0
      %1540 = vmatprep.subr.bf16.mxu0 0
      %1541 = vmatpush1.bf16.msra.mxu0 0
      %1542 = vmatprep.subr.bf16.mxu0 0
      %1543 = vmatpush1.bf16.msra.mxu0 0
      %1544 = vmatprep.subr.bf16.mxu0 0
      %1545 = vmatpush1.bf16.msra.mxu0 0
      %1546 = vmatprep.subr.bf16.mxu0 0
      %1547 = vmatpush1.bf16.msra.mxu0 0
      %1548 = vmatprep.subr.bf16.mxu0 0
      %1549 = vmatpush1.bf16.msra.mxu0 0
      %1550 = vmatprep.subr.bf16.mxu0 0
      %1551 = vmatpush1.bf16.msra.mxu0 0
      %1552 = vmatprep.subr.bf16.mxu0 0
      %1553 = vmatpush1.bf16.msra.mxu0 0
      %1554 = vmatprep.mubr.bf16.mxu0 0
      %1555 = vmatmul.mubr.bf16.gmra.mrb[0].mxu0 %v1520
      %v1556 = vpop.f32.mrb[0].mxu0
      %v1557 = vadd.f32 0.0, %v1556
      %v1558 = vpop.f32.mrb[0].mxu0
      %v1559 = vpop.f32.mrb[0].mxu0
      %v1560 = vpop.f32.mrb[0].mxu0
      %1561 = vdwg.mxu0
      %v1563 = vsel %vm1303, %v1301, 0
      %1565 = vmatprep.subr.bf16.mxu0 0
      %1566 = vmatpush1.bf16.msra.mxu0 %v721
      %1567 = vmatprep.subr.bf16.mxu0 0
      %1568 = vmatpush1.bf16.msra.mxu0 0
      %1569 = vmatprep.subr.bf16.mxu0 0
      %1570 = vmatpush1.bf16.msra.mxu0 0
      %1571 = vmatprep.subr.bf16.mxu0 0
      %1572 = vmatpush1.bf16.msra.mxu0 0
      %1573 = vmatprep.subr.bf16.mxu0 0
      %1574 = vmatpush1.bf16.msra.mxu0 0
      %1575 = vmatprep.subr.bf16.mxu0 0
      %1576 = vmatpush1.bf16.msra.mxu0 0
      %1577 = vmatprep.subr.bf16.mxu0 0
      %1578 = vmatpush1.bf16.msra.mxu0 0
      %1579 = vmatprep.subr.bf16.mxu0 0
      %1580 = vmatpush1.bf16.msra.mxu0 0
      %1581 = vmatprep.subr.bf16.mxu0 0
      %1582 = vmatpush1.bf16.msra.mxu0 0
      %1583 = vmatprep.subr.bf16.mxu0 0
      %1584 = vmatpush1.bf16.msra.mxu0 0
      %1585 = vmatprep.subr.bf16.mxu0 0
      %1586 = vmatpush1.bf16.msra.mxu0 0
      %1587 = vmatprep.subr.bf16.mxu0 0
      %1588 = vmatpush1.bf16.msra.mxu0 0
      %1589 = vmatprep.subr.bf16.mxu0 0
      %1590 = vmatpush1.bf16.msra.mxu0 0
      %1591 = vmatprep.subr.bf16.mxu0 0
      %1592 = vmatpush1.bf16.msra.mxu0 0
      %1593 = vmatprep.subr.bf16.mxu0 0
      %1594 = vmatpush1.bf16.msra.mxu0 0
      %1595 = vmatprep.subr.bf16.mxu0 0
      %1596 = vmatpush1.bf16.msra.mxu0 0
      %1597 = vmatprep.mubr.bf16.mxu0 0
      %1598 = vmatmul.mubr.bf16.gmra.mrb[0].mxu0 %v1563
      %v1599 = vpop.f32.mrb[0].mxu0
      %v1600 = vadd.f32 0.0, %v1599
      %v1601 = vpop.f32.mrb[0].mxu0
      %v1602 = vpop.f32.mrb[0].mxu0
      %v1603 = vpop.f32.mrb[0].mxu0
      %1604 = vdwg.mxu0
      %v1606 = vsel %vm1303, %v1302, 0
      %1608 = vmatprep.subr.bf16.mxu0 0
      %1609 = vmatpush1.bf16.msra.mxu0 %v722
      %1610 = vmatprep.subr.bf16.mxu0 0
      %1611 = vmatpush1.bf16.msra.mxu0 0
      %1612 = vmatprep.subr.bf16.mxu0 0
      %1613 = vmatpush1.bf16.msra.mxu0 0
      %1614 = vmatprep.subr.bf16.mxu0 0
      %1615 = vmatpush1.bf16.msra.mxu0 0
      %1616 = vmatprep.subr.bf16.mxu0 0
      %1617 = vmatpush1.bf16.msra.mxu0 0
      %1618 = vmatprep.subr.bf16.mxu0 0
      %1619 = vmatpush1.bf16.msra.mxu0 0
      %1620 = vmatprep.subr.bf16.mxu0 0
      %1621 = vmatpush1.bf16.msra.mxu0 0
      %1622 = vmatprep.subr.bf16.mxu0 0
      %1623 = vmatpush1.bf16.msra.mxu0 0
      %1624 = vmatprep.subr.bf16.mxu0 0
      %1625 = vmatpush1.bf16.msra.mxu0 0
      %1626 = vmatprep.subr.bf16.mxu0 0
      %1627 = vmatpush1.bf16.msra.mxu0 0
      %1628 = vmatprep.subr.bf16.mxu0 0
      %1629 = vmatpush1.bf16.msra.mxu0 0
      %1630 = vmatprep.subr.bf16.mxu0 0
      %1631 = vmatpush1.bf16.msra.mxu0 0
      %1632 = vmatprep.subr.bf16.mxu0 0
      %1633 = vmatpush1.bf16.msra.mxu0 0
      %1634 = vmatprep.subr.bf16.mxu0 0
      %1635 = vmatpush1.bf16.msra.mxu0 0
      %1636 = vmatprep.subr.bf16.mxu0 0
      %1637 = vmatpush1.bf16.msra.mxu0 0
      %1638 = vmatprep.subr.bf16.mxu0 0
      %1639 = vmatpush1.bf16.msra.mxu0 0
      %1640 = vmatprep.mubr.bf16.mxu0 0
      %1641 = vmatmul.mubr.bf16.gmra.mrb[0].mxu0 %v1606
      %v1642 = vpop.f32.mrb[0].mxu0
      %v1643 = vadd.f32 0.0, %v1642
      %v1644 = vpop.f32.mrb[0].mxu0
      %v1645 = vpop.f32.mrb[0].mxu0
      %v1646 = vpop.f32.mrb[0].mxu0
      %1647 = vdwg.mxu0
      %v1648 = vpack.c.bf16 %v466, %v466
      %v1651 = vunpack.c.l.s4 1966171168
      %v1652 = vunpack.c.0.s8 %v1651
      %v1653 = vlaneseq
      %v1654 = vshrl.u32 %v1653, 7
      %v1655 = vsub.s32 %v1652, %v1654
      %v1656 = vrot.slane %v1648, %v1655
      %v1657 = vcombine.high %v1656, %v1656
      %v1659 = vunpack.c.l.s4 1966171168
      %v1660 = vunpack.c.0.s8 %v1659
      %v1661 = vlaneseq
      %v1662 = vshrl.u32 %v1661, 7
      %v1663 = vsub.s32 %v1660, %v1662
      %v1664 = vrot.slane %v1656, %v1663
      %v1666 = vunpack.c.l.s4 1966171168
      %v1667 = vunpack.c.0.s8 %v1666
      %v1668 = vlaneseq
      %v1669 = vshrl.u32 %v1668, 7
      %v1670 = vsub.s32 %v1667, %v1669
      %v1671 = vrot.slane %v1657, %v1670
      %v1672 = vcombine.high %v1664, %v1664
      %v1673 = vcombine.high %v1671, %v1671
      %v1674 = vunpack.i.l.s16 %v1664
      %v1675 = vunpack.i.h.s16 %v1664
      %v1676 = vunpack.i.l.s16 %v1671
      %v1677 = vunpack.i.h.s16 %v1671
      %v1678 = vunpack.i.l.s16 %v1672
      %v1679 = vunpack.i.h.s16 %v1672
      %v1680 = vunpack.i.l.s16 %v1673
      %v1681 = vunpack.i.h.s16 %v1673
      %v1682 = vld [vmem:[%s453] sm:$0xf]
      %v1683 = vld [vmem:[%s453 + $0x4] sm:$0xf]
      %v1684 = vld [vmem:[%s453 + $0x8] sm:$0xf]
      %v1685 = vld [vmem:[%s453 + $0xc] sm:$0xf]
      %v1686 = vld [vmem:[%s453 + $0x10] sm:$0xf]
      %v1687 = vld [vmem:[%s453 + $0x14] sm:$0xf]
      %v1688 = vld [vmem:[%s453 + $0x18] sm:$0xf]
      %v1689 = vld [vmem:[%s453 + $0x1c] sm:$0xf]
      %v1690 = vpack.i.b16 %v1674, %v1674
      %v1691 = vlaneseq
      %v1692 = vshrl.u32 %v1691, 7
      %v1693 = vsub.s32 0, %v1692
      %v1694 = vrot.slane %v1690, %v1693
      %vm1695 = vcmask 64512
      %v1697 = vsel %vm1695, %v1694, 0
      %vm1699 = vcmask 1043456
      %v1701 = vsel %vm1699, %v1682, 0
      %1703 = vmatprep.subr.bf16.mxu0 0
      %1704 = vmatpush1.bf16.msra.mxu0 %v1701
      %1705 = vmatprep.subr.bf16.mxu0 0
      %1706 = vmatpush1.bf16.msra.mxu0 0
      %1707 = vmatprep.subr.bf16.mxu0 0
      %1708 = vmatpush1.bf16.msra.mxu0 0
      %1709 = vmatprep.subr.bf16.mxu0 0
      %1710 = vmatpush1.bf16.msra.mxu0 0
      %1711 = vmatprep.subr.bf16.mxu0 0
      %1712 = vmatpush1.bf16.msra.mxu0 0
      %1713 = vmatprep.subr.bf16.mxu0 0
      %1714 = vmatpush1.bf16.msra.mxu0 0
      %1715 = vmatprep.subr.bf16.mxu0 0
      %1716 = vmatpush1.bf16.msra.mxu0 0
      %1717 = vmatprep.subr.bf16.mxu0 0
      %1718 = vmatpush1.bf16.msra.mxu0 0
      %1719 = vmatprep.subr.bf16.mxu0 0
      %1720 = vmatpush1.bf16.msra.mxu0 0
      %1721 = vmatprep.subr.bf16.mxu0 0
      %1722 = vmatpush1.bf16.msra.mxu0 0
      %1723 = vmatprep.subr.bf16.mxu0 0
      %1724 = vmatpush1.bf16.msra.mxu0 0
      %1725 = vmatprep.subr.bf16.mxu0 0
      %1726 = vmatpush1.bf16.msra.mxu0 0
      %1727 = vmatprep.subr.bf16.mxu0 0
      %1728 = vmatpush1.bf16.msra.mxu0 0
      %1729 = vmatprep.subr.bf16.mxu0 0
      %1730 = vmatpush1.bf16.msra.mxu0 0
      %1731 = vmatprep.subr.bf16.mxu0 0
      %1732 = vmatpush1.bf16.msra.mxu0 0
      %1733 = vmatprep.subr.bf16.mxu0 0
      %1734 = vmatpush1.bf16.msra.mxu0 0
      %1735 = vmatprep.mubr.bf16.mxu0 0
      %1736 = vmatmul.mubr.bf16.gmra.mrb[0].mxu0 %v1697
      %v1737 = vpop.f32.mrb[0].mxu0
      %v1738 = vadd.f32 0.0, %v1737
      %v1739 = vpop.f32.mrb[0].mxu0
      %v1740 = vpop.f32.mrb[0].mxu0
      %v1741 = vpop.f32.mrb[0].mxu0
      %1742 = vdwg.mxu0
      %v1743 = vpack.i.b16 %v1675, %v1675
      %v1744 = vlaneseq
      %v1745 = vshrl.u32 %v1744, 7
      %v1746 = vsub.s32 0, %v1745
      %v1747 = vrot.slane %v1743, %v1746
      %v1749 = vsel %vm1695, %v1747, 0
      %v1752 = vsel %vm1699, %v1683, 0
      %1754 = vmatprep.subr.bf16.mxu0 0
      %1755 = vmatpush1.bf16.msra.mxu0 %v1752
      %1756 = vmatprep.subr.bf16.mxu0 0
      %1757 = vmatpush1.bf16.msra.mxu0 0
      %1758 = vmatprep.subr.bf16.mxu0 0
      %1759 = vmatpush1.bf16.msra.mxu0 0
      %1760 = vmatprep.subr.bf16.mxu0 0
      %1761 = vmatpush1.bf16.msra.mxu0 0
      %1762 = vmatprep.subr.bf16.mxu0 0
      %1763 = vmatpush1.bf16.msra.mxu0 0
      %1764 = vmatprep.subr.bf16.mxu0 0
      %1765 = vmatpush1.bf16.msra.mxu0 0
      %1766 = vmatprep.subr.bf16.mxu0 0
      %1767 = vmatpush1.bf16.msra.mxu0 0
      %1768 = vmatprep.subr.bf16.mxu0 0
      %1769 = vmatpush1.bf16.msra.mxu0 0
      %1770 = vmatprep.subr.bf16.mxu0 0
      %1771 = vmatpush1.bf16.msra.mxu0 0
      %1772 = vmatprep.subr.bf16.mxu0 0
      %1773 = vmatpush1.bf16.msra.mxu0 0
      %1774 = vmatprep.subr.bf16.mxu0 0
      %1775 = vmatpush1.bf16.msra.mxu0 0
      %1776 = vmatprep.subr.bf16.mxu0 0
      %1777 = vmatpush1.bf16.msra.mxu0 0
      %1778 = vmatprep.subr.bf16.mxu0 0
      %1779 = vmatpush1.bf16.msra.mxu0 0
      %1780 = vmatprep.subr.bf16.mxu0 0
      %1781 = vmatpush1.bf16.msra.mxu0 0
      %1782 = vmatprep.subr.bf16.mxu0 0
      %1783 = vmatpush1.bf16.msra.mxu0 0
      %1784 = vmatprep.subr.bf16.mxu0 0
      %1785 = vmatpush1.bf16.msra.mxu0 0
      %1786 = vmatprep.mubr.bf16.mxu0 0
      %1787 = vmatmul.mubr.bf16.gmra.mrb[0].mxu0 %v1749
      %v1788 = vpop.f32.mrb[0].mxu0
      %v1789 = vadd.f32 0.0, %v1788
      %v1790 = vpop.f32.mrb[0].mxu0
      %v1791 = vpop.f32.mrb[0].mxu0
      %v1792 = vpop.f32.mrb[0].mxu0
      %1793 = vdwg.mxu0
      %v1794 = vpack.i.b16 %v1676, %v1676
      %v1795 = vlaneseq
      %v1796 = vshrl.u32 %v1795, 7
      %v1797 = vsub.s32 0, %v1796
      %v1798 = vrot.slane %v1794, %v1797
      %v1800 = vsel %vm1695, %v1798, 0
      %v1803 = vsel %vm1699, %v1684, 0
      %1805 = vmatprep.subr.bf16.mxu0 0
      %1806 = vmatpush1.bf16.msra.mxu0 %v1803
      %1807 = vmatprep.subr.bf16.mxu0 0
      %1808 = vmatpush1.bf16.msra.mxu0 0
      %1809 = vmatprep.subr.bf16.mxu0 0
      %1810 = vmatpush1.bf16.msra.mxu0 0
      %1811 = vmatprep.subr.bf16.mxu0 0
      %1812 = vmatpush1.bf16.msra.mxu0 0
      %1813 = vmatprep.subr.bf16.mxu0 0
      %1814 = vmatpush1.bf16.msra.mxu0 0
      %1815 = vmatprep.subr.bf16.mxu0 0
      %1816 = vmatpush1.bf16.msra.mxu0 0
      %1817 = vmatprep.subr.bf16.mxu0 0
      %1818 = vmatpush1.bf16.msra.mxu0 0
      %1819 = vmatprep.subr.bf16.mxu0 0
      %1820 = vmatpush1.bf16.msra.mxu0 0
      %1821 = vmatprep.subr.bf16.mxu0 0
      %1822 = vmatpush1.bf16.msra.mxu0 0
      %1823 = vmatprep.subr.bf16.mxu0 0
      %1824 = vmatpush1.bf16.msra.mxu0 0
      %1825 = vmatprep.subr.bf16.mxu0 0
      %1826 = vmatpush1.bf16.msra.mxu0 0
      %1827 = vmatprep.subr.bf16.mxu0 0
      %1828 = vmatpush1.bf16.msra.mxu0 0
      %1829 = vmatprep.subr.bf16.mxu0 0
      %1830 = vmatpush1.bf16.msra.mxu0 0
      %1831 = vmatprep.subr.bf16.mxu0 0
      %1832 = vmatpush1.bf16.msra.mxu0 0
      %1833 = vmatprep.subr.bf16.mxu0 0
      %1834 = vmatpush1.bf16.msra.mxu0 0
      %1835 = vmatprep.subr.bf16.mxu0 0
      %1836 = vmatpush1.bf16.msra.mxu0 0
      %1837 = vmatprep.mubr.bf16.mxu0 0
      %1838 = vmatmul.mubr.bf16.gmra.mrb[0].mxu0 %v1800
      %v1839 = vpop.f32.mrb[0].mxu0
      %v1840 = vadd.f32 0.0, %v1839
      %v1841 = vpop.f32.mrb[0].mxu0
      %v1842 = vpop.f32.mrb[0].mxu0
      %v1843 = vpop.f32.mrb[0].mxu0
      %1844 = vdwg.mxu0
      %v1845 = vpack.i.b16 %v1677, %v1677
      %v1846 = vlaneseq
      %v1847 = vshrl.u32 %v1846, 7
      %v1848 = vsub.s32 0, %v1847
      %v1849 = vrot.slane %v1845, %v1848
      %v1851 = vsel %vm1695, %v1849, 0
      %v1854 = vsel %vm1699, %v1685, 0
      %1856 = vmatprep.subr.bf16.mxu0 0
      %1857 = vmatpush1.bf16.msra.mxu0 %v1854
      %1858 = vmatprep.subr.bf16.mxu0 0
      %1859 = vmatpush1.bf16.msra.mxu0 0
      %1860 = vmatprep.subr.bf16.mxu0 0
      %1861 = vmatpush1.bf16.msra.mxu0 0
      %1862 = vmatprep.subr.bf16.mxu0 0
      %1863 = vmatpush1.bf16.msra.mxu0 0
      %1864 = vmatprep.subr.bf16.mxu0 0
      %1865 = vmatpush1.bf16.msra.mxu0 0
      %1866 = vmatprep.subr.bf16.mxu0 0
      %1867 = vmatpush1.bf16.msra.mxu0 0
      %1868 = vmatprep.subr.bf16.mxu0 0
      %1869 = vmatpush1.bf16.msra.mxu0 0
      %1870 = vmatprep.subr.bf16.mxu0 0
      %1871 = vmatpush1.bf16.msra.mxu0 0
      %1872 = vmatprep.subr.bf16.mxu0 0
      %1873 = vmatpush1.bf16.msra.mxu0 0
      %1874 = vmatprep.subr.bf16.mxu0 0
      %1875 = vmatpush1.bf16.msra.mxu0 0
      %1876 = vmatprep.subr.bf16.mxu0 0
      %1877 = vmatpush1.bf16.msra.mxu0 0
      %1878 = vmatprep.subr.bf16.mxu0 0
      %1879 = vmatpush1.bf16.msra.mxu0 0
      %1880 = vmatprep.subr.bf16.mxu0 0
      %1881 = vmatpush1.bf16.msra.mxu0 0
      %1882 = vmatprep.subr.bf16.mxu0 0
      %1883 = vmatpush1.bf16.msra.mxu0 0
      %1884 = vmatprep.subr.bf16.mxu0 0
      %1885 = vmatpush1.bf16.msra.mxu0 0
      %1886 = vmatprep.subr.bf16.mxu0 0
      %1887 = vmatpush1.bf16.msra.mxu0 0
      %1888 = vmatprep.mubr.bf16.mxu0 0
      %1889 = vmatmul.mubr.bf16.gmra.mrb[0].mxu0 %v1851
      %v1890 = vpop.f32.mrb[0].mxu0
      %v1891 = vadd.f32 0.0, %v1890
      %v1892 = vpop.f32.mrb[0].mxu0
      %v1893 = vpop.f32.mrb[0].mxu0
      %v1894 = vpop.f32.mrb[0].mxu0
      %1895 = vdwg.mxu0
      %v1896 = vpack.i.b16 %v1678, %v1678
      %v1897 = vlaneseq
      %v1898 = vshrl.u32 %v1897, 7
      %v1899 = vsub.s32 0, %v1898
      %v1900 = vrot.slane %v1896, %v1899
      %v1902 = vsel %vm1695, %v1900, 0
      %v1905 = vsel %vm1699, %v1686, 0
      %1907 = vmatprep.subr.bf16.mxu0 0
      %1908 = vmatpush1.bf16.msra.mxu0 %v1905
      %1909 = vmatprep.subr.bf16.mxu0 0
      %1910 = vmatpush1.bf16.msra.mxu0 0
      %1911 = vmatprep.subr.bf16.mxu0 0
      %1912 = vmatpush1.bf16.msra.mxu0 0
      %1913 = vmatprep.subr.bf16.mxu0 0
      %1914 = vmatpush1.bf16.msra.mxu0 0
      %1915 = vmatprep.subr.bf16.mxu0 0
      %1916 = vmatpush1.bf16.msra.mxu0 0
      %1917 = vmatprep.subr.bf16.mxu0 0
      %1918 = vmatpush1.bf16.msra.mxu0 0
      %1919 = vmatprep.subr.bf16.mxu0 0
      %1920 = vmatpush1.bf16.msra.mxu0 0
      %1921 = vmatprep.subr.bf16.mxu0 0
      %1922 = vmatpush1.bf16.msra.mxu0 0
      %1923 = vmatprep.subr.bf16.mxu0 0
      %1924 = vmatpush1.bf16.msra.mxu0 0
      %1925 = vmatprep.subr.bf16.mxu0 0
      %1926 = vmatpush1.bf16.msra.mxu0 0
      %1927 = vmatprep.subr.bf16.mxu0 0
      %1928 = vmatpush1.bf16.msra.mxu0 0
      %1929 = vmatprep.subr.bf16.mxu0 0
      %1930 = vmatpush1.bf16.msra.mxu0 0
      %1931 = vmatprep.subr.bf16.mxu0 0
      %1932 = vmatpush1.bf16.msra.mxu0 0
      %1933 = vmatprep.subr.bf16.mxu0 0
      %1934 = vmatpush1.bf16.msra.mxu0 0
      %1935 = vmatprep.subr.bf16.mxu0 0
      %1936 = vmatpush1.bf16.msra.mxu0 0
      %1937 = vmatprep.subr.bf16.mxu0 0
      %1938 = vmatpush1.bf16.msra.mxu0 0
      %1939 = vmatprep.mubr.bf16.mxu0 0
      %1940 = vmatmul.mubr.bf16.gmra.mrb[0].mxu0 %v1902
      %v1941 = vpop.f32.mrb[0].mxu0
      %v1942 = vadd.f32 0.0, %v1941
      %v1943 = vpop.f32.mrb[0].mxu0
      %v1944 = vpop.f32.mrb[0].mxu0
      %v1945 = vpop.f32.mrb[0].mxu0
      %1946 = vdwg.mxu0
      %v1947 = vpack.i.b16 %v1679, %v1679
      %v1948 = vlaneseq
      %v1949 = vshrl.u32 %v1948, 7
      %v1950 = vsub.s32 0, %v1949
      %v1951 = vrot.slane %v1947, %v1950
      %v1953 = vsel %vm1695, %v1951, 0
      %v1956 = vsel %vm1699, %v1687, 0
      %1958 = vmatprep.subr.bf16.mxu0 0
      %1959 = vmatpush1.bf16.msra.mxu0 %v1956
      %1960 = vmatprep.subr.bf16.mxu0 0
      %1961 = vmatpush1.bf16.msra.mxu0 0
      %1962 = vmatprep.subr.bf16.mxu0 0
      %1963 = vmatpush1.bf16.msra.mxu0 0
      %1964 = vmatprep.subr.bf16.mxu0 0
      %1965 = vmatpush1.bf16.msra.mxu0 0
      %1966 = vmatprep.subr.bf16.mxu0 0
      %1967 = vmatpush1.bf16.msra.mxu0 0
      %1968 = vmatprep.subr.bf16.mxu0 0
      %1969 = vmatpush1.bf16.msra.mxu0 0
      %1970 = vmatprep.subr.bf16.mxu0 0
      %1971 = vmatpush1.bf16.msra.mxu0 0
      %1972 = vmatprep.subr.bf16.mxu0 0
      %1973 = vmatpush1.bf16.msra.mxu0 0
      %1974 = vmatprep.subr.bf16.mxu0 0
      %1975 = vmatpush1.bf16.msra.mxu0 0
      %1976 = vmatprep.subr.bf16.mxu0 0
      %1977 = vmatpush1.bf16.msra.mxu0 0
      %1978 = vmatprep.subr.bf16.mxu0 0
      %1979 = vmatpush1.bf16.msra.mxu0 0
      %1980 = vmatprep.subr.bf16.mxu0 0
      %1981 = vmatpush1.bf16.msra.mxu0 0
      %1982 = vmatprep.subr.bf16.mxu0 0
      %1983 = vmatpush1.bf16.msra.mxu0 0
      %1984 = vmatprep.subr.bf16.mxu0 0
      %1985 = vmatpush1.bf16.msra.mxu0 0
      %1986 = vmatprep.subr.bf16.mxu0 0
      %1987 = vmatpush1.bf16.msra.mxu0 0
      %1988 = vmatprep.subr.bf16.mxu0 0
      %1989 = vmatpush1.bf16.msra.mxu0 0
      %1990 = vmatprep.mubr.bf16.mxu0 0
      %1991 = vmatmul.mubr.bf16.gmra.mrb[0].mxu0 %v1953
      %v1992 = vpop.f32.mrb[0].mxu0
      %v1993 = vadd.f32 0.0, %v1992
      %v1994 = vpop.f32.mrb[0].mxu0
      %v1995 = vpop.f32.mrb[0].mxu0
      %v1996 = vpop.f32.mrb[0].mxu0
      %1997 = vdwg.mxu0
      %v1998 = vpack.i.b16 %v1680, %v1680
      %v1999 = vlaneseq
      %v2000 = vshrl.u32 %v1999, 7
      %v2001 = vsub.s32 0, %v2000
      %v2002 = vrot.slane %v1998, %v2001
      %v2004 = vsel %vm1695, %v2002, 0
      %v2007 = vsel %vm1699, %v1688, 0
      %2009 = vmatprep.subr.bf16.mxu0 0
      %2010 = vmatpush1.bf16.msra.mxu0 %v2007
      %2011 = vmatprep.subr.bf16.mxu0 0
      %2012 = vmatpush1.bf16.msra.mxu0 0
      %2013 = vmatprep.subr.bf16.mxu0 0
      %2014 = vmatpush1.bf16.msra.mxu0 0
      %2015 = vmatprep.subr.bf16.mxu0 0
      %2016 = vmatpush1.bf16.msra.mxu0 0
      %2017 = vmatprep.subr.bf16.mxu0 0
      %2018 = vmatpush1.bf16.msra.mxu0 0
      %2019 = vmatprep.subr.bf16.mxu0 0
      %2020 = vmatpush1.bf16.msra.mxu0 0
      %2021 = vmatprep.subr.bf16.mxu0 0
      %2022 = vmatpush1.bf16.msra.mxu0 0
      %2023 = vmatprep.subr.bf16.mxu0 0
      %2024 = vmatpush1.bf16.msra.mxu0 0
      %2025 = vmatprep.subr.bf16.mxu0 0
      %2026 = vmatpush1.bf16.msra.mxu0 0
      %2027 = vmatprep.subr.bf16.mxu0 0
      %2028 = vmatpush1.bf16.msra.mxu0 0
      %2029 = vmatprep.subr.bf16.mxu0 0
      %2030 = vmatpush1.bf16.msra.mxu0 0
      %2031 = vmatprep.subr.bf16.mxu0 0
      %2032 = vmatpush1.bf16.msra.mxu0 0
      %2033 = vmatprep.subr.bf16.mxu0 0
      %2034 = vmatpush1.bf16.msra.mxu0 0
      %2035 = vmatprep.subr.bf16.mxu0 0
      %2036 = vmatpush1.bf16.msra.mxu0 0
      %2037 = vmatprep.subr.bf16.mxu0 0
      %2038 = vmatpush1.bf16.msra.mxu0 0
      %2039 = vmatprep.subr.bf16.mxu0 0
      %2040 = vmatpush1.bf16.msra.mxu0 0
      %2041 = vmatprep.mubr.bf16.mxu0 0
      %2042 = vmatmul.mubr.bf16.gmra.mrb[0].mxu0 %v2004
      %v2043 = vpop.f32.mrb[0].mxu0
      %v2044 = vadd.f32 0.0, %v2043
      %v2045 = vpop.f32.mrb[0].mxu0
      %v2046 = vpop.f32.mrb[0].mxu0
      %v2047 = vpop.f32.mrb[0].mxu0
      %2048 = vdwg.mxu0
      %v2049 = vpack.i.b16 %v1681, %v1681
      %v2050 = vlaneseq
      %v2051 = vshrl.u32 %v2050, 7
      %v2052 = vsub.s32 0, %v2051
      %v2053 = vrot.slane %v2049, %v2052
      %v2055 = vsel %vm1695, %v2053, 0
      %v2058 = vsel %vm1699, %v1689, 0
      %2060 = vmatprep.subr.bf16.mxu0 0
      %2061 = vmatpush1.bf16.msra.mxu0 %v2058
      %2062 = vmatprep.subr.bf16.mxu0 0
      %2063 = vmatpush1.bf16.msra.mxu0 0
      %2064 = vmatprep.subr.bf16.mxu0 0
      %2065 = vmatpush1.bf16.msra.mxu0 0
      %2066 = vmatprep.subr.bf16.mxu0 0
      %2067 = vmatpush1.bf16.msra.mxu0 0
      %2068 = vmatprep.subr.bf16.mxu0 0
      %2069 = vmatpush1.bf16.msra.mxu0 0
      %2070 = vmatprep.subr.bf16.mxu0 0
      %2071 = vmatpush1.bf16.msra.mxu0 0
      %2072 = vmatprep.subr.bf16.mxu0 0
      %2073 = vmatpush1.bf16.msra.mxu0 0
      %2074 = vmatprep.subr.bf16.mxu0 0
      %2075 = vmatpush1.bf16.msra.mxu0 0
      %2076 = vmatprep.subr.bf16.mxu0 0
      %2077 = vmatpush1.bf16.msra.mxu0 0
      %2078 = vmatprep.subr.bf16.mxu0 0
      %2079 = vmatpush1.bf16.msra.mxu0 0
      %2080 = vmatprep.subr.bf16.mxu0 0
      %2081 = vmatpush1.bf16.msra.mxu0 0
      %2082 = vmatprep.subr.bf16.mxu0 0
      %2083 = vmatpush1.bf16.msra.mxu0 0
      %2084 = vmatprep.subr.bf16.mxu0 0
      %2085 = vmatpush1.bf16.msra.mxu0 0
      %2086 = vmatprep.subr.bf16.mxu0 0
      %2087 = vmatpush1.bf16.msra.mxu0 0
      %2088 = vmatprep.subr.bf16.mxu0 0
      %2089 = vmatpush1.bf16.msra.mxu0 0
      %2090 = vmatprep.subr.bf16.mxu0 0
      %2091 = vmatpush1.bf16.msra.mxu0 0
      %2092 = vmatprep.mubr.bf16.mxu0 0
      %2093 = vmatmul.mubr.bf16.gmra.mrb[0].mxu0 %v2055
      %v2094 = vpop.f32.mrb[0].mxu0
      %v2095 = vadd.f32 0.0, %v2094
      %v2096 = vpop.f32.mrb[0].mxu0
      %v2097 = vpop.f32.mrb[0].mxu0
      %v2098 = vpop.f32.mrb[0].mxu0
      %2099 = vdwg.mxu0
      %v2100 = vsel %vm1695, %v466, 0.0
      %2101 = vadd.xlane.f32.xlu0 %v2100
      %v2102 = vpop.xlane.xlu0 %2101
      %v2103 = vmax.f32 %v2102, 1.0
      %v2104 = vrcp.pop %v2103
      %v2106 = vrot.slane %v2104, 1
      %v2107 = vrot.slane %v2104, 2
      %v2108 = vrot.slane %v2104, 3
      %v2109 = vrot.slane %v2104, 4
      %v2110 = vrot.slane %v2104, 5
      %v2111 = vrot.slane %v2104, 6
      %v2112 = vrot.slane %v2104, 7
      %v2121 = vmul.f32 %v1738, %v2104
      %v2122 = vmul.f32 %v1789, %v2106
      %v2123 = vmul.f32 %v1840, %v2107
      %v2124 = vmul.f32 %v1891, %v2108
      %v2125 = vmul.f32 %v1942, %v2109
      %v2126 = vmul.f32 %v1993, %v2110
      %v2127 = vmul.f32 %v2044, %v2111
      %v2128 = vmul.f32 %v2095, %v2112
      %v2129 = vld [vmem:[%s7] sm:$0xf]
      %v2130 = vld [vmem:[%s7 + $0x4] sm:$0xf]
      %v2131 = vld [vmem:[%s7 + $0x8] sm:$0xf]
      %v2132 = vld [vmem:[%s7 + $0xc] sm:$0xf]
      %v2133 = vld [vmem:[%s7 + $0x10] sm:$0xf]
      %v2134 = vld [vmem:[%s7 + $0x14] sm:$0xf]
      %v2135 = vld [vmem:[%s7 + $0x18] sm:$0xf]
      %v2136 = vld [vmem:[%s7 + $0x1c] sm:$0xf]
      %v2137 = vld [vmem:[%s7 + $0x20] sm:$0xf]
      %v2138 = vld [vmem:[%s7 + $0x24] sm:$0xf]
      %v2139 = vld [vmem:[%s7 + $0x28] sm:$0xf]
      %v2140 = vld [vmem:[%s7 + $0x2c] sm:$0xf]
      %v2141 = vld [vmem:[%s7 + $0x30] sm:$0xf]
      %v2142 = vld [vmem:[%s7 + $0x34] sm:$0xf]
      %v2143 = vld [vmem:[%s7 + $0x38] sm:$0xf]
      %v2144 = vld [vmem:[%s7 + $0x3c] sm:$0xf]
      %v2145 = vpack.c.bf16 %v1342, %v1342
      %v2146 = vpack.c.bf16 %v1385, %v1385
      %v2147 = vpack.c.bf16 %v1428, %v1428
      %v2148 = vpack.c.bf16 %v1471, %v1471
      %v2149 = vpack.c.bf16 %v1514, %v1514
      %v2150 = vpack.c.bf16 %v1557, %v1557
      %v2151 = vpack.c.bf16 %v1600, %v1600
      %v2152 = vpack.c.bf16 %v1643, %v1643
      %v2153 = vld [vmem:[%s8] sm:$0xf]
      %v2154 = vld [vmem:[%s8 + $0x4] sm:$0xf]
      %v2155 = vld [vmem:[%s8 + $0x8] sm:$0xf]
      %v2156 = vld [vmem:[%s8 + $0xc] sm:$0xf]
      %v2157 = vld [vmem:[%s8 + $0x10] sm:$0xf]
      %v2158 = vld [vmem:[%s8 + $0x14] sm:$0xf]
      %v2159 = vld [vmem:[%s8 + $0x18] sm:$0xf]
      %v2160 = vld [vmem:[%s8 + $0x1c] sm:$0xf]
      %v2161 = vld [vmem:[%s8 + $0x20] sm:$0xf]
      %v2162 = vld [vmem:[%s8 + $0x24] sm:$0xf]
      %v2163 = vld [vmem:[%s8 + $0x28] sm:$0xf]
      %v2164 = vld [vmem:[%s8 + $0x2c] sm:$0xf]
      %v2165 = vld [vmem:[%s8 + $0x30] sm:$0xf]
      %v2166 = vld [vmem:[%s8 + $0x34] sm:$0xf]
      %v2167 = vld [vmem:[%s8 + $0x38] sm:$0xf]
      %v2168 = vld [vmem:[%s8 + $0x3c] sm:$0xf]
      %v2177 = vunpack.c.l.b16 %v2145
      %v2178 = vunpack.c.l.b16 %v2146
      %v2179 = vunpack.c.l.b16 %v2147
      %v2180 = vunpack.c.l.b16 %v2148
      %v2181 = vunpack.c.l.b16 %v2149
      %v2182 = vunpack.c.l.b16 %v2150
      %v2183 = vunpack.c.l.b16 %v2151
      %v2184 = vunpack.c.l.b16 %v2152
      %v2185 = vrot.slane %v2178, 7
      %vm2186 = vcmask 1041409
      %v2187 = vsel %vm2186, %v2185, %v2177
      %v2188 = vrot.slane %v2179, 6
      %vm2189 = vcmask 1042434
      %v2190 = vsel %vm2189, %v2188, %v2187
      %v2191 = vrot.slane %v2180, 5
      %vm2192 = vcmask 1043459
      %v2193 = vsel %vm2192, %v2191, %v2190
      %v2194 = vrot.slane %v2181, 4
      %vm2195 = vcmask 1044484
      %v2196 = vsel %vm2195, %v2194, %v2193
      %v2197 = vrot.slane %v2182, 3
      %vm2198 = vcmask 1045509
      %v2199 = vsel %vm2198, %v2197, %v2196
      %v2200 = vrot.slane %v2183, 2
      %vm2201 = vcmask 1046534
      %v2202 = vsel %vm2201, %v2200, %v2199
      %v2203 = vrot.slane %v2184, 1
      %vm2204 = vcmask 1047559
      %v2205 = vsel %vm2204, %v2203, %v2202
      %v2206 = vpack.c.b16 %v2205, %v2205
      %v2224 = vunpack.c.l.b16 %v2153
      %v2225 = vunpack.c.l.b16 %v2154
      %v2226 = vunpack.c.l.b16 %v2155
      %v2227 = vunpack.c.l.b16 %v2156
      %v2228 = vunpack.c.l.b16 %v2157
      %v2229 = vunpack.c.l.b16 %v2158
      %v2230 = vunpack.c.l.b16 %v2159
      %v2231 = vunpack.c.l.b16 %v2160
      %v2232 = vunpack.c.l.b16 %v2161
      %v2233 = vunpack.c.l.b16 %v2162
      %v2234 = vunpack.c.l.b16 %v2163
      %v2235 = vunpack.c.l.b16 %v2164
      %v2236 = vunpack.c.l.b16 %v2165
      %v2237 = vunpack.c.l.b16 %v2166
      %v2238 = vunpack.c.l.b16 %v2167
      %v2239 = vunpack.c.l.b16 %v2168
      %v2240 = vpack.c.b16 %v2225, %v2224
      %v2241 = vpack.c.b16 %v2227, %v2226
      %v2242 = vpack.c.b16 %v2229, %v2228
      %v2243 = vpack.c.b16 %v2231, %v2230
      %v2244 = vpack.c.b16 %v2233, %v2232
      %v2245 = vpack.c.b16 %v2235, %v2234
      %v2246 = vpack.c.b16 %v2237, %v2236
      %v2247 = vpack.c.b16 %v2239, %v2238
      %2256 = vmatprep.subr.bf16.mxu0 0
      %2257 = vmatpush1.bf16.msra.mxu0 %v2240
      %2258 = vmatprep.subr.bf16.mxu0 0
      %2259 = vmatpush1.bf16.msra.mxu0 %v2241
      %2260 = vmatprep.subr.bf16.mxu0 0
      %2261 = vmatpush1.bf16.msra.mxu0 %v2242
      %2262 = vmatprep.subr.bf16.mxu0 0
      %2263 = vmatpush1.bf16.msra.mxu0 %v2243
      %2264 = vmatprep.subr.bf16.mxu0 0
      %2265 = vmatpush1.bf16.msra.mxu0 %v2244
      %2266 = vmatprep.subr.bf16.mxu0 0
      %2267 = vmatpush1.bf16.msra.mxu0 %v2245
      %2268 = vmatprep.subr.bf16.mxu0 0
      %2269 = vmatpush1.bf16.msra.mxu0 %v2246
      %2270 = vmatprep.subr.bf16.mxu0 0
      %2271 = vmatpush1.bf16.msra.mxu0 %v2247
      %2272 = vmatprep.subr.bf16.mxu0 0
      %2273 = vmatpush1.bf16.msra.mxu0 0
      %2274 = vmatprep.subr.bf16.mxu0 0
      %2275 = vmatpush1.bf16.msra.mxu0 0
      %2276 = vmatprep.subr.bf16.mxu0 0
      %2277 = vmatpush1.bf16.msra.mxu0 0
      %2278 = vmatprep.subr.bf16.mxu0 0
      %2279 = vmatpush1.bf16.msra.mxu0 0
      %2280 = vmatprep.subr.bf16.mxu0 0
      %2281 = vmatpush1.bf16.msra.mxu0 0
      %2282 = vmatprep.subr.bf16.mxu0 0
      %2283 = vmatpush1.bf16.msra.mxu0 0
      %2284 = vmatprep.subr.bf16.mxu0 0
      %2285 = vmatpush1.bf16.msra.mxu0 0
      %2286 = vmatprep.subr.bf16.mxu0 0
      %2287 = vmatpush1.bf16.msra.mxu0 0
      %2288 = vmatprep.mubr.bf16.mxu0 0
      %2289 = vmatmul.mubr.bf16.gmra.mrb[0].mxu0 %v2206
      %v2290 = vpop.f32.mrb[0].mxu0
      %v2291 = vadd.f32 0.0, %v2290
      %v2292 = vpop.f32.mrb[0].mxu0
      %v2293 = vpop.f32.mrb[0].mxu0
      %v2294 = vpop.f32.mrb[0].mxu0
      %2295 = vdwg.mxu0
      %v2312 = vunpack.c.l.b16 %v2129
      %v2313 = vunpack.c.l.b16 %v2130
      %v2314 = vunpack.c.l.b16 %v2131
      %v2315 = vunpack.c.l.b16 %v2132
      %v2316 = vunpack.c.l.b16 %v2133
      %v2317 = vunpack.c.l.b16 %v2134
      %v2318 = vunpack.c.l.b16 %v2135
      %v2319 = vunpack.c.l.b16 %v2136
      %v2320 = vunpack.c.l.b16 %v2137
      %v2321 = vunpack.c.l.b16 %v2138
      %v2322 = vunpack.c.l.b16 %v2139
      %v2323 = vunpack.c.l.b16 %v2140
      %v2324 = vunpack.c.l.b16 %v2141
      %v2325 = vunpack.c.l.b16 %v2142
      %v2326 = vunpack.c.l.b16 %v2143
      %v2327 = vunpack.c.l.b16 %v2144
      %v2328 = vpack.c.b16 %v2313, %v2312
      %v2329 = vpack.c.b16 %v2315, %v2314
      %v2330 = vpack.c.b16 %v2317, %v2316
      %v2331 = vpack.c.b16 %v2319, %v2318
      %v2332 = vpack.c.b16 %v2321, %v2320
      %v2333 = vpack.c.b16 %v2323, %v2322
      %v2334 = vpack.c.b16 %v2325, %v2324
      %v2335 = vpack.c.b16 %v2327, %v2326
      %2344 = vmatprep.subr.bf16.mxu0 0
      %2345 = vmatpush1.bf16.msra.mxu0 %v2328
      %2346 = vmatprep.subr.bf16.mxu0 0
      %2347 = vmatpush1.bf16.msra.mxu0 %v2329
      %2348 = vmatprep.subr.bf16.mxu0 0
      %2349 = vmatpush1.bf16.msra.mxu0 %v2330
      %2350 = vmatprep.subr.bf16.mxu0 0
      %2351 = vmatpush1.bf16.msra.mxu0 %v2331
      %2352 = vmatprep.subr.bf16.mxu0 0
      %2353 = vmatpush1.bf16.msra.mxu0 %v2332
      %2354 = vmatprep.subr.bf16.mxu0 0
      %2355 = vmatpush1.bf16.msra.mxu0 %v2333
      %2356 = vmatprep.subr.bf16.mxu0 0
      %2357 = vmatpush1.bf16.msra.mxu0 %v2334
      %2358 = vmatprep.subr.bf16.mxu0 0
      %2359 = vmatpush1.bf16.msra.mxu0 %v2335
      %2360 = vmatprep.subr.bf16.mxu0 0
      %2361 = vmatpush1.bf16.msra.mxu0 0
      %2362 = vmatprep.subr.bf16.mxu0 0
      %2363 = vmatpush1.bf16.msra.mxu0 0
      %2364 = vmatprep.subr.bf16.mxu0 0
      %2365 = vmatpush1.bf16.msra.mxu0 0
      %2366 = vmatprep.subr.bf16.mxu0 0
      %2367 = vmatpush1.bf16.msra.mxu0 0
      %2368 = vmatprep.subr.bf16.mxu0 0
      %2369 = vmatpush1.bf16.msra.mxu0 0
      %2370 = vmatprep.subr.bf16.mxu0 0
      %2371 = vmatpush1.bf16.msra.mxu0 0
      %2372 = vmatprep.subr.bf16.mxu0 0
      %2373 = vmatpush1.bf16.msra.mxu0 0
      %2374 = vmatprep.subr.bf16.mxu0 0
      %2375 = vmatpush1.bf16.msra.mxu0 0
      %2376 = vmatprep.mubr.bf16.mxu0 0
      %2377 = vmatmul.mubr.bf16.gmra.mrb[0].mxu0 %v464
      %v2378 = vpop.f32.mrb[0].mxu0
      %v2379 = vadd.f32 %v2291, %v2378
      %v2380 = vpop.f32.mrb[0].mxu0
      %v2381 = vpop.f32.mrb[0].mxu0
      %v2382 = vpop.f32.mrb[0].mxu0
      %2383 = vdwg.mxu0
      %v2384 = vpack.c.bf16 %v2121, %v2121
      %v2385 = vpack.c.bf16 %v2122, %v2122
      %v2386 = vpack.c.bf16 %v2123, %v2123
      %v2387 = vpack.c.bf16 %v2124, %v2124
      %v2388 = vpack.c.bf16 %v2125, %v2125
      %v2389 = vpack.c.bf16 %v2126, %v2126
      %v2390 = vpack.c.bf16 %v2127, %v2127
      %v2391 = vpack.c.bf16 %v2128, %v2128
      %v2392 = vld [vmem:[%s9] sm:$0xf]
      %v2393 = vld [vmem:[%s9 + $0x4] sm:$0xf]
      %v2394 = vld [vmem:[%s9 + $0x8] sm:$0xf]
      %v2395 = vld [vmem:[%s9 + $0xc] sm:$0xf]
      %v2396 = vld [vmem:[%s9 + $0x10] sm:$0xf]
      %v2397 = vld [vmem:[%s9 + $0x14] sm:$0xf]
      %v2398 = vld [vmem:[%s9 + $0x18] sm:$0xf]
      %v2399 = vld [vmem:[%s9 + $0x1c] sm:$0xf]
      %v2400 = vld [vmem:[%s9 + $0x20] sm:$0xf]
      %v2401 = vld [vmem:[%s9 + $0x24] sm:$0xf]
      %v2402 = vld [vmem:[%s9 + $0x28] sm:$0xf]
      %v2403 = vld [vmem:[%s9 + $0x2c] sm:$0xf]
      %v2404 = vld [vmem:[%s9 + $0x30] sm:$0xf]
      %v2405 = vld [vmem:[%s9 + $0x34] sm:$0xf]
      %v2406 = vld [vmem:[%s9 + $0x38] sm:$0xf]
      %v2407 = vld [vmem:[%s9 + $0x3c] sm:$0xf]
      %v2416 = vunpack.c.l.b16 %v2384
      %v2417 = vunpack.c.l.b16 %v2385
      %v2418 = vunpack.c.l.b16 %v2386
      %v2419 = vunpack.c.l.b16 %v2387
      %v2420 = vunpack.c.l.b16 %v2388
      %v2421 = vunpack.c.l.b16 %v2389
      %v2422 = vunpack.c.l.b16 %v2390
      %v2423 = vunpack.c.l.b16 %v2391
      %v2424 = vrot.slane %v2417, 7
      %v2425 = vsel %vm2186, %v2424, %v2416
      %v2426 = vrot.slane %v2418, 6
      %v2427 = vsel %vm2189, %v2426, %v2425
      %v2428 = vrot.slane %v2419, 5
      %v2429 = vsel %vm2192, %v2428, %v2427
      %v2430 = vrot.slane %v2420, 4
      %v2431 = vsel %vm2195, %v2430, %v2429
      %v2432 = vrot.slane %v2421, 3
      %v2433 = vsel %vm2198, %v2432, %v2431
      %v2434 = vrot.slane %v2422, 2
      %v2435 = vsel %vm2201, %v2434, %v2433
      %v2436 = vrot.slane %v2423, 1
      %v2437 = vsel %vm2204, %v2436, %v2435
      %v2438 = vpack.c.b16 %v2437, %v2437
      %v2456 = vunpack.c.l.b16 %v2392
      %v2457 = vunpack.c.l.b16 %v2393
      %v2458 = vunpack.c.l.b16 %v2394
      %v2459 = vunpack.c.l.b16 %v2395
      %v2460 = vunpack.c.l.b16 %v2396
      %v2461 = vunpack.c.l.b16 %v2397
      %v2462 = vunpack.c.l.b16 %v2398
      %v2463 = vunpack.c.l.b16 %v2399
      %v2464 = vunpack.c.l.b16 %v2400
      %v2465 = vunpack.c.l.b16 %v2401
      %v2466 = vunpack.c.l.b16 %v2402
      %v2467 = vunpack.c.l.b16 %v2403
      %v2468 = vunpack.c.l.b16 %v2404
      %v2469 = vunpack.c.l.b16 %v2405
      %v2470 = vunpack.c.l.b16 %v2406
      %v2471 = vunpack.c.l.b16 %v2407
      %v2472 = vpack.c.b16 %v2457, %v2456
      %v2473 = vpack.c.b16 %v2459, %v2458
      %v2474 = vpack.c.b16 %v2461, %v2460
      %v2475 = vpack.c.b16 %v2463, %v2462
      %v2476 = vpack.c.b16 %v2465, %v2464
      %v2477 = vpack.c.b16 %v2467, %v2466
      %v2478 = vpack.c.b16 %v2469, %v2468
      %v2479 = vpack.c.b16 %v2471, %v2470
      %2488 = vmatprep.subr.bf16.mxu0 0
      %2489 = vmatpush1.bf16.msra.mxu0 %v2472
      %2490 = vmatprep.subr.bf16.mxu0 0
      %2491 = vmatpush1.bf16.msra.mxu0 %v2473
      %2492 = vmatprep.subr.bf16.mxu0 0
      %2493 = vmatpush1.bf16.msra.mxu0 %v2474
      %2494 = vmatprep.subr.bf16.mxu0 0
      %2495 = vmatpush1.bf16.msra.mxu0 %v2475
      %2496 = vmatprep.subr.bf16.mxu0 0
      %2497 = vmatpush1.bf16.msra.mxu0 %v2476
      %2498 = vmatprep.subr.bf16.mxu0 0
      %2499 = vmatpush1.bf16.msra.mxu0 %v2477
      %2500 = vmatprep.subr.bf16.mxu0 0
      %2501 = vmatpush1.bf16.msra.mxu0 %v2478
      %2502 = vmatprep.subr.bf16.mxu0 0
      %2503 = vmatpush1.bf16.msra.mxu0 %v2479
      %2504 = vmatprep.subr.bf16.mxu0 0
      %2505 = vmatpush1.bf16.msra.mxu0 0
      %2506 = vmatprep.subr.bf16.mxu0 0
      %2507 = vmatpush1.bf16.msra.mxu0 0
      %2508 = vmatprep.subr.bf16.mxu0 0
      %2509 = vmatpush1.bf16.msra.mxu0 0
      %2510 = vmatprep.subr.bf16.mxu0 0
      %2511 = vmatpush1.bf16.msra.mxu0 0
      %2512 = vmatprep.subr.bf16.mxu0 0
      %2513 = vmatpush1.bf16.msra.mxu0 0
      %2514 = vmatprep.subr.bf16.mxu0 0
      %2515 = vmatpush1.bf16.msra.mxu0 0
      %2516 = vmatprep.subr.bf16.mxu0 0
      %2517 = vmatpush1.bf16.msra.mxu0 0
      %2518 = vmatprep.subr.bf16.mxu0 0
      %2519 = vmatpush1.bf16.msra.mxu0 0
      %2520 = vmatprep.mubr.bf16.mxu0 0
      %2521 = vmatmul.mubr.bf16.gmra.mrb[0].mxu0 %v2438
      %v2522 = vpop.f32.mrb[0].mxu0
      %v2523 = vadd.f32 0.0, %v2522
      %v2524 = vpop.f32.mrb[0].mxu0
      %v2525 = vpop.f32.mrb[0].mxu0
      %v2526 = vpop.f32.mrb[0].mxu0
      %2527 = vdwg.mxu0
      %v2528 = vadd.f32 %v2379, %v2523
      %v2529 = vld [vmem:[%s10] sm:$0x1]
      %v2531 = vlaneseq
      %v2532 = vshrl.u32 %v2531, 7
      %v2533 = vsub.s32 0, %v2532
      %v2534 = vrot.slane %v2529, %v2533
      %v2536 = vadd.f32 %v2528, %v2534
      %v2537 = vtanh.pop %v2536
      %v2538 = vpack.c.bf16 %v2537, %v2537
      %2539 = vst [vmem:[%s462] sm:$0xf] %v2538
      %p2540 = scmp.lt.s32.totalorder %s22, 1
      %s2541 = scalar_select %p2540, %s22, 1
      %s2542 = smul.addr %s2541, 4
      %s2543 = scalar_lea.vmem %s11, %s2542
      // Predicated region
      $region65: #{sketchy_decoder_train.2} parent=63 // pred_check
        %p2544 = pneg %p296
      $region66: #{sketchy_decoder_train.2} parent=63 // pred_check_branch
        %2546 = sbr.rel (%p2544) target = $region68
      $region67: #{sketchy_decoder_train.2} parent=63 // pred_region
        _
      $region68: #{sketchy_decoder_train.2} parent=63 // pred_fallthru
        _
    $region64: #{sketchy_decoder_train.2} parent=5 // pred_fallthru
      _
    %p2547 = scmp.le.s32.totalorder 2, %s17
    // Predicated region
    $region69: #{sketchy_decoder_train.2} parent=5 // pred_check
      %p2548 = pneg %p2547
    $region70: #{sketchy_decoder_train.2} parent=5 // pred_check_branch
      %2550 = sbr.rel (%p2548) target = $region72
    $region71: #{sketchy_decoder_train.2} parent=5 // pred_region
      %s2551 = ssub.s32 %s17, 2
      // Predicated region
      $region73: #{sketchy_decoder_train.2} parent=71 // pred_check
        %p2552 = pneg %p302
      $region74: #{sketchy_decoder_train.2} parent=71 // pred_check_branch
        %2554 = sbr.rel (%p2552) target = $region76
      $region75: #{sketchy_decoder_train.2} parent=71 // pred_region
        %p2555 = scmp.lt.s32.totalorder %s23, 1
        %s2556 = scalar_select %p2555, %s23, 1
        %s2557 = smul.addr %s2556, 4
        %s2558 = scalar_lea.vmem %s11, %s2557
      $region76: #{sketchy_decoder_train.2} parent=71 // pred_fallthru
        _
    $region72: #{sketchy_decoder_train.2} parent=5 // pred_fallthru
      _
  $region6: #{sketchy_decoder_train.2} parent=0 // loop_footer
    %s21 = sadd.s32 1, %s17
  $region7: #{sketchy_decoder_train.2} parent=0 // loop_footer_branch
    %16 = sbr.rel target = $region3
  $region8: #{sketchy_decoder_train.2} parent=0 // loop_exit
    _

</llo_original>
